<compile_context>
chip_gen: v5e
topology: v5e:2x2
jax: 0.10.0
libtpu: 0.0.40
codegen_flags: <defaults>
</compile_context>

<pallas_src>
import functools
import math

import numpy as np
import jax
import jax.numpy as jnp
from jax import lax
from jax.experimental import pallas as pl
from jax.experimental.pallas import tpu as pltpu


# ----------------------------------------------------------------------------
# Pallas kernel (feature-major layout: points on lanes)
# ----------------------------------------------------------------------------
def _deq_inr_kernel(x_ref, wf_ref, bf_ref, w_ref, b_ref, wo_ref, bo_ref,
                    out_ref, *opt_z_ref, n_layers, n_iter, interm_channels,
                    n_streams, ew_dtype, mxu_dtype):
    z_ref = opt_z_ref[0] if opt_z_ref else None
    D = interm_channels
    nf = n_layers + 1

    xt = x_ref[...]                                   # (cin, TM) f32
    tm = xt.shape[1]
    cs = tm // n_streams                              # lanes per interleaved stream

    # --- Fourier injection, fused: one (nf*D, cin) @ (cin, TM) matmul, one sin.
    # Arguments of sin are O(input_scale) so this path MUST stay f32.
    pre = jnp.dot(wf_ref[...], xt, preferred_element_type=jnp.float32) + bf_ref[...]
    u_all = jnp.sin(pre).astype(ew_dtype)             # (nf*D, TM)

    # --- loop-invariant hoists --------------------------------------------
    # layer 0 sees z + u0; fold u0 through W0 once: W0 @ (z + u0) + b0 = W0 @ z + c0
    c0_full = (jnp.dot(w_ref[0], u_all[:D, :].astype(mxu_dtype),
                       preferred_element_type=jnp.float32)
               + b_ref[0])                            # (D, TM) f32

    # per-stream slices (lane-tile aligned: cs is a multiple of 128)
    # u[s][i] holds u_{i+1} for stream s (u_0 is already folded into c0)
    u = [[u_all[k * D:(k + 1) * D, s * cs:(s + 1) * cs] for k in range(1, nf)]
         for s in range(n_streams)]
    c0 = [c0_full[:, s * cs:(s + 1) * cs] for s in range(n_streams)]
    # broadcast remaining biases once (JAX does not CSE broadcast_in_dim in loops)
    b_bc = [pl.broadcast_to(b_ref[i], (D, cs)) for i in range(1, n_layers)]

    def tail_layers(h, s):
        # h: (D, cs) in ew_dtype
        for i in range(1, n_layers):
            acc = jnp.dot(w_ref[i], h.astype(mxu_dtype),
                          preferred_element_type=jnp.float32)
            h = (acc + b_bc[i - 1]).astype(ew_dtype) * u[s][i]
        return h

    def deq_step(_, zs):
        # Both streams' iteration bodies sit in one basic block so the LLO
        # scheduler can overlap stream-A MXU pushes with stream-B VPU work.
        new = []
        for s in range(n_streams):
            acc = jnp.dot(w_ref[0], zs[s].astype(mxu_dtype),
                          preferred_element_type=jnp.float32)
            h = (acc + c0[s]).astype(ew_dtype) * u[s][0]
            new.append(tail_layers(h, s))
        return tuple(new)

    if n_iter >= 1:
        # peel iteration 0: z0 = 0  =>  layer-0 output is c0 * u1 (no matmul on z)
        z1 = tuple(tail_layers(c0[s].astype(ew_dtype) * u[s][0], s)
                   for s in range(n_streams))
        # full unroll for the default depth; cap unroll if the chain gets long
        total_stages = max(1, (n_iter - 1)) * max(1, n_layers) * n_streams
        unroll = True if total_stages <= 48 else 4
        z_star = lax.fori_loop(0, n_iter - 1, deq_step, z1, unroll=unroll)
    else:
        z_star = tuple(jnp.zeros((D, cs), ew_dtype) for _ in range(n_streams))

    # --- output_map: Linear(interm_channels -> output_channels), kept f32 ---
    wo = wo_ref[...]
    bo = bo_ref[...]
    for s in range(n_streams):
        zf = z_star[s].astype(jnp.float32)
        if z_ref is not None:
            z_ref[:, s * cs:(s + 1) * cs] = zf
        out_ref[:, s * cs:(s + 1) * cs] = (
            jnp.dot(wo, zf, preferred_element_type=jnp.float32) + bo)


# ----------------------------------------------------------------------------
# Wrapper
# ----------------------------------------------------------------------------
def deq_inr_forward(x, params, *, interm_channels, output_channels,
                    n_layers=1, n_iter=12, tile_m=2048, n_streams=2,
                    return_imp_layer_output=True,
                    mxu_dtype=jnp.bfloat16, ew_dtype=None):
    wf, bf, w, b, wo, bo = params
    B, N, cin = x.shape
    M = B * N
    nf = n_layers + 1
    D = interm_channels
    Co = output_channels

    if ew_dtype is None:
        # bf16 element-wise math only where the VPU/EUP are bf16-capable
        # (v6e / v7x); v5e and older keep f32 (converts without packing gain).
        try:
            kind = jax.devices()[0].device_kind.lower()
        except Exception:
            kind = ""
        ew_dtype = jnp.bfloat16 if ("v6" in kind or "v7" in kind) else jnp.float32

    # Point tile: big for roofline (amortizes ~0.35us/step grid overhead),
    # multiple of 128*n_streams so every interleaved stream is >=128 lanes,
    # and shrunk so the grid keeps >=4 steps (>=2 for small M) so both
    # TensorCores get balanced, pipelined work.
    lane_q = 128 * n_streams
    tm = max(lane_q, (tile_m // lane_q) * lane_q)
    for min_steps in (4, 2):
        if M >= min_steps * lane_q:
            while tm > lane_q and pl.cdiv(M, tm) < min_steps:
                tm = max(lane_q, ((tm // 2) // lane_q) * lane_q)
            break
    Mp = pl.cdiv(M, tm) * tm

    # ---- lane-dense (feature-major) layout plumbing -------------------------
    x_flat = x.reshape(M, cin).astype(jnp.float32)
    if Mp != M:
        x_flat = jnp.pad(x_flat, ((0, Mp - M), (0, 0)))
    x_t = x_flat.T                                                   # (cin, Mp)

    wf_t = jnp.transpose(wf, (0, 2, 1)).reshape(nf * D, cin).astype(jnp.float32)
    bf_t = jnp.transpose(bf, (0, 2, 1)).reshape(nf * D, 1).astype(jnp.float32)
    w_t = jnp.transpose(w, (0, 2, 1)).astype(mxu_dtype)              # (n_layers, D, D)
    b_t = jnp.transpose(b, (0, 2, 1)).astype(jnp.float32)            # (n_layers, D, 1)
    wo_t = wo.T.astype(jnp.float32)                                  # (Co, D)
    bo_t = bo.T.astype(jnp.float32)                                  # (Co, 1)

    kernel = functools.partial(
        _deq_inr_kernel, n_layers=n_layers, n_iter=n_iter,
        interm_channels=D, n_streams=n_streams,
        ew_dtype=ew_dtype, mxu_dtype=mxu_dtype)

    out_shapes = [jax.ShapeDtypeStruct((Co, Mp), jnp.float32)]
    out_specs = [pl.BlockSpec((Co, tm), lambda i: (0, i))]
    if return_imp_layer_output:
        out_shapes.append(jax.ShapeDtypeStruct((D, Mp), jnp.float32))
        out_specs.append(pl.BlockSpec((D, tm), lambda i: (0, i)))

    outs = pl.pallas_call(
        kernel,
        out_shape=tuple(out_shapes),
        grid_spec=pltpu.PrefetchScalarGridSpec(
            num_scalar_prefetch=0,
            grid=(Mp // tm,),
            in_specs=[
                pl.BlockSpec((cin, tm), lambda i: (0, i)),            # x^T tile
                pl.BlockSpec((nf * D, cin), lambda i: (0, 0)),        # fused Fourier W^T
                pl.BlockSpec((nf * D, 1), lambda i: (0, 0)),          # fused Fourier b
                pl.BlockSpec((n_layers, D, D), lambda i: (0, 0, 0)),  # MFN W^T (mxu dtype)
                pl.BlockSpec((n_layers, D, 1), lambda i: (0, 0, 0)),  # MFN b (f32)
                pl.BlockSpec((Co, D), lambda i: (0, 0)),              # output W^T (f32)
                pl.BlockSpec((Co, 1), lambda i: (0, 0)),              # output b (f32)
            ],
            out_specs=tuple(out_specs),
        ),
        compiler_params=pltpu.CompilerParams(
            dimension_semantics=("parallel",)),
    )(x_t, wf_t, bf_t, w_t, b_t, wo_t, bo_t)

    out = outs[0][:, :M].T.reshape(B, N, Co)
    ret = {"output": out, "forward_steps": n_iter}
    if return_imp_layer_output:
        # TODO(synk): this (D, M) -> (M, D) transpose is an extra HBM pass; keep
        #   feature-major or set return_imp_layer_output=False if not needed.
        ret["imp_layer_output"] = outs[1][:, :M].T.reshape(B, N, D)
    else:
        ret["imp_layer_output"] = None
    return ret


# ----------------------------------------------------------------------------
# Deterministic parameter init (mirrors the PyTorch __init__ shapes / inits)
# ----------------------------------------------------------------------------
def init_params(key, in_channels, interm_channels, output_channels,
                n_layers=1, input_scale=256.0):
    nf = n_layers + 1
    D = interm_channels
    ks = jax.random.split(key, 6)
    # Fourier filter layers: nn.Linear(in, D) with weight * (input_scale/sqrt(nf)),
    # bias ~ U(-pi, pi)
    lim_in = 1.0 / math.sqrt(in_channels)
    wscale = input_scale / math.sqrt(nf)
    wf = jax.random.uniform(ks[0], (nf, in_channels, D), jnp.float32,
                            -lim_in, lim_in) * wscale
    bf = jax.random.uniform(ks[1], (nf, 1, D), jnp.float32, -math.pi, math.pi)
    # MFN hidden linears: nn.Linear(D, D) default init (stored already transposed)
    lim_h = 1.0 / math.sqrt(D)
    w = jax.random.uniform(ks[2], (n_layers, D, D), jnp.float32, -lim_h, lim_h)
    b = jax.random.uniform(ks[3], (n_layers, 1, D), jnp.float32, -lim_h, lim_h)
    # output_map: nn.Linear(D, Co) default init (stored already transposed)
    wo = jax.random.uniform(ks[4], (D, output_channels), jnp.float32, -lim_h, lim_h)
    bo = jax.random.uniform(ks[5], (1, output_channels), jnp.float32, -lim_h, lim_h)
    return wf, bf, w, b, wo, bo


# ----------------------------------------------------------------------------
# Pure-JAX reference (same math, f32, no Pallas) for a sanity check
# ----------------------------------------------------------------------------
def deq_inr_reference(x, params, *, n_layers=1, n_iter=12):
    wf, bf, w, b, wo, bo = params
    hp = lax.Precision.HIGHEST
    u = [jnp.sin(jnp.dot(x, wf[k], precision=hp) + bf[k]) for k in range(n_layers + 1)]
    z = jnp.zeros(x.shape[:-1] + (w.shape[-1],), jnp.float32)
    for _ in range(n_iter):
        h = z + u[0]
        for i in range(n_layers):
            h = (jnp.dot(h, w[i], precision=hp) + b[i]) * u[i + 1]
        z = h
    return jnp.dot(z, wo, precision=hp) + bo


if __name__ == "__main__":
    key = jax.random.PRNGKey(0)

    # Small INR problem: B=2 "images", 16x16 coordinate grid, 2-D coords,
    # interm_channels=32, output_channels=3, n_layers=1.
    B, H, W = 2, 16, 16
    in_channels, interm_channels, output_channels = 2, 32, 3
    n_layers, n_iter = 1, 12

    ys = jnp.linspace(-1.0, 1.0, H)
    xs = jnp.linspace(-1.0, 1.0, W)
    gy, gx = jnp.meshgrid(ys, xs, indexing="ij")
    coords = jnp.stack([gy, gx], axis=-1).reshape(1, H * W, in_channels)
    x = jnp.tile(coords, (B, 1, 1)).astype(jnp.float32)        # (2, 256, 2)

    params = init_params(key, in_channels, interm_channels, output_channels,
                         n_layers=n_layers, input_scale=256.0)

    ret = deq_inr_forward(x, params,
                          interm_channels=interm_channels,
                          output_channels=output_channels,
                          n_layers=n_layers, n_iter=n_iter, tile_m=2048)
    jax.block_until_ready(ret["output"])

    # sanity check against pure-JAX f32 reference (kernel uses bf16 MXU inputs)
    ref = deq_inr_reference(x.reshape(B * H * W, in_channels), params,
                            n_layers=n_layers, n_iter=n_iter)
    np.testing.assert_allclose(
        np.asarray(ret["output"]).reshape(B * H * W, output_channels),
        np.asarray(ref), rtol=5e-2, atol=5e-2)

    print("KERNEL_OK")
</pallas_src>

<mosaic_0001>
module attributes {stable_mosaic.version = 11 : i64} {
  func.func @_deq_inr_kernel(%arg0: i32, %arg1: memref<2x256xf32, #tpu.memory_space<vmem>>, %arg2: memref<64x2xf32, #tpu.memory_space<vmem>>, %arg3: memref<64x1xf32, #tpu.memory_space<vmem>>, %arg4: memref<1x32x32xbf16, #tpu.memory_space<vmem>>, %arg5: memref<1x32x1xf32, #tpu.memory_space<vmem>>, %arg6: memref<3x32xf32, #tpu.memory_space<vmem>>, %arg7: memref<3x1xf32, #tpu.memory_space<vmem>>, %arg8: memref<3x256xf32, #tpu.memory_space<vmem>>, %arg9: memref<32x256xf32, #tpu.memory_space<vmem>>) attributes {dimension_semantics = [#tpu.dimension_semantics<parallel>], iteration_bounds = array<i64: 2>, scalar_prefetch = 0 : i64, scratch_operands = 0 : i64, tpu.core_type = #tpu.core_type<tc>, window_params = [{transform_indices = @transform_0, window_bounds = array<i64: 2, 256>}, {pipeline_mode = #tpu.pipeline_mode<synchronous>, transform_indices = @transform_1, window_bounds = array<i64: 64, 2>}, {pipeline_mode = #tpu.pipeline_mode<synchronous>, transform_indices = @transform_2, window_bounds = array<i64: 64, 1>}, {pipeline_mode = #tpu.pipeline_mode<synchronous>, transform_indices = @transform_3, window_bounds = array<i64: 1, 32, 32>}, {pipeline_mode = #tpu.pipeline_mode<synchronous>, transform_indices = @transform_4, window_bounds = array<i64: 1, 32, 1>}, {pipeline_mode = #tpu.pipeline_mode<synchronous>, transform_indices = @transform_5, window_bounds = array<i64: 3, 32>}, {pipeline_mode = #tpu.pipeline_mode<synchronous>, transform_indices = @transform_6, window_bounds = array<i64: 3, 1>}, {transform_indices = @transform_7, window_bounds = array<i64: 3, 256>}, {transform_indices = @transform_8, window_bounds = array<i64: 32, 256>}]} {
    %c0 = arith.constant 0 : index
    %c0_0 = arith.constant 0 : index
    %0 = vector.load %arg1[%c0, %c0_0] : memref<2x256xf32, #tpu.memory_space<vmem>>, vector<2x256xf32>
    %c0_1 = arith.constant 0 : index
    %c0_2 = arith.constant 0 : index
    %1 = vector.load %arg2[%c0_1, %c0_2] : memref<64x2xf32, #tpu.memory_space<vmem>>, vector<64x2xf32>
    %cst = arith.constant dense<0.000000e+00> : vector<64x256xf32>
    %2 = tpu.matmul %1, %0, %cst {dimension_numbers = #tpu.dot_dimension_numbers<[1], [0], [0], [1], [0, 0, 1, 1], [], []>} : vector<64x2xf32>, vector<2x256xf32>, vector<64x256xf32> -> vector<64x256xf32>
    %c0_3 = arith.constant 0 : index
    %c0_4 = arith.constant 0 : index
    %3 = vector.load %arg3[%c0_3, %c0_4] : memref<64x1xf32, #tpu.memory_space<vmem>>, vector<64x1xf32>
    %4 = vector.broadcast %3 : vector<64x1xf32> to vector<64x256xf32>
    %5 = arith.addf %2, %4 : vector<64x256xf32>
    %6 = math.sin %5 : vector<64x256xf32>
    %c0_5 = arith.constant 0 : index
    %c0_6 = arith.constant 0 : index
    %c0_7 = arith.constant 0 : index
    %7 = vector.load %arg4[%c0_5, %c0_6, %c0_7] : memref<1x32x32xbf16, #tpu.memory_space<vmem>>, vector<1x32x32xbf16>
    %8 = vector.shape_cast %7 : vector<1x32x32xbf16> to vector<32x32xbf16>
    %9 = vector.extract_strided_slice %6 {offsets = [0, 0], sizes = [32, 256], strides = [1, 1]} : vector<64x256xf32> to vector<32x256xf32>
    %10 = arith.truncf %9 : vector<32x256xf32> to vector<32x256xbf16>
    %cst_8 = arith.constant dense<0.000000e+00> : vector<32x256xf32>
    %11 = tpu.matmul %8, %10, %cst_8 {dimension_numbers = #tpu.dot_dimension_numbers<[1], [0], [0], [1], [0, 0, 1, 1], [], []>} : vector<32x32xbf16>, vector<32x256xbf16>, vector<32x256xf32> -> vector<32x256xf32>
    %c0_9 = arith.constant 0 : index
    %c0_10 = arith.constant 0 : index
    %c0_11 = arith.constant 0 : index
    %12 = vector.load %arg5[%c0_9, %c0_10, %c0_11] : memref<1x32x1xf32, #tpu.memory_space<vmem>>, vector<1x32x1xf32>
    %13 = vector.shape_cast %12 : vector<1x32x1xf32> to vector<32x1xf32>
    %14 = vector.broadcast %13 : vector<32x1xf32> to vector<32x256xf32>
    %15 = arith.addf %11, %14 : vector<32x256xf32>
    %16 = vector.extract_strided_slice %6 {offsets = [32, 0], sizes = [32, 128], strides = [1, 1]} : vector<64x256xf32> to vector<32x128xf32>
    %17 = vector.extract_strided_slice %6 {offsets = [32, 128], sizes = [32, 128], strides = [1, 1]} : vector<64x256xf32> to vector<32x128xf32>
    %18 = vector.extract_strided_slice %15 {offsets = [0, 0], sizes = [32, 128], strides = [1, 1]} : vector<32x256xf32> to vector<32x128xf32>
    %19 = vector.extract_strided_slice %15 {offsets = [0, 128], sizes = [32, 128], strides = [1, 1]} : vector<32x256xf32> to vector<32x128xf32>
    %20 = arith.mulf %18, %16 : vector<32x128xf32>
    %21 = arith.mulf %19, %17 : vector<32x128xf32>
    %c0_i32 = arith.constant 0 : i32
    %c0_12 = arith.constant 0 : index
    %c0_13 = arith.constant 0 : index
    %c0_14 = arith.constant 0 : index
    %22 = vector.load %arg4[%c0_12, %c0_13, %c0_14] : memref<1x32x32xbf16, #tpu.memory_space<vmem>>, vector<1x32x32xbf16>
    %23 = vector.shape_cast %22 : vector<1x32x32xbf16> to vector<32x32xbf16>
    %24 = arith.truncf %20 : vector<32x128xf32> to vector<32x128xbf16>
    %cst_15 = arith.constant dense<0.000000e+00> : vector<32x128xf32>
    %25 = tpu.matmul %23, %24, %cst_15 {dimension_numbers = #tpu.dot_dimension_numbers<[1], [0], [0], [1], [0, 0, 1, 1], [], []>} : vector<32x32xbf16>, vector<32x128xbf16>, vector<32x128xf32> -> vector<32x128xf32>
    %26 = arith.addf %25, %18 : vector<32x128xf32>
    %27 = arith.mulf %26, %16 : vector<32x128xf32>
    %c0_16 = arith.constant 0 : index
    %c0_17 = arith.constant 0 : index
    %c0_18 = arith.constant 0 : index
    %28 = vector.load %arg4[%c0_16, %c0_17, %c0_18] : memref<1x32x32xbf16, #tpu.memory_space<vmem>>, vector<1x32x32xbf16>
    %29 = vector.shape_cast %28 : vector<1x32x32xbf16> to vector<32x32xbf16>
    %30 = arith.truncf %21 : vector<32x128xf32> to vector<32x128xbf16>
    %cst_19 = arith.constant dense<0.000000e+00> : vector<32x128xf32>
    %31 = tpu.matmul %29, %30, %cst_19 {dimension_numbers = #tpu.dot_dimension_numbers<[1], [0], [0], [1], [0, 0, 1, 1], [], []>} : vector<32x32xbf16>, vector<32x128xbf16>, vector<32x128xf32> -> vector<32x128xf32>
    %32 = arith.addf %31, %19 : vector<32x128xf32>
    %33 = arith.mulf %32, %17 : vector<32x128xf32>
    %c1_i32 = arith.constant 1 : i32
    %c0_20 = arith.constant 0 : index
    %c0_21 = arith.constant 0 : index
    %c0_22 = arith.constant 0 : index
    %34 = vector.load %arg4[%c0_20, %c0_21, %c0_22] : memref<1x32x32xbf16, #tpu.memory_space<vmem>>, vector<1x32x32xbf16>
    %35 = vector.shape_cast %34 : vector<1x32x32xbf16> to vector<32x32xbf16>
    %36 = arith.truncf %27 : vector<32x128xf32> to vector<32x128xbf16>
    %cst_23 = arith.constant dense<0.000000e+00> : vector<32x128xf32>
    %37 = tpu.matmul %35, %36, %cst_23 {dimension_numbers = #tpu.dot_dimension_numbers<[1], [0], [0], [1], [0, 0, 1, 1], [], []>} : vector<32x32xbf16>, vector<32x128xbf16>, vector<32x128xf32> -> vector<32x128xf32>
    %38 = arith.addf %37, %18 : vector<32x128xf32>
    %39 = arith.mulf %38, %16 : vector<32x128xf32>
    %c0_24 = arith.constant 0 : index
    %c0_25 = arith.constant 0 : index
    %c0_26 = arith.constant 0 : index
    %40 = vector.load %arg4[%c0_24, %c0_25, %c0_26] : memref<1x32x32xbf16, #tpu.memory_space<vmem>>, vector<1x32x32xbf16>
    %41 = vector.shape_cast %40 : vector<1x32x32xbf16> to vector<32x32xbf16>
    %42 = arith.truncf %33 : vector<32x128xf32> to vector<32x128xbf16>
    %cst_27 = arith.constant dense<0.000000e+00> : vector<32x128xf32>
    %43 = tpu.matmul %41, %42, %cst_27 {dimension_numbers = #tpu.dot_dimension_numbers<[1], [0], [0], [1], [0, 0, 1, 1], [], []>} : vector<32x32xbf16>, vector<32x128xbf16>, vector<32x128xf32> -> vector<32x128xf32>
    %44 = arith.addf %43, %19 : vector<32x128xf32>
    %45 = arith.mulf %44, %17 : vector<32x128xf32>
    %c2_i32 = arith.constant 2 : i32
    %c0_28 = arith.constant 0 : index
    %c0_29 = arith.constant 0 : index
    %c0_30 = arith.constant 0 : index
    %46 = vector.load %arg4[%c0_28, %c0_29, %c0_30] : memref<1x32x32xbf16, #tpu.memory_space<vmem>>, vector<1x32x32xbf16>
    %47 = vector.shape_cast %46 : vector<1x32x32xbf16> to vector<32x32xbf16>
    %48 = arith.truncf %39 : vector<32x128xf32> to vector<32x128xbf16>
    %cst_31 = arith.constant dense<0.000000e+00> : vector<32x128xf32>
    %49 = tpu.matmul %47, %48, %cst_31 {dimension_numbers = #tpu.dot_dimension_numbers<[1], [0], [0], [1], [0, 0, 1, 1], [], []>} : vector<32x32xbf16>, vector<32x128xbf16>, vector<32x128xf32> -> vector<32x128xf32>
    %50 = arith.addf %49, %18 : vector<32x128xf32>
    %51 = arith.mulf %50, %16 : vector<32x128xf32>
    %c0_32 = arith.constant 0 : index
    %c0_33 = arith.constant 0 : index
    %c0_34 = arith.constant 0 : index
    %52 = vector.load %arg4[%c0_32, %c0_33, %c0_34] : memref<1x32x32xbf16, #tpu.memory_space<vmem>>, vector<1x32x32xbf16>
    %53 = vector.shape_cast %52 : vector<1x32x32xbf16> to vector<32x32xbf16>
    %54 = arith.truncf %45 : vector<32x128xf32> to vector<32x128xbf16>
    %cst_35 = arith.constant dense<0.000000e+00> : vector<32x128xf32>
    %55 = tpu.matmul %53, %54, %cst_35 {dimension_numbers = #tpu.dot_dimension_numbers<[1], [0], [0], [1], [0, 0, 1, 1], [], []>} : vector<32x32xbf16>, vector<32x128xbf16>, vector<32x128xf32> -> vector<32x128xf32>
    %56 = arith.addf %55, %19 : vector<32x128xf32>
    %57 = arith.mulf %56, %17 : vector<32x128xf32>
    %c3_i32 = arith.constant 3 : i32
    %c0_36 = arith.constant 0 : index
    %c0_37 = arith.constant 0 : index
    %c0_38 = arith.constant 0 : index
    %58 = vector.load %arg4[%c0_36, %c0_37, %c0_38] : memref<1x32x32xbf16, #tpu.memory_space<vmem>>, vector<1x32x32xbf16>
    %59 = vector.shape_cast %58 : vector<1x32x32xbf16> to vector<32x32xbf16>
    %60 = arith.truncf %51 : vector<32x128xf32> to vector<32x128xbf16>
    %cst_39 = arith.constant dense<0.000000e+00> : vector<32x128xf32>
    %61 = tpu.matmul %59, %60, %cst_39 {dimension_numbers = #tpu.dot_dimension_numbers<[1], [0], [0], [1], [0, 0, 1, 1], [], []>} : vector<32x32xbf16>, vector<32x128xbf16>, vector<32x128xf32> -> vector<32x128xf32>
    %62 = arith.addf %61, %18 : vector<32x128xf32>
    %63 = arith.mulf %62, %16 : vector<32x128xf32>
    %c0_40 = arith.constant 0 : index
    %c0_41 = arith.constant 0 : index
    %c0_42 = arith.constant 0 : index
    %64 = vector.load %arg4[%c0_40, %c0_41, %c0_42] : memref<1x32x32xbf16, #tpu.memory_space<vmem>>, vector<1x32x32xbf16>
    %65 = vector.shape_cast %64 : vector<1x32x32xbf16> to vector<32x32xbf16>
    %66 = arith.truncf %57 : vector<32x128xf32> to vector<32x128xbf16>
    %cst_43 = arith.constant dense<0.000000e+00> : vector<32x128xf32>
    %67 = tpu.matmul %65, %66, %cst_43 {dimension_numbers = #tpu.dot_dimension_numbers<[1], [0], [0], [1], [0, 0, 1, 1], [], []>} : vector<32x32xbf16>, vector<32x128xbf16>, vector<32x128xf32> -> vector<32x128xf32>
    %68 = arith.addf %67, %19 : vector<32x128xf32>
    %69 = arith.mulf %68, %17 : vector<32x128xf32>
    %c4_i32 = arith.constant 4 : i32
    %c0_44 = arith.constant 0 : index
    %c0_45 = arith.constant 0 : index
    %c0_46 = arith.constant 0 : index
    %70 = vector.load %arg4[%c0_44, %c0_45, %c0_46] : memref<1x32x32xbf16, #tpu.memory_space<vmem>>, vector<1x32x32xbf16>
    %71 = vector.shape_cast %70 : vector<1x32x32xbf16> to vector<32x32xbf16>
    %72 = arith.truncf %63 : vector<32x128xf32> to vector<32x128xbf16>
    %cst_47 = arith.constant dense<0.000000e+00> : vector<32x128xf32>
    %73 = tpu.matmul %71, %72, %cst_47 {dimension_numbers = #tpu.dot_dimension_numbers<[1], [0], [0], [1], [0, 0, 1, 1], [], []>} : vector<32x32xbf16>, vector<32x128xbf16>, vector<32x128xf32> -> vector<32x128xf32>
    %74 = arith.addf %73, %18 : vector<32x128xf32>
    %75 = arith.mulf %74, %16 : vector<32x128xf32>
    %c0_48 = arith.constant 0 : index
    %c0_49 = arith.constant 0 : index
    %c0_50 = arith.constant 0 : index
    %76 = vector.load %arg4[%c0_48, %c0_49, %c0_50] : memref<1x32x32xbf16, #tpu.memory_space<vmem>>, vector<1x32x32xbf16>
    %77 = vector.shape_cast %76 : vector<1x32x32xbf16> to vector<32x32xbf16>
    %78 = arith.truncf %69 : vector<32x128xf32> to vector<32x128xbf16>
    %cst_51 = arith.constant dense<0.000000e+00> : vector<32x128xf32>
    %79 = tpu.matmul %77, %78, %cst_51 {dimension_numbers = #tpu.dot_dimension_numbers<[1], [0], [0], [1], [0, 0, 1, 1], [], []>} : vector<32x32xbf16>, vector<32x128xbf16>, vector<32x128xf32> -> vector<32x128xf32>
    %80 = arith.addf %79, %19 : vector<32x128xf32>
    %81 = arith.mulf %80, %17 : vector<32x128xf32>
    %c5_i32 = arith.constant 5 : i32
    %c0_52 = arith.constant 0 : index
    %c0_53 = arith.constant 0 : index
    %c0_54 = arith.constant 0 : index
    %82 = vector.load %arg4[%c0_52, %c0_53, %c0_54] : memref<1x32x32xbf16, #tpu.memory_space<vmem>>, vector<1x32x32xbf16>
    %83 = vector.shape_cast %82 : vector<1x32x32xbf16> to vector<32x32xbf16>
    %84 = arith.truncf %75 : vector<32x128xf32> to vector<32x128xbf16>
    %cst_55 = arith.constant dense<0.000000e+00> : vector<32x128xf32>
    %85 = tpu.matmul %83, %84, %cst_55 {dimension_numbers = #tpu.dot_dimension_numbers<[1], [0], [0], [1], [0, 0, 1, 1], [], []>} : vector<32x32xbf16>, vector<32x128xbf16>, vector<32x128xf32> -> vector<32x128xf32>
    %86 = arith.addf %85, %18 : vector<32x128xf32>
    %87 = arith.mulf %86, %16 : vector<32x128xf32>
    %c0_56 = arith.constant 0 : index
    %c0_57 = arith.constant 0 : index
    %c0_58 = arith.constant 0 : index
    %88 = vector.load %arg4[%c0_56, %c0_57, %c0_58] : memref<1x32x32xbf16, #tpu.memory_space<vmem>>, vector<1x32x32xbf16>
    %89 = vector.shape_cast %88 : vector<1x32x32xbf16> to vector<32x32xbf16>
    %90 = arith.truncf %81 : vector<32x128xf32> to vector<32x128xbf16>
    %cst_59 = arith.constant dense<0.000000e+00> : vector<32x128xf32>
    %91 = tpu.matmul %89, %90, %cst_59 {dimension_numbers = #tpu.dot_dimension_numbers<[1], [0], [0], [1], [0, 0, 1, 1], [], []>} : vector<32x32xbf16>, vector<32x128xbf16>, vector<32x128xf32> -> vector<32x128xf32>
    %92 = arith.addf %91, %19 : vector<32x128xf32>
    %93 = arith.mulf %92, %17 : vector<32x128xf32>
    %c6_i32 = arith.constant 6 : i32
    %c0_60 = arith.constant 0 : index
    %c0_61 = arith.constant 0 : index
    %c0_62 = arith.constant 0 : index
    %94 = vector.load %arg4[%c0_60, %c0_61, %c0_62] : memref<1x32x32xbf16, #tpu.memory_space<vmem>>, vector<1x32x32xbf16>
    %95 = vector.shape_cast %94 : vector<1x32x32xbf16> to vector<32x32xbf16>
    %96 = arith.truncf %87 : vector<32x128xf32> to vector<32x128xbf16>
    %cst_63 = arith.constant dense<0.000000e+00> : vector<32x128xf32>
    %97 = tpu.matmul %95, %96, %cst_63 {dimension_numbers = #tpu.dot_dimension_numbers<[1], [0], [0], [1], [0, 0, 1, 1], [], []>} : vector<32x32xbf16>, vector<32x128xbf16>, vector<32x128xf32> -> vector<32x128xf32>
    %98 = arith.addf %97, %18 : vector<32x128xf32>
    %99 = arith.mulf %98, %16 : vector<32x128xf32>
    %c0_64 = arith.constant 0 : index
    %c0_65 = arith.constant 0 : index
    %c0_66 = arith.constant 0 : index
    %100 = vector.load %arg4[%c0_64, %c0_65, %c0_66] : memref<1x32x32xbf16, #tpu.memory_space<vmem>>, vector<1x32x32xbf16>
    %101 = vector.shape_cast %100 : vector<1x32x32xbf16> to vector<32x32xbf16>
    %102 = arith.truncf %93 : vector<32x128xf32> to vector<32x128xbf16>
    %cst_67 = arith.constant dense<0.000000e+00> : vector<32x128xf32>
    %103 = tpu.matmul %101, %102, %cst_67 {dimension_numbers = #tpu.dot_dimension_numbers<[1], [0], [0], [1], [0, 0, 1, 1], [], []>} : vector<32x32xbf16>, vector<32x128xbf16>, vector<32x128xf32> -> vector<32x128xf32>
    %104 = arith.addf %103, %19 : vector<32x128xf32>
    %105 = arith.mulf %104, %17 : vector<32x128xf32>
    %c7_i32 = arith.constant 7 : i32
    %c0_68 = arith.constant 0 : index
    %c0_69 = arith.constant 0 : index
    %c0_70 = arith.constant 0 : index
    %106 = vector.load %arg4[%c0_68, %c0_69, %c0_70] : memref<1x32x32xbf16, #tpu.memory_space<vmem>>, vector<1x32x32xbf16>
    %107 = vector.shape_cast %106 : vector<1x32x32xbf16> to vector<32x32xbf16>
    %108 = arith.truncf %99 : vector<32x128xf32> to vector<32x128xbf16>
    %cst_71 = arith.constant dense<0.000000e+00> : vector<32x128xf32>
    %109 = tpu.matmul %107, %108, %cst_71 {dimension_numbers = #tpu.dot_dimension_numbers<[1], [0], [0], [1], [0, 0, 1, 1], [], []>} : vector<32x32xbf16>, vector<32x128xbf16>, vector<32x128xf32> -> vector<32x128xf32>
    %110 = arith.addf %109, %18 : vector<32x128xf32>
    %111 = arith.mulf %110, %16 : vector<32x128xf32>
    %c0_72 = arith.constant 0 : index
    %c0_73 = arith.constant 0 : index
    %c0_74 = arith.constant 0 : index
    %112 = vector.load %arg4[%c0_72, %c0_73, %c0_74] : memref<1x32x32xbf16, #tpu.memory_space<vmem>>, vector<1x32x32xbf16>
    %113 = vector.shape_cast %112 : vector<1x32x32xbf16> to vector<32x32xbf16>
    %114 = arith.truncf %105 : vector<32x128xf32> to vector<32x128xbf16>
    %cst_75 = arith.constant dense<0.000000e+00> : vector<32x128xf32>
    %115 = tpu.matmul %113, %114, %cst_75 {dimension_numbers = #tpu.dot_dimension_numbers<[1], [0], [0], [1], [0, 0, 1, 1], [], []>} : vector<32x32xbf16>, vector<32x128xbf16>, vector<32x128xf32> -> vector<32x128xf32>
    %116 = arith.addf %115, %19 : vector<32x128xf32>
    %117 = arith.mulf %116, %17 : vector<32x128xf32>
    %c8_i32 = arith.constant 8 : i32
    %c0_76 = arith.constant 0 : index
    %c0_77 = arith.constant 0 : index
    %c0_78 = arith.constant 0 : index
    %118 = vector.load %arg4[%c0_76, %c0_77, %c0_78] : memref<1x32x32xbf16, #tpu.memory_space<vmem>>, vector<1x32x32xbf16>
    %119 = vector.shape_cast %118 : vector<1x32x32xbf16> to vector<32x32xbf16>
    %120 = arith.truncf %111 : vector<32x128xf32> to vector<32x128xbf16>
    %cst_79 = arith.constant dense<0.000000e+00> : vector<32x128xf32>
    %121 = tpu.matmul %119, %120, %cst_79 {dimension_numbers = #tpu.dot_dimension_numbers<[1], [0], [0], [1], [0, 0, 1, 1], [], []>} : vector<32x32xbf16>, vector<32x128xbf16>, vector<32x128xf32> -> vector<32x128xf32>
    %122 = arith.addf %121, %18 : vector<32x128xf32>
    %123 = arith.mulf %122, %16 : vector<32x128xf32>
    %c0_80 = arith.constant 0 : index
    %c0_81 = arith.constant 0 : index
    %c0_82 = arith.constant 0 : index
    %124 = vector.load %arg4[%c0_80, %c0_81, %c0_82] : memref<1x32x32xbf16, #tpu.memory_space<vmem>>, vector<1x32x32xbf16>
    %125 = vector.shape_cast %124 : vector<1x32x32xbf16> to vector<32x32xbf16>
    %126 = arith.truncf %117 : vector<32x128xf32> to vector<32x128xbf16>
    %cst_83 = arith.constant dense<0.000000e+00> : vector<32x128xf32>
    %127 = tpu.matmul %125, %126, %cst_83 {dimension_numbers = #tpu.dot_dimension_numbers<[1], [0], [0], [1], [0, 0, 1, 1], [], []>} : vector<32x32xbf16>, vector<32x128xbf16>, vector<32x128xf32> -> vector<32x128xf32>
    %128 = arith.addf %127, %19 : vector<32x128xf32>
    %129 = arith.mulf %128, %17 : vector<32x128xf32>
    %c9_i32 = arith.constant 9 : i32
    %c0_84 = arith.constant 0 : index
    %c0_85 = arith.constant 0 : index
    %c0_86 = arith.constant 0 : index
    %130 = vector.load %arg4[%c0_84, %c0_85, %c0_86] : memref<1x32x32xbf16, #tpu.memory_space<vmem>>, vector<1x32x32xbf16>
    %131 = vector.shape_cast %130 : vector<1x32x32xbf16> to vector<32x32xbf16>
    %132 = arith.truncf %123 : vector<32x128xf32> to vector<32x128xbf16>
    %cst_87 = arith.constant dense<0.000000e+00> : vector<32x128xf32>
    %133 = tpu.matmul %131, %132, %cst_87 {dimension_numbers = #tpu.dot_dimension_numbers<[1], [0], [0], [1], [0, 0, 1, 1], [], []>} : vector<32x32xbf16>, vector<32x128xbf16>, vector<32x128xf32> -> vector<32x128xf32>
    %134 = arith.addf %133, %18 : vector<32x128xf32>
    %135 = arith.mulf %134, %16 : vector<32x128xf32>
    %c0_88 = arith.constant 0 : index
    %c0_89 = arith.constant 0 : index
    %c0_90 = arith.constant 0 : index
    %136 = vector.load %arg4[%c0_88, %c0_89, %c0_90] : memref<1x32x32xbf16, #tpu.memory_space<vmem>>, vector<1x32x32xbf16>
    %137 = vector.shape_cast %136 : vector<1x32x32xbf16> to vector<32x32xbf16>
    %138 = arith.truncf %129 : vector<32x128xf32> to vector<32x128xbf16>
    %cst_91 = arith.constant dense<0.000000e+00> : vector<32x128xf32>
    %139 = tpu.matmul %137, %138, %cst_91 {dimension_numbers = #tpu.dot_dimension_numbers<[1], [0], [0], [1], [0, 0, 1, 1], [], []>} : vector<32x32xbf16>, vector<32x128xbf16>, vector<32x128xf32> -> vector<32x128xf32>
    %140 = arith.addf %139, %19 : vector<32x128xf32>
    %141 = arith.mulf %140, %17 : vector<32x128xf32>
    %c10_i32 = arith.constant 10 : i32
    %c0_92 = arith.constant 0 : index
    %c0_93 = arith.constant 0 : index
    %c0_94 = arith.constant 0 : index
    %142 = vector.load %arg4[%c0_92, %c0_93, %c0_94] : memref<1x32x32xbf16, #tpu.memory_space<vmem>>, vector<1x32x32xbf16>
    %143 = vector.shape_cast %142 : vector<1x32x32xbf16> to vector<32x32xbf16>
    %144 = arith.truncf %135 : vector<32x128xf32> to vector<32x128xbf16>
    %cst_95 = arith.constant dense<0.000000e+00> : vector<32x128xf32>
    %145 = tpu.matmul %143, %144, %cst_95 {dimension_numbers = #tpu.dot_dimension_numbers<[1], [0], [0], [1], [0, 0, 1, 1], [], []>} : vector<32x32xbf16>, vector<32x128xbf16>, vector<32x128xf32> -> vector<32x128xf32>
    %146 = arith.addf %145, %18 : vector<32x128xf32>
    %147 = arith.mulf %146, %16 : vector<32x128xf32>
    %c0_96 = arith.constant 0 : index
    %c0_97 = arith.constant 0 : index
    %c0_98 = arith.constant 0 : index
    %148 = vector.load %arg4[%c0_96, %c0_97, %c0_98] : memref<1x32x32xbf16, #tpu.memory_space<vmem>>, vector<1x32x32xbf16>
    %149 = vector.shape_cast %148 : vector<1x32x32xbf16> to vector<32x32xbf16>
    %150 = arith.truncf %141 : vector<32x128xf32> to vector<32x128xbf16>
    %cst_99 = arith.constant dense<0.000000e+00> : vector<32x128xf32>
    %151 = tpu.matmul %149, %150, %cst_99 {dimension_numbers = #tpu.dot_dimension_numbers<[1], [0], [0], [1], [0, 0, 1, 1], [], []>} : vector<32x32xbf16>, vector<32x128xbf16>, vector<32x128xf32> -> vector<32x128xf32>
    %152 = arith.addf %151, %19 : vector<32x128xf32>
    %153 = arith.mulf %152, %17 : vector<32x128xf32>
    %c0_100 = arith.constant 0 : index
    %c0_101 = arith.constant 0 : index
    %154 = vector.load %arg6[%c0_100, %c0_101] : memref<3x32xf32, #tpu.memory_space<vmem>>, vector<3x32xf32>
    %c0_102 = arith.constant 0 : index
    %c0_103 = arith.constant 0 : index
    %155 = vector.load %arg7[%c0_102, %c0_103] : memref<3x1xf32, #tpu.memory_space<vmem>>, vector<3x1xf32>
    %c0_104 = arith.constant 0 : index
    %c0_105 = arith.constant 0 : index
    %156 = vector.load %arg9[%c0_104, %c0_105] : memref<32x256xf32, #tpu.memory_space<vmem>>, vector<32x128xf32>
    tpu.vector_store %arg9[%c0_104, %c0_105], %147 {strides = array<i32>} : memref<32x256xf32, #tpu.memory_space<vmem>>, vector<32x128xf32>,
    %cst_106 = arith.constant dense<0.000000e+00> : vector<3x128xf32>
    %157 = tpu.matmul %154, %147, %cst_106 {dimension_numbers = #tpu.dot_dimension_numbers<[1], [0], [0], [1], [0, 0, 1, 1], [], []>} : vector<3x32xf32>, vector<32x128xf32>, vector<3x128xf32> -> vector<3x128xf32>
    %158 = vector.broadcast %155 : vector<3x1xf32> to vector<3x128xf32>
    %159 = arith.addf %157, %158 : vector<3x128xf32>
    %c0_107 = arith.constant 0 : index
    %c0_108 = arith.constant 0 : index
    %160 = vector.load %arg8[%c0_107, %c0_108] : memref<3x256xf32, #tpu.memory_space<vmem>>, vector<3x128xf32>
    tpu.vector_store %arg8[%c0_107, %c0_108], %159 {strides = array<i32>} : memref<3x256xf32, #tpu.memory_space<vmem>>, vector<3x128xf32>,
    %c0_109 = arith.constant 0 : index
    %c128 = arith.constant 128 : index
    %161 = vector.load %arg9[%c0_109, %c128] : memref<32x256xf32, #tpu.memory_space<vmem>>, vector<32x128xf32>
    tpu.vector_store %arg9[%c0_109, %c128], %153 {strides = array<i32>} : memref<32x256xf32, #tpu.memory_space<vmem>>, vector<32x128xf32>,
    %cst_110 = arith.constant dense<0.000000e+00> : vector<3x128xf32>
    %162 = tpu.matmul %154, %153, %cst_110 {dimension_numbers = #tpu.dot_dimension_numbers<[1], [0], [0], [1], [0, 0, 1, 1], [], []>} : vector<3x32xf32>, vector<32x128xf32>, vector<3x128xf32> -> vector<3x128xf32>
    %163 = vector.broadcast %155 : vector<3x1xf32> to vector<3x128xf32>
    %164 = arith.addf %162, %163 : vector<3x128xf32>
    %c0_111 = arith.constant 0 : index
    %c128_112 = arith.constant 128 : index
    %165 = vector.load %arg8[%c0_111, %c128_112] : memref<3x256xf32, #tpu.memory_space<vmem>>, vector<3x128xf32>
    tpu.vector_store %arg8[%c0_111, %c128_112], %164 {strides = array<i32>} : memref<3x256xf32, #tpu.memory_space<vmem>>, vector<3x128xf32>,
    return
  }
  func.func @transform_0(%arg0: i32) -> (i32, i32) {
    %c0_i32 = arith.constant 0 : i32
    %c0_i32_0 = arith.constant 0 : i32
    return %c0_i32, %arg0 : i32, i32
  }
  func.func @transform_1(%arg0: i32) -> (i32, i32) {
    %c0_i32 = arith.constant 0 : i32
    %c0_i32_0 = arith.constant 0 : i32
    %c0_i32_1 = arith.constant 0 : i32
    return %c0_i32, %c0_i32_0 : i32, i32
  }
  func.func @transform_2(%arg0: i32) -> (i32, i32) {
    %c0_i32 = arith.constant 0 : i32
    %c0_i32_0 = arith.constant 0 : i32
    %c0_i32_1 = arith.constant 0 : i32
    return %c0_i32, %c0_i32_0 : i32, i32
  }
  func.func @transform_3(%arg0: i32) -> (i32, i32, i32) {
    %c0_i32 = arith.constant 0 : i32
    %c0_i32_0 = arith.constant 0 : i32
    %c0_i32_1 = arith.constant 0 : i32
    %c0_i32_2 = arith.constant 0 : i32
    return %c0_i32, %c0_i32_0, %c0_i32_1 : i32, i32, i32
  }
  func.func @transform_4(%arg0: i32) -> (i32, i32, i32) {
    %c0_i32 = arith.constant 0 : i32
    %c0_i32_0 = arith.constant 0 : i32
    %c0_i32_1 = arith.constant 0 : i32
    %c0_i32_2 = arith.constant 0 : i32
    return %c0_i32, %c0_i32_0, %c0_i32_1 : i32, i32, i32
  }
  func.func @transform_5(%arg0: i32) -> (i32, i32) {
    %c0_i32 = arith.constant 0 : i32
    %c0_i32_0 = arith.constant 0 : i32
    %c0_i32_1 = arith.constant 0 : i32
    return %c0_i32, %c0_i32_0 : i32, i32
  }
  func.func @transform_6(%arg0: i32) -> (i32, i32) {
    %c0_i32 = arith.constant 0 : i32
    %c0_i32_0 = arith.constant 0 : i32
    %c0_i32_1 = arith.constant 0 : i32
    return %c0_i32, %c0_i32_0 : i32, i32
  }
  func.func @transform_7(%arg0: i32) -> (i32, i32) {
    %c0_i32 = arith.constant 0 : i32
    %c0_i32_0 = arith.constant 0 : i32
    return %c0_i32, %arg0 : i32, i32
  }
  func.func @transform_8(%arg0: i32) -> (i32, i32) {
    %c0_i32 = arith.constant 0 : i32
    %c0_i32_0 = arith.constant 0 : i32
    return %c0_i32, %arg0 : i32, i32
  }
}

</mosaic_0001>

<llo_original>
// kernel: tpu_custom_call.1
$region0: #{tpu_custom_call.1}
  #allocation0 [shape = 'u32[]', space=smem, size = 0x4, offset = 0x4, fixed_abs, tag = 'smem constant byte address 0x4 - core index']
  #allocation1 [shape = 'u32[72,128]{1,0:T(1,128)}', space=vmem, size = 0x9000, scoped, tag = 'internal scratch']
  %s0 = inlined_call_operand.vmem [shape: f32[2,512], index: 0, kind: input, shape index: {}]
  %s1 = inlined_call_operand.vmem [shape: f32[64,2], index: 1, kind: input, shape index: {}]
  %s2 = inlined_call_operand.vmem [shape: f32[64,1], index: 2, kind: input, shape index: {}]
  %s3 = inlined_call_operand.vmem [shape: bf16[1,32,32], index: 3, kind: input, shape index: {}]
  %s4 = inlined_call_operand.vmem [shape: f32[1,32,1], index: 4, kind: input, shape index: {}]
  %s5 = inlined_call_operand.vmem [shape: f32[3,32], index: 5, kind: input, shape index: {}]
  %s6 = inlined_call_operand.vmem [shape: f32[3,1], index: 6, kind: input, shape index: {}]
  %s7 = inlined_call_operand.hbm [shape: f32[3,512], index: 7, kind: output, shape index: {0}]
  %s8 = inlined_call_operand.hbm [shape: f32[32,512], index: 8, kind: output, shape index: {1}]
  %9 = xla_tuple %s7, %s8
  %s10 = sld [smem:[#allocation0]]
  $region69: #{tpu_custom_call.1} parent=0
    _
  %s12 = ssub.s32 1, %s10
  %s13 = scalar_select 0, %s12, %s10
  $region1: #{tpu_custom_call.1} parent=0
    #allocation2 [shape = 'u8[8192]{0}', space=vmem, size = 0x2000, scoped, tag = 'output window, operand 0']
    #allocation3 [shape = 's32[2]{0}', space=sflag, size = 0x8, scoped, tag = 'scoped memory for tpu_custom_call.1']
    #allocation4 [shape = 'u8[65536]{0}', space=vmem, size = 0x10000, scoped, tag = 'output window, operand 1']
    #allocation5 [shape = 's32[2]{0}', space=sflag, size = 0x8, scoped, tag = 'scoped memory for tpu_custom_call.1']
    %14 = vsyncpa [#allocation3], 0
    %s15 = scalar_lea.sflag [#allocation3], 1
    %16 = vsyncpa %s15, 0
    %17 = vsyncpa [#allocation5], 0
    %s18 = scalar_lea.sflag [#allocation5], 1
    %19 = vsyncpa %s18, 0
    loop: start=0, step=1, limit=4
    $region2: #{tpu_custom_call.1} parent=1 // loop_pre_header
      _
    $region3: #{tpu_custom_call.1} parent=1 // loop_header
      %s21 = sphi 0, %s25
      %p22 = scmp.ge.s32.totalorder %s21, 4
      %s31 = sphi 0, %s33
      %s34 = sphi 0, %s31
      %s35 = sphi 0, %s34
      %s51 = sphi 0, %s35
      %s55 = sphi 0, %s55
      %s57 = sphi 0, %s55
      %s58 = sphi 0, %s57
      %s72 = sphi 0, %s58
      %s76 = sphi 0, %s76
      %s78 = sphi 0, %s76
      %s79 = sphi 0, %s78
      %s93 = sphi 0, %s79
      %s97 = sphi 0, %s97
      %s99 = sphi 0, %s97
      %s100 = sphi 0, %s99
      %s114 = sphi 0, %s100
      %s118 = sphi 0, %s118
      %s120 = sphi 0, %s118
      %s121 = sphi 0, %s120
      %s135 = sphi 0, %s121
      %s139 = sphi 0, %s139
      %s141 = sphi 0, %s139
      %s142 = sphi 0, %s141
      %s156 = sphi 0, %s142
      %s160 = sphi 0, %s160
      %s162 = sphi 0, %s160
      %s163 = sphi 0, %s162
      %s177 = sphi 0, %s163
      %s183 = sphi 0, %s185
      %s186 = sphi 0, %s183
      %s187 = sphi 0, %s186
      %s203 = sphi 0, %s187
      %s209 = sphi 0, %s211
      %s212 = sphi 0, %s209
      %s213 = sphi 0, %s212
      %s229 = sphi 0, %s213
    $region4: #{tpu_custom_call.1} parent=1 // loop_header_branch
      %24 = sbr.rel (%p22) target = $region8
    $region5: #{tpu_custom_call.1} parent=1 // loop_body
      %s26 = ssub.s32 %s21, 1
      %s27 = ssub.s32 %s21, 2
      %s28 = sadd.s32 %s21, 1
      %s29 = ssub.s32 %s21, %s28
      %p30 = scmp.eq.s32.totalorder %s29, 0
      %s32 = sadd.s32 %s31, 1
      %s33 = scalar_select %p30, %s31, %s32
      %p36 = pneg %p30
      %p37 = scmp.eq.s32.totalorder %s21, 1
      %p38 = por %p36, %p37
      %p39 = scmp.ne.s32.totalorder %s31, %s34
      %p40 = scmp.eq.s32.totalorder %s21, 0
      %p41 = por %p39, %p40
      %p42 = scmp.ne.s32.totalorder %s31, %s34
      %p43 = scmp.eq.s32.totalorder %s26, 1
      %p44 = por %p42, %p43
      %p45 = scmp.ne.s32.totalorder %s34, %s35
      %p46 = scmp.eq.s32.totalorder %s26, 0
      %p47 = por %p45, %p46
      %p48 = scmp.ne.s32.totalorder %s34, %s35
      %p49 = scmp.eq.s32.totalorder %s27, 1
      %p50 = por %p48, %p49
      %p52 = scmp.ne.s32.totalorder %s35, %s51
      %p53 = scmp.eq.s32.totalorder %s27, 0
      %p54 = por %p52, %p53
      %s56 = sadd.s32 %s55, 1
      %p59 = scmp.eq.s32.totalorder %s21, 1
      %p60 = scmp.ne.s32.totalorder %s55, %s57
      %p61 = scmp.eq.s32.totalorder %s21, 0
      %p62 = por %p60, %p61
      %p63 = scmp.ne.s32.totalorder %s55, %s57
      %p64 = scmp.eq.s32.totalorder %s26, 1
      %p65 = por %p63, %p64
      %p66 = scmp.ne.s32.totalorder %s57, %s58
      %p67 = scmp.eq.s32.totalorder %s26, 0
      %p68 = por %p66, %p67
      %p69 = scmp.ne.s32.totalorder %s57, %s58
      %p70 = scmp.eq.s32.totalorder %s27, 1
      %p71 = por %p69, %p70
      %p73 = scmp.ne.s32.totalorder %s58, %s72
      %p74 = scmp.eq.s32.totalorder %s27, 0
      %p75 = por %p73, %p74
      %s77 = sadd.s32 %s76, 1
      %p80 = scmp.eq.s32.totalorder %s21, 1
      %p81 = scmp.ne.s32.totalorder %s76, %s78
      %p82 = scmp.eq.s32.totalorder %s21, 0
      %p83 = por %p81, %p82
      %p84 = scmp.ne.s32.totalorder %s76, %s78
      %p85 = scmp.eq.s32.totalorder %s26, 1
      %p86 = por %p84, %p85
      %p87 = scmp.ne.s32.totalorder %s78, %s79
      %p88 = scmp.eq.s32.totalorder %s26, 0
      %p89 = por %p87, %p88
      %p90 = scmp.ne.s32.totalorder %s78, %s79
      %p91 = scmp.eq.s32.totalorder %s27, 1
      %p92 = por %p90, %p91
      %p94 = scmp.ne.s32.totalorder %s79, %s93
      %p95 = scmp.eq.s32.totalorder %s27, 0
      %p96 = por %p94, %p95
      %s98 = sadd.s32 %s97, 1
      %p101 = scmp.eq.s32.totalorder %s21, 1
      %p102 = scmp.ne.s32.totalorder %s97, %s99
      %p103 = scmp.eq.s32.totalorder %s21, 0
      %p104 = por %p102, %p103
      %p105 = scmp.ne.s32.totalorder %s97, %s99
      %p106 = scmp.eq.s32.totalorder %s26, 1
      %p107 = por %p105, %p106
      %p108 = scmp.ne.s32.totalorder %s99, %s100
      %p109 = scmp.eq.s32.totalorder %s26, 0
      %p110 = por %p108, %p109
      %p111 = scmp.ne.s32.totalorder %s99, %s100
      %p112 = scmp.eq.s32.totalorder %s27, 1
      %p113 = por %p111, %p112
      %p115 = scmp.ne.s32.totalorder %s100, %s114
      %p116 = scmp.eq.s32.totalorder %s27, 0
      %p117 = por %p115, %p116
      %s119 = sadd.s32 %s118, 1
      %p122 = scmp.eq.s32.totalorder %s21, 1
      %p123 = scmp.ne.s32.totalorder %s118, %s120
      %p124 = scmp.eq.s32.totalorder %s21, 0
      %p125 = por %p123, %p124
      %p126 = scmp.ne.s32.totalorder %s118, %s120
      %p127 = scmp.eq.s32.totalorder %s26, 1
      %p128 = por %p126, %p127
      %p129 = scmp.ne.s32.totalorder %s120, %s121
      %p130 = scmp.eq.s32.totalorder %s26, 0
      %p131 = por %p129, %p130
      %p132 = scmp.ne.s32.totalorder %s120, %s121
      %p133 = scmp.eq.s32.totalorder %s27, 1
      %p134 = por %p132, %p133
      %p136 = scmp.ne.s32.totalorder %s121, %s135
      %p137 = scmp.eq.s32.totalorder %s27, 0
      %p138 = por %p136, %p137
      %s140 = sadd.s32 %s139, 1
      %p143 = scmp.eq.s32.totalorder %s21, 1
      %p144 = scmp.ne.s32.totalorder %s139, %s141
      %p145 = scmp.eq.s32.totalorder %s21, 0
      %p146 = por %p144, %p145
      %p147 = scmp.ne.s32.totalorder %s139, %s141
      %p148 = scmp.eq.s32.totalorder %s26, 1
      %p149 = por %p147, %p148
      %p150 = scmp.ne.s32.totalorder %s141, %s142
      %p151 = scmp.eq.s32.totalorder %s26, 0
      %p152 = por %p150, %p151
      %p153 = scmp.ne.s32.totalorder %s141, %s142
      %p154 = scmp.eq.s32.totalorder %s27, 1
      %p155 = por %p153, %p154
      %p157 = scmp.ne.s32.totalorder %s142, %s156
      %p158 = scmp.eq.s32.totalorder %s27, 0
      %p159 = por %p157, %p158
      %s161 = sadd.s32 %s160, 1
      %p164 = scmp.eq.s32.totalorder %s21, 1
      %p165 = scmp.ne.s32.totalorder %s160, %s162
      %p166 = scmp.eq.s32.totalorder %s21, 0
      %p167 = por %p165, %p166
      %p168 = scmp.ne.s32.totalorder %s160, %s162
      %p169 = scmp.eq.s32.totalorder %s26, 1
      %p170 = por %p168, %p169
      %p171 = scmp.ne.s32.totalorder %s162, %s163
      %p172 = scmp.eq.s32.totalorder %s26, 0
      %p173 = por %p171, %p172
      %p174 = scmp.ne.s32.totalorder %s162, %s163
      %p175 = scmp.eq.s32.totalorder %s27, 1
      %p176 = por %p174, %p175
      %p178 = scmp.ne.s32.totalorder %s163, %s177
      %p179 = scmp.eq.s32.totalorder %s27, 0
      %p180 = por %p178, %p179
      %s181 = ssub.s32 %s21, %s28
      %p182 = scmp.eq.s32.totalorder %s181, 0
      %s184 = sadd.s32 %s183, 1
      %s185 = scalar_select %p182, %s183, %s184
      %p188 = pneg %p182
      %p189 = scmp.eq.s32.totalorder %s21, 1
      %p190 = por %p188, %p189
      %p191 = scmp.ne.s32.totalorder %s183, %s186
      %p192 = scmp.eq.s32.totalorder %s21, 0
      %p193 = por %p191, %p192
      %p194 = scmp.ne.s32.totalorder %s183, %s186
      %p195 = scmp.eq.s32.totalorder %s26, 1
      %p196 = por %p194, %p195
      %p197 = scmp.ne.s32.totalorder %s186, %s187
      %p198 = scmp.eq.s32.totalorder %s26, 0
      %p199 = por %p197, %p198
      %p200 = scmp.ne.s32.totalorder %s186, %s187
      %p201 = scmp.eq.s32.totalorder %s27, 1
      %p202 = por %p200, %p201
      %p204 = scmp.ne.s32.totalorder %s187, %s203
      %p205 = scmp.eq.s32.totalorder %s27, 0
      %p206 = por %p204, %p205
      %s207 = ssub.s32 %s21, %s28
      %p208 = scmp.eq.s32.totalorder %s207, 0
      %s210 = sadd.s32 %s209, 1
      %s211 = scalar_select %p208, %s209, %s210
      %p214 = pneg %p208
      %p215 = scmp.eq.s32.totalorder %s21, 1
      %p216 = por %p214, %p215
      %p217 = scmp.ne.s32.totalorder %s209, %s212
      %p218 = scmp.eq.s32.totalorder %s21, 0
      %p219 = por %p217, %p218
      %p220 = scmp.ne.s32.totalorder %s209, %s212
      %p221 = scmp.eq.s32.totalorder %s26, 1
      %p222 = por %p220, %p221
      %p223 = scmp.ne.s32.totalorder %s212, %s213
      %p224 = scmp.eq.s32.totalorder %s26, 0
      %p225 = por %p223, %p224
      %p226 = scmp.ne.s32.totalorder %s212, %s213
      %p227 = scmp.eq.s32.totalorder %s27, 1
      %p228 = por %p226, %p227
      %p230 = scmp.ne.s32.totalorder %s213, %s229
      %p231 = scmp.eq.s32.totalorder %s27, 0
      %p232 = por %p230, %p231
      %p233 = scmp.le.s32.totalorder 1, %s21
      %p234 = scmp.lt.s32.totalorder %s21, 3
      %p235 = pnand %p233, %p234
      %p236 = pneg %p235
      // Predicated region
      $region9: #{tpu_custom_call.1} parent=5 // pred_check
        _
      $region10: #{tpu_custom_call.1} parent=5 // pred_check_branch
        %238 = sbr.rel (%p235) target = $region12
      $region11: #{tpu_custom_call.1} parent=5 // pred_region
        %s239 = ssub.s32 %s21, 1
        // Predicated region
        $region13: #{tpu_custom_call.1} parent=11 // pred_check
          %p240 = pneg %p68
        $region14: #{tpu_custom_call.1} parent=11 // pred_check_branch
          %242 = sbr.rel (%p240) target = $region16
        $region15: #{tpu_custom_call.1} parent=11 // pred_region
          _
        $region16: #{tpu_custom_call.1} parent=11 // pred_fallthru
          _
        // Predicated region
        $region17: #{tpu_custom_call.1} parent=11 // pred_check
          %p243 = pneg %p89
        $region18: #{tpu_custom_call.1} parent=11 // pred_check_branch
          %245 = sbr.rel (%p243) target = $region20
        $region19: #{tpu_custom_call.1} parent=11 // pred_region
          _
        $region20: #{tpu_custom_call.1} parent=11 // pred_fallthru
          _
        // Predicated region
        $region21: #{tpu_custom_call.1} parent=11 // pred_check
          %p246 = pneg %p110
        $region22: #{tpu_custom_call.1} parent=11 // pred_check_branch
          %248 = sbr.rel (%p246) target = $region24
        $region23: #{tpu_custom_call.1} parent=11 // pred_region
          _
        $region24: #{tpu_custom_call.1} parent=11 // pred_fallthru
          _
        // Predicated region
        $region25: #{tpu_custom_call.1} parent=11 // pred_check
          %p249 = pneg %p131
        $region26: #{tpu_custom_call.1} parent=11 // pred_check_branch
          %251 = sbr.rel (%p249) target = $region28
        $region27: #{tpu_custom_call.1} parent=11 // pred_region
          _
        $region28: #{tpu_custom_call.1} parent=11 // pred_fallthru
          _
        // Predicated region
        $region29: #{tpu_custom_call.1} parent=11 // pred_check
          %p252 = pneg %p152
        $region30: #{tpu_custom_call.1} parent=11 // pred_check_branch
          %254 = sbr.rel (%p252) target = $region32
        $region31: #{tpu_custom_call.1} parent=11 // pred_region
          _
        $region32: #{tpu_custom_call.1} parent=11 // pred_fallthru
          _
        // Predicated region
        $region33: #{tpu_custom_call.1} parent=11 // pred_check
          %p255 = pneg %p173
        $region34: #{tpu_custom_call.1} parent=11 // pred_check_branch
          %257 = sbr.rel (%p255) target = $region36
        $region35: #{tpu_custom_call.1} parent=11 // pred_region
          _
        $region36: #{tpu_custom_call.1} parent=11 // pred_fallthru
          _
      $region12: #{tpu_custom_call.1} parent=5 // pred_fallthru
        _
      %p258 = scmp.lt.s32.totalorder %s21, 2
      // Predicated region
      $region37: #{tpu_custom_call.1} parent=5 // pred_check
        %p259 = pneg %p258
      $region38: #{tpu_custom_call.1} parent=5 // pred_check_branch
        %261 = sbr.rel (%p259) target = $region40
      $region39: #{tpu_custom_call.1} parent=5 // pred_region
        // Predicated region
        $region41: #{tpu_custom_call.1} parent=39 // pred_check
          %p262 = pneg %p41
        $region42: #{tpu_custom_call.1} parent=39 // pred_check_branch
          %264 = sbr.rel (%p262) target = $region44
        $region43: #{tpu_custom_call.1} parent=39 // pred_region
          %s265 = smul.u32 2, %s21
          %p266 = scmp.lt.s32.totalorder %s265, 3
          %s267 = scalar_select %p266, %s265, 3
          %s268 = smul.addr %s267, 2
          %s269 = scalar_lea.vmem %s0, %s268
          %s270 = smul.u32 2, %s21
        $region44: #{tpu_custom_call.1} parent=39 // pred_fallthru
          _
      $region40: #{tpu_custom_call.1} parent=5 // pred_fallthru
        _
      %p271 = scmp.le.s32.totalorder 1, %s21
      %p272 = scmp.lt.s32.totalorder %s21, 3
      %p273 = pnand %p271, %p272
      %p274 = pneg %p273
      // Predicated region
      $region45: #{tpu_custom_call.1} parent=5 // pred_check
        _
      $region46: #{tpu_custom_call.1} parent=5 // pred_check_branch
        %276 = sbr.rel (%p273) target = $region48
      $region47: #{tpu_custom_call.1} parent=5 // pred_region
        %s277 = ssub.s32 %s21, 1
        %s278 = smul.u32 2, %s26
        %p279 = scmp.lt.s32.totalorder %s278, 3
        %s280 = scalar_select %p279, %s278, 3
        %s281 = smul.addr %s280, 2
        %s282 = scalar_lea.vmem %s0, %s281
        %p283 = pneg %p47
        %p284 = pneg %p44
        %p285 = pneg %p68
        %p286 = pneg %p65
        %p287 = pneg %p89
        %p288 = pneg %p86
        %p289 = pneg %p110
        %p290 = pneg %p107
        %p291 = pneg %p131
        %p292 = pneg %p128
        %p293 = pneg %p152
        %p294 = pneg %p149
        %p295 = pneg %p173
        %p296 = pneg %p170
        %p297 = pneg %p199
        %p298 = pneg %p196
        %s299 = sand.u32 %s186, 1
        %s300 = scalar_lea.sflag [#allocation3], %s299
        %s301 = sand.u32 %s186, 1
        %s302 = smul.addr %s301, 8
        %s303 = scalar_lea.vmem [#allocation2], %s302
        %p304 = pneg %p225
        %p305 = pneg %p222
        %s306 = sand.u32 %s212, 1
        %s307 = scalar_lea.sflag [#allocation5], %s306
        %s308 = sand.u32 %s212, 1
        %s309 = smul.addr %s308, 64
        %s310 = scalar_lea.vmem [#allocation4], %s309
        %s311 = smul.u32 2, %s26
        %p312 = scmp.lt.s32.totalorder %s311, 3
        %s313 = scalar_select %p312, %s311, 3
        %s314 = smul.addr %s313, 2
        %s315 = scalar_lea.vmem %s0, %s314
        %s316 = smul.u32 2, %s26
        %s317 = smul.u32 2, %s26
        %s318 = smul.u32 2, %s26
        %v320 = vld [vmem:[%s315] sm:$0xf]
        %v321 = vld [vmem:[%s1] sm:$0xff]
        %v322 = vld [vmem:[%s1 + $0x8] sm:$0xff]
        %v323 = vld [vmem:[%s1 + $0x10] sm:$0xff]
        %v324 = vld [vmem:[%s1 + $0x18] sm:$0xff]
        %v325 = vld [vmem:[%s1 + $0x20] sm:$0xff]
        %v326 = vld [vmem:[%s1 + $0x28] sm:$0xff]
        %v327 = vld [vmem:[%s1 + $0x30] sm:$0xff]
        %v328 = vld [vmem:[%s1 + $0x38] sm:$0xff]
        %v329 = vld [vmem:[%s2] sm:$0xff]
        %v330 = vld [vmem:[%s2 + $0x8] sm:$0xff]
        %v331 = vld [vmem:[%s2 + $0x10] sm:$0xff]
        %v332 = vld [vmem:[%s2 + $0x18] sm:$0xff]
        %v333 = vld [vmem:[%s2 + $0x20] sm:$0xff]
        %v334 = vld [vmem:[%s2 + $0x28] sm:$0xff]
        %v335 = vld [vmem:[%s2 + $0x30] sm:$0xff]
        %v336 = vld [vmem:[%s2 + $0x38] sm:$0xff]
        %338 = vset.pattern.permute.xlu0 0
        %339 = vperm.xlu0 %338, %v329
        %v340 = vpop.permute.xlu0 %339
        %343 = vset.pattern.permute.xlu0 0
        %344 = vperm.xlu0 %343, %v330
        %v345 = vpop.permute.xlu0 %344
        %348 = vset.pattern.permute.xlu0 0
        %349 = vperm.xlu0 %348, %v331
        %v350 = vpop.permute.xlu0 %349
        %353 = vset.pattern.permute.xlu0 0
        %354 = vperm.xlu0 %353, %v332
        %v355 = vpop.permute.xlu0 %354
        %358 = vset.pattern.permute.xlu0 0
        %359 = vperm.xlu0 %358, %v333
        %v360 = vpop.permute.xlu0 %359
        %363 = vset.pattern.permute.xlu0 0
        %364 = vperm.xlu0 %363, %v334
        %v365 = vpop.permute.xlu0 %364
        %368 = vset.pattern.permute.xlu0 0
        %369 = vperm.xlu0 %368, %v335
        %v370 = vpop.permute.xlu0 %369
        %373 = vset.pattern.permute.xlu0 0
        %374 = vperm.xlu0 %373, %v336
        %v375 = vpop.permute.xlu0 %374
        %378 = vst [vmem:[#allocation1] ss:$4 sm:$0xff] %v320
        %v379 = vld.sshfl [vmem:[#allocation1] sm:$0xff pattern:$0x73625140]
        %v380 = vld.sshfl [vmem:[#allocation1 + $0x8] sm:$0xff pattern:$0x73625140]
        %vm381 = vcmask 15360
        %v383 = vsel %vm381, %v321, 0
        %v386 = vsel %vm381, %v322, 0
        %v389 = vsel %vm381, %v323, 0
        %v392 = vsel %vm381, %v324, 0
        %v395 = vsel %vm381, %v325, 0
        %v398 = vsel %vm381, %v326, 0
        %v401 = vsel %vm381, %v327, 0
        %v404 = vsel %vm381, %v328, 0
        %vm406 = vcmask 1041408
        %v407 = vsel %vm406, %v379, 0
        %v409 = vsel %vm406, %v380, 0
        %411 = vmatpush.msra.mxu0 0.0
        %412 = vmatpush.msra.mxu0 0.0
        %413 = vmatpush.msra.mxu0 0.0
        %414 = vmatpush.msra.mxu0 0.0
        %415 = vmatpush.msra.mxu0 0.0
        %416 = vmatpush.msra.mxu0 0.0
        %417 = vmatpush.msra.mxu0 0.0
        %418 = vmatpush.msra.mxu0 0.0
        %419 = vmatpush.msra.mxu0 0.0
        %420 = vmatpush.msra.mxu0 0.0
        %421 = vmatpush.msra.mxu0 0.0
        %422 = vmatpush.msra.mxu0 0.0
        %423 = vmatpush.msra.mxu0 0.0
        %424 = vmatpush.msra.mxu0 0.0
        %425 = vmatpush.msra.mxu0 0.0
        %426 = vmatpush.msra.mxu0 %v407
        %427 = vmatmul.f32.gmra.mxu0 %v383
        %v428 = vpop.f32.mrf.mxu0
        %v429 = vadd.f32 %v340, %v428
        %430 = vmatmul.f32.gmra.mxu0 %v386
        %v431 = vpop.f32.mrf.mxu0
        %v432 = vadd.f32 %v345, %v431
        %433 = vmatmul.f32.gmra.mxu0 %v389
        %v434 = vpop.f32.mrf.mxu0
        %v435 = vadd.f32 %v350, %v434
        %436 = vmatmul.f32.gmra.mxu0 %v392
        %v437 = vpop.f32.mrf.mxu0
        %v438 = vadd.f32 %v355, %v437
        %439 = vmatmul.f32.gmra.mxu0 %v395
        %v440 = vpop.f32.mrf.mxu0
        %v441 = vadd.f32 %v360, %v440
        %442 = vmatmul.f32.gmra.mxu0 %v398
        %v443 = vpop.f32.mrf.mxu0
        %v444 = vadd.f32 %v365, %v443
        %445 = vmatmul.f32.gmra.mxu0 %v401
        %v446 = vpop.f32.mrf.mxu0
        %v447 = vadd.f32 %v370, %v446
        %448 = vmatmul.f32.gmra.mxu0 %v404
        %v449 = vpop.f32.mrf.mxu0
        %v450 = vadd.f32 %v375, %v449
        %451 = vdwg.mxu0
        %452 = vmatpush.msra.mxu0 0.0
        %453 = vmatpush.msra.mxu0 0.0
        %454 = vmatpush.msra.mxu0 0.0
        %455 = vmatpush.msra.mxu0 0.0
        %456 = vmatpush.msra.mxu0 0.0
        %457 = vmatpush.msra.mxu0 0.0
        %458 = vmatpush.msra.mxu0 0.0
        %459 = vmatpush.msra.mxu0 0.0
        %460 = vmatpush.msra.mxu0 0.0
        %461 = vmatpush.msra.mxu0 0.0
        %462 = vmatpush.msra.mxu0 0.0
        %463 = vmatpush.msra.mxu0 0.0
        %464 = vmatpush.msra.mxu0 0.0
        %465 = vmatpush.msra.mxu0 0.0
        %466 = vmatpush.msra.mxu0 0.0
        %467 = vmatpush.msra.mxu0 %v409
        %468 = vmatmul.f32.gmra.mxu0 %v383
        %v469 = vpop.f32.mrf.mxu0
        %v470 = vadd.f32 %v340, %v469
        %471 = vmatmul.f32.gmra.mxu0 %v386
        %v472 = vpop.f32.mrf.mxu0
        %v473 = vadd.f32 %v345, %v472
        %474 = vmatmul.f32.gmra.mxu0 %v389
        %v475 = vpop.f32.mrf.mxu0
        %v476 = vadd.f32 %v350, %v475
        %477 = vmatmul.f32.gmra.mxu0 %v392
        %v478 = vpop.f32.mrf.mxu0
        %v479 = vadd.f32 %v355, %v478
        %480 = vmatmul.f32.gmra.mxu0 %v395
        %v481 = vpop.f32.mrf.mxu0
        %v482 = vadd.f32 %v360, %v481
        %483 = vmatmul.f32.gmra.mxu0 %v398
        %v484 = vpop.f32.mrf.mxu0
        %v485 = vadd.f32 %v365, %v484
        %486 = vmatmul.f32.gmra.mxu0 %v401
        %v487 = vpop.f32.mrf.mxu0
        %v488 = vadd.f32 %v370, %v487
        %489 = vmatmul.f32.gmra.mxu0 %v404
        %v490 = vpop.f32.mrf.mxu0
        %v491 = vadd.f32 %v375, %v490
        %492 = vdwg.mxu0
        %v493 = vand.u32 2147483647, %v429
        %vm494 = vcmp.le.f32.partialorder %v493, 0.7853982
        %vm495 = vcmp.lt.s32.totalorder %v429, 0
        %v496 = vand.u32 %v429, 2139095040
        %v497 = vshrl.u32 %v496, 23
        %v498 = vsub.s32 %v497, 127
        %v499 = vand.u32 2147483647, %v429
        %v500 = vand.u32 %v499, 8388607
        %v501 = vor.u32 %v500, 8388608
        %v502 = vsub.s32 0, %v501
        %v503 = vadd.s32 %v498, 1
        %vm504 = vcmp.gt.s32.totalorder %v503, 0
        %v505 = vsel %vm504, %v503, 0
        %v506 = vshrl.u32 %v505, 5
        %v507 = vand.u32 %v505, 31
        %v508 = vsub.s32 32, %v507
        %v509 = vshrl.u32 683565275, %v508
        %v510 = vshll.u32 683565275, %v507
        %v511 = vshrl.u32 2475754826, %v508
        %v512 = vor.u32 %v510, %v511
        %v513 = vshll.u32 2475754826, %v507
        %v514 = vshrl.u32 2131351028, %v508
        %v515 = vor.u32 %v513, %v514
        %v516 = vshll.u32 2131351028, %v507
        %v517 = vshrl.u32 2102212464, %v508
        %v518 = vor.u32 %v516, %v517
        %v519 = vshll.u32 2102212464, %v507
        %v520 = vshrl.u32 920167782, %v508
        %v521 = vor.u32 %v519, %v520
        %v522 = vshll.u32 920167782, %v507
        %v523 = vshrl.u32 1326507024, %v508
        %v524 = vor.u32 %v522, %v523
        %vm525 = vcmp.lt.s32.totalorder %v506, 1
        %vm526 = vcmp.lt.s32.totalorder %v506, 2
        %vm527 = vcmp.lt.s32.totalorder %v506, 3
        %vm528 = vcmp.lt.s32.totalorder %v506, 4
        %v529 = vsel %vm525, %v509, %v512
        %v530 = vsel %vm528, %v518, 2102212464
        %v531 = vsel %vm527, %v515, %v530
        %v532 = vsel %vm526, %v529, %v531
        %v533 = vsel %vm525, %v512, %v515
        %v534 = vsel %vm528, %v521, 920167782
        %v535 = vsel %vm527, %v518, %v534
        %v536 = vsel %vm526, %v533, %v535
        %v537 = vsel %vm525, %v515, %v518
        %v538 = vsel %vm528, %v524, 1326507024
        %v539 = vsel %vm527, %v521, %v538
        %v540 = vsel %vm526, %v537, %v539
        %v541 = vshll.u32 %v501, 8
        %v542 = vand.u32 %v541, 65535
        %v543 = vshrl.u32 %v541, 16
        %v544 = vand.u32 %v540, 65535
        %v545 = vshrl.u32 %v540, 16
        %v546 = vmul.u32 %v542, %v544
        %v547 = vmul.u32 %v542, %v545
        %v548 = vmul.u32 %v543, %v544
        %v549 = vmul.u32 %v543, %v545
        %v550 = vshll.u32 %v547, 16
        %v551 = vshrl.u32 %v547, 16
        %v552 = vshll.u32 %v548, 16
        %v553 = vshrl.u32 %v548, 16
        %vm554 = vc.u32 %v546, %v550
        %v555 = vsel %vm554, 1, 0
        %v556 = vadd.s32 %v546, %v550
        %v557 = vadd.s32 %v549, %v555
        %vm558 = vc.u32 %v556, %v552
        %v559 = vsel %vm558, 1, 0
        %v560 = vadd.s32 %v556, %v552
        %v561 = vadd.s32 %v557, %v559
        %v562 = vadd.s32 %v561, %v551
        %v563 = vadd.s32 %v562, %v553
        %v564 = vand.u32 %v541, 65535
        %v565 = vshrl.u32 %v541, 16
        %v566 = vand.u32 %v536, 65535
        %v567 = vshrl.u32 %v536, 16
        %v568 = vmul.u32 %v564, %v566
        %v569 = vmul.u32 %v564, %v567
        %v570 = vmul.u32 %v565, %v566
        %v571 = vmul.u32 %v565, %v567
        %v572 = vshll.u32 %v569, 16
        %v573 = vshrl.u32 %v569, 16
        %v574 = vshll.u32 %v570, 16
        %v575 = vshrl.u32 %v570, 16
        %vm576 = vc.u32 %v568, %v572
        %v577 = vsel %vm576, 1, 0
        %v578 = vadd.s32 %v568, %v572
        %v579 = vadd.s32 %v571, %v577
        %vm580 = vc.u32 %v578, %v574
        %v581 = vsel %vm580, 1, 0
        %v582 = vadd.s32 %v578, %v574
        %v583 = vadd.s32 %v579, %v581
        %v584 = vadd.s32 %v583, %v573
        %v585 = vadd.s32 %v584, %v575
        %v586 = vmul.u32 %v541, %v532
        %v587 = vadd.s32 %v563, %v582
        %vm588 = vc.u32 %v563, %v582
        %v589 = vadd.s32 %v585, 1
        %v590 = vsel %vm588, %v589, %v585
        %v591 = vadd.s32 %v586, %v590
        %v592 = vadd.s32 %v591, 536870912
        %v593 = vshrl.u32 %v592, 30
        %v594 = vshll.u32 %v593, 30
        %v595 = vsub.s32 %v591, %v594
        %vm596 = vcmp.lt.s32.totalorder %v595, 0
        %v597 = vsub.s32 0, %v595
        %v598 = vsel %vm596, %v597, %v595
        %v599 = vclz %v598
        %v600 = vsub.s32 %v599, 2
        %vm601 = vcmp.gt.s32.totalorder 0, %v600
        %v602 = vsel %vm601, 0, %v600
        %v603 = vsub.s32 32, %v602
        %v604 = vshll.u32 %v595, %v602
        %v605 = vshrl.u32 %v587, %v603
        %v606 = vor.u32 %v604, %v605
        %v607 = vsub.s32 4294967266, %v602
        %v608 = vadd.s32 %v607, 127
        %v609 = vshll.u32 %v608, 23
        %v610 = vor.u32 4788187, %v609
        %v611 = vand.u32 2147483647, %v610
        %v613 = vcvt.s32.f32 %v606
        %v614 = vmul.f32 %v613, %v611
        %v615 = vxor.u32 %v614, 2147483648
        %v616 = vsel %vm495, %v615, %v614
        %v617 = vsub.s32 4, %v593
        %v618 = vsel %vm495, %v617, %v593
        %v619 = vsel %vm494, %v429, %v616
        %v620 = vsel %vm494, 0, %v618
        %v621 = vmul.f32 %v619, %v619
        %v622 = vmul.f32 %v621, -0.001358992
        %v623 = vadd.f32 %v622, 0.041655596
        %v624 = vmul.f32 %v621, %v623
        %v625 = vadd.f32 %v624, -0.4999988
        %v626 = vmul.f32 %v621, %v625
        %v627 = vadd.f32 1.0, %v626
        %v628 = vmul.f32 %v619, %v619
        %v629 = vmul.f32 %v628, -0.00019511016
        %v630 = vadd.f32 %v629, 0.008332121
        %v631 = vmul.f32 %v628, %v630
        %v632 = vadd.f32 %v631, -0.16666654
        %v633 = vmul.f32 %v628, %v632
        %v634 = vadd.f32 %v633, 1.0
        %v635 = vmul.f32 %v634, %v619
        %vm636 = vweird.f32 %v429
        %v637 = vadd.s32 %v620, 3
        %v638 = vand.u32 %v637, 3
        %vm639 = vcmp.lt.s32.totalorder %v638, 2
        %vm640 = vcmp.eq.s32.totalorder %v638, 0
        %v641 = vxor.u32 %v635, 2147483648
        %v642 = vsel %vm640, %v627, %v641
        %vm643 = vcmp.eq.s32.totalorder %v638, 2
        %v644 = vxor.u32 %v627, 2147483648
        %v645 = vsel %vm643, %v644, %v635
        %v646 = vsel %vm639, %v642, %v645
        %v647 = vsel %vm636, nan, %v646
        %v648 = vand.u32 2147483647, %v470
        %vm649 = vcmp.le.f32.partialorder %v648, 0.7853982
        %vm650 = vcmp.lt.s32.totalorder %v470, 0
        %v651 = vand.u32 %v470, 2139095040
        %v652 = vshrl.u32 %v651, 23
        %v653 = vsub.s32 %v652, 127
        %v654 = vand.u32 2147483647, %v470
        %v655 = vand.u32 %v654, 8388607
        %v656 = vor.u32 %v655, 8388608
        %v657 = vsub.s32 0, %v656
        %v658 = vadd.s32 %v653, 1
        %vm659 = vcmp.gt.s32.totalorder %v658, 0
        %v660 = vsel %vm659, %v658, 0
        %v661 = vshrl.u32 %v660, 5
        %v662 = vand.u32 %v660, 31
        %v663 = vsub.s32 32, %v662
        %v664 = vshrl.u32 683565275, %v663
        %v665 = vshll.u32 683565275, %v662
        %v666 = vshrl.u32 2475754826, %v663
        %v667 = vor.u32 %v665, %v666
        %v668 = vshll.u32 2475754826, %v662
        %v669 = vshrl.u32 2131351028, %v663
        %v670 = vor.u32 %v668, %v669
        %v671 = vshll.u32 2131351028, %v662
        %v672 = vshrl.u32 2102212464, %v663
        %v673 = vor.u32 %v671, %v672
        %v674 = vshll.u32 2102212464, %v662
        %v675 = vshrl.u32 920167782, %v663
        %v676 = vor.u32 %v674, %v675
        %v677 = vshll.u32 920167782, %v662
        %v678 = vshrl.u32 1326507024, %v663
        %v679 = vor.u32 %v677, %v678
        %vm680 = vcmp.lt.s32.totalorder %v661, 1
        %vm681 = vcmp.lt.s32.totalorder %v661, 2
        %vm682 = vcmp.lt.s32.totalorder %v661, 3
        %vm683 = vcmp.lt.s32.totalorder %v661, 4
        %v684 = vsel %vm680, %v664, %v667
        %v685 = vsel %vm683, %v673, 2102212464
        %v686 = vsel %vm682, %v670, %v685
        %v687 = vsel %vm681, %v684, %v686
        %v688 = vsel %vm680, %v667, %v670
        %v689 = vsel %vm683, %v676, 920167782
        %v690 = vsel %vm682, %v673, %v689
        %v691 = vsel %vm681, %v688, %v690
        %v692 = vsel %vm680, %v670, %v673
        %v693 = vsel %vm683, %v679, 1326507024
        %v694 = vsel %vm682, %v676, %v693
        %v695 = vsel %vm681, %v692, %v694
        %v696 = vshll.u32 %v656, 8
        %v697 = vand.u32 %v696, 65535
        %v698 = vshrl.u32 %v696, 16
        %v699 = vand.u32 %v695, 65535
        %v700 = vshrl.u32 %v695, 16
        %v701 = vmul.u32 %v697, %v699
        %v702 = vmul.u32 %v697, %v700
        %v703 = vmul.u32 %v698, %v699
        %v704 = vmul.u32 %v698, %v700
        %v705 = vshll.u32 %v702, 16
        %v706 = vshrl.u32 %v702, 16
        %v707 = vshll.u32 %v703, 16
        %v708 = vshrl.u32 %v703, 16
        %vm709 = vc.u32 %v701, %v705
        %v710 = vsel %vm709, 1, 0
        %v711 = vadd.s32 %v701, %v705
        %v712 = vadd.s32 %v704, %v710
        %vm713 = vc.u32 %v711, %v707
        %v714 = vsel %vm713, 1, 0
        %v715 = vadd.s32 %v711, %v707
        %v716 = vadd.s32 %v712, %v714
        %v717 = vadd.s32 %v716, %v706
        %v718 = vadd.s32 %v717, %v708
        %v719 = vand.u32 %v696, 65535
        %v720 = vshrl.u32 %v696, 16
        %v721 = vand.u32 %v691, 65535
        %v722 = vshrl.u32 %v691, 16
        %v723 = vmul.u32 %v719, %v721
        %v724 = vmul.u32 %v719, %v722
        %v725 = vmul.u32 %v720, %v721
        %v726 = vmul.u32 %v720, %v722
        %v727 = vshll.u32 %v724, 16
        %v728 = vshrl.u32 %v724, 16
        %v729 = vshll.u32 %v725, 16
        %v730 = vshrl.u32 %v725, 16
        %vm731 = vc.u32 %v723, %v727
        %v732 = vsel %vm731, 1, 0
        %v733 = vadd.s32 %v723, %v727
        %v734 = vadd.s32 %v726, %v732
        %vm735 = vc.u32 %v733, %v729
        %v736 = vsel %vm735, 1, 0
        %v737 = vadd.s32 %v733, %v729
        %v738 = vadd.s32 %v734, %v736
        %v739 = vadd.s32 %v738, %v728
        %v740 = vadd.s32 %v739, %v730
        %v741 = vmul.u32 %v696, %v687
        %v742 = vadd.s32 %v718, %v737
        %vm743 = vc.u32 %v718, %v737
        %v744 = vadd.s32 %v740, 1
        %v745 = vsel %vm743, %v744, %v740
        %v746 = vadd.s32 %v741, %v745
        %v747 = vadd.s32 %v746, 536870912
        %v748 = vshrl.u32 %v747, 30
        %v749 = vshll.u32 %v748, 30
        %v750 = vsub.s32 %v746, %v749
        %vm751 = vcmp.lt.s32.totalorder %v750, 0
        %v752 = vsub.s32 0, %v750
        %v753 = vsel %vm751, %v752, %v750
        %v754 = vclz %v753
        %v755 = vsub.s32 %v754, 2
        %vm756 = vcmp.gt.s32.totalorder 0, %v755
        %v757 = vsel %vm756, 0, %v755
        %v758 = vsub.s32 32, %v757
        %v759 = vshll.u32 %v750, %v757
        %v760 = vshrl.u32 %v742, %v758
        %v761 = vor.u32 %v759, %v760
        %v762 = vsub.s32 4294967266, %v757
        %v763 = vadd.s32 %v762, 127
        %v764 = vshll.u32 %v763, 23
        %v765 = vor.u32 4788187, %v764
        %v766 = vand.u32 2147483647, %v765
        %v768 = vcvt.s32.f32 %v761
        %v769 = vmul.f32 %v768, %v766
        %v770 = vxor.u32 %v769, 2147483648
        %v771 = vsel %vm650, %v770, %v769
        %v772 = vsub.s32 4, %v748
        %v773 = vsel %vm650, %v772, %v748
        %v774 = vsel %vm649, %v470, %v771
        %v775 = vsel %vm649, 0, %v773
        %v776 = vmul.f32 %v774, %v774
        %v777 = vmul.f32 %v776, -0.001358992
        %v778 = vadd.f32 %v777, 0.041655596
        %v779 = vmul.f32 %v776, %v778
        %v780 = vadd.f32 %v779, -0.4999988
        %v781 = vmul.f32 %v776, %v780
        %v782 = vadd.f32 1.0, %v781
        %v783 = vmul.f32 %v774, %v774
        %v784 = vmul.f32 %v783, -0.00019511016
        %v785 = vadd.f32 %v784, 0.008332121
        %v786 = vmul.f32 %v783, %v785
        %v787 = vadd.f32 %v786, -0.16666654
        %v788 = vmul.f32 %v783, %v787
        %v789 = vadd.f32 %v788, 1.0
        %v790 = vmul.f32 %v789, %v774
        %vm791 = vweird.f32 %v470
        %v792 = vadd.s32 %v775, 3
        %v793 = vand.u32 %v792, 3
        %vm794 = vcmp.lt.s32.totalorder %v793, 2
        %vm795 = vcmp.eq.s32.totalorder %v793, 0
        %v796 = vxor.u32 %v790, 2147483648
        %v797 = vsel %vm795, %v782, %v796
        %vm798 = vcmp.eq.s32.totalorder %v793, 2
        %v799 = vxor.u32 %v782, 2147483648
        %v800 = vsel %vm798, %v799, %v790
        %v801 = vsel %vm794, %v797, %v800
        %v802 = vsel %vm791, nan, %v801
        %v803 = vand.u32 2147483647, %v432
        %vm804 = vcmp.le.f32.partialorder %v803, 0.7853982
        %vm805 = vcmp.lt.s32.totalorder %v432, 0
        %v806 = vand.u32 %v432, 2139095040
        %v807 = vshrl.u32 %v806, 23
        %v808 = vsub.s32 %v807, 127
        %v809 = vand.u32 2147483647, %v432
        %v810 = vand.u32 %v809, 8388607
        %v811 = vor.u32 %v810, 8388608
        %v812 = vsub.s32 0, %v811
        %v813 = vadd.s32 %v808, 1
        %vm814 = vcmp.gt.s32.totalorder %v813, 0
        %v815 = vsel %vm814, %v813, 0
        %v816 = vshrl.u32 %v815, 5
        %v817 = vand.u32 %v815, 31
        %v818 = vsub.s32 32, %v817
        %v819 = vshrl.u32 683565275, %v818
        %v820 = vshll.u32 683565275, %v817
        %v821 = vshrl.u32 2475754826, %v818
        %v822 = vor.u32 %v820, %v821
        %v823 = vshll.u32 2475754826, %v817
        %v824 = vshrl.u32 2131351028, %v818
        %v825 = vor.u32 %v823, %v824
        %v826 = vshll.u32 2131351028, %v817
        %v827 = vshrl.u32 2102212464, %v818
        %v828 = vor.u32 %v826, %v827
        %v829 = vshll.u32 2102212464, %v817
        %v830 = vshrl.u32 920167782, %v818
        %v831 = vor.u32 %v829, %v830
        %v832 = vshll.u32 920167782, %v817
        %v833 = vshrl.u32 1326507024, %v818
        %v834 = vor.u32 %v832, %v833
        %vm835 = vcmp.lt.s32.totalorder %v816, 1
        %vm836 = vcmp.lt.s32.totalorder %v816, 2
        %vm837 = vcmp.lt.s32.totalorder %v816, 3
        %vm838 = vcmp.lt.s32.totalorder %v816, 4
        %v839 = vsel %vm835, %v819, %v822
        %v840 = vsel %vm838, %v828, 2102212464
        %v841 = vsel %vm837, %v825, %v840
        %v842 = vsel %vm836, %v839, %v841
        %v843 = vsel %vm835, %v822, %v825
        %v844 = vsel %vm838, %v831, 920167782
        %v845 = vsel %vm837, %v828, %v844
        %v846 = vsel %vm836, %v843, %v845
        %v847 = vsel %vm835, %v825, %v828
        %v848 = vsel %vm838, %v834, 1326507024
        %v849 = vsel %vm837, %v831, %v848
        %v850 = vsel %vm836, %v847, %v849
        %v851 = vshll.u32 %v811, 8
        %v852 = vand.u32 %v851, 65535
        %v853 = vshrl.u32 %v851, 16
        %v854 = vand.u32 %v850, 65535
        %v855 = vshrl.u32 %v850, 16
        %v856 = vmul.u32 %v852, %v854
        %v857 = vmul.u32 %v852, %v855
        %v858 = vmul.u32 %v853, %v854
        %v859 = vmul.u32 %v853, %v855
        %v860 = vshll.u32 %v857, 16
        %v861 = vshrl.u32 %v857, 16
        %v862 = vshll.u32 %v858, 16
        %v863 = vshrl.u32 %v858, 16
        %vm864 = vc.u32 %v856, %v860
        %v865 = vsel %vm864, 1, 0
        %v866 = vadd.s32 %v856, %v860
        %v867 = vadd.s32 %v859, %v865
        %vm868 = vc.u32 %v866, %v862
        %v869 = vsel %vm868, 1, 0
        %v870 = vadd.s32 %v866, %v862
        %v871 = vadd.s32 %v867, %v869
        %v872 = vadd.s32 %v871, %v861
        %v873 = vadd.s32 %v872, %v863
        %v874 = vand.u32 %v851, 65535
        %v875 = vshrl.u32 %v851, 16
        %v876 = vand.u32 %v846, 65535
        %v877 = vshrl.u32 %v846, 16
        %v878 = vmul.u32 %v874, %v876
        %v879 = vmul.u32 %v874, %v877
        %v880 = vmul.u32 %v875, %v876
        %v881 = vmul.u32 %v875, %v877
        %v882 = vshll.u32 %v879, 16
        %v883 = vshrl.u32 %v879, 16
        %v884 = vshll.u32 %v880, 16
        %v885 = vshrl.u32 %v880, 16
        %vm886 = vc.u32 %v878, %v882
        %v887 = vsel %vm886, 1, 0
        %v888 = vadd.s32 %v878, %v882
        %v889 = vadd.s32 %v881, %v887
        %vm890 = vc.u32 %v888, %v884
        %v891 = vsel %vm890, 1, 0
        %v892 = vadd.s32 %v888, %v884
        %v893 = vadd.s32 %v889, %v891
        %v894 = vadd.s32 %v893, %v883
        %v895 = vadd.s32 %v894, %v885
        %v896 = vmul.u32 %v851, %v842
        %v897 = vadd.s32 %v873, %v892
        %vm898 = vc.u32 %v873, %v892
        %v899 = vadd.s32 %v895, 1
        %v900 = vsel %vm898, %v899, %v895
        %v901 = vadd.s32 %v896, %v900
        %v902 = vadd.s32 %v901, 536870912
        %v903 = vshrl.u32 %v902, 30
        %v904 = vshll.u32 %v903, 30
        %v905 = vsub.s32 %v901, %v904
        %vm906 = vcmp.lt.s32.totalorder %v905, 0
        %v907 = vsub.s32 0, %v905
        %v908 = vsel %vm906, %v907, %v905
        %v909 = vclz %v908
        %v910 = vsub.s32 %v909, 2
        %vm911 = vcmp.gt.s32.totalorder 0, %v910
        %v912 = vsel %vm911, 0, %v910
        %v913 = vsub.s32 32, %v912
        %v914 = vshll.u32 %v905, %v912
        %v915 = vshrl.u32 %v897, %v913
        %v916 = vor.u32 %v914, %v915
        %v917 = vsub.s32 4294967266, %v912
        %v918 = vadd.s32 %v917, 127
        %v919 = vshll.u32 %v918, 23
        %v920 = vor.u32 4788187, %v919
        %v921 = vand.u32 2147483647, %v920
        %v923 = vcvt.s32.f32 %v916
        %v924 = vmul.f32 %v923, %v921
        %v925 = vxor.u32 %v924, 2147483648
        %v926 = vsel %vm805, %v925, %v924
        %v927 = vsub.s32 4, %v903
        %v928 = vsel %vm805, %v927, %v903
        %v929 = vsel %vm804, %v432, %v926
        %v930 = vsel %vm804, 0, %v928
        %v931 = vmul.f32 %v929, %v929
        %v932 = vmul.f32 %v931, -0.001358992
        %v933 = vadd.f32 %v932, 0.041655596
        %v934 = vmul.f32 %v931, %v933
        %v935 = vadd.f32 %v934, -0.4999988
        %v936 = vmul.f32 %v931, %v935
        %v937 = vadd.f32 1.0, %v936
        %v938 = vmul.f32 %v929, %v929
        %v939 = vmul.f32 %v938, -0.00019511016
        %v940 = vadd.f32 %v939, 0.008332121
        %v941 = vmul.f32 %v938, %v940
        %v942 = vadd.f32 %v941, -0.16666654
        %v943 = vmul.f32 %v938, %v942
        %v944 = vadd.f32 %v943, 1.0
        %v945 = vmul.f32 %v944, %v929
        %vm946 = vweird.f32 %v432
        %v947 = vadd.s32 %v930, 3
        %v948 = vand.u32 %v947, 3
        %vm949 = vcmp.lt.s32.totalorder %v948, 2
        %vm950 = vcmp.eq.s32.totalorder %v948, 0
        %v951 = vxor.u32 %v945, 2147483648
        %v952 = vsel %vm950, %v937, %v951
        %vm953 = vcmp.eq.s32.totalorder %v948, 2
        %v954 = vxor.u32 %v937, 2147483648
        %v955 = vsel %vm953, %v954, %v945
        %v956 = vsel %vm949, %v952, %v955
        %v957 = vsel %vm946, nan, %v956
        %v958 = vand.u32 2147483647, %v473
        %vm959 = vcmp.le.f32.partialorder %v958, 0.7853982
        %vm960 = vcmp.lt.s32.totalorder %v473, 0
        %v961 = vand.u32 %v473, 2139095040
        %v962 = vshrl.u32 %v961, 23
        %v963 = vsub.s32 %v962, 127
        %v964 = vand.u32 2147483647, %v473
        %v965 = vand.u32 %v964, 8388607
        %v966 = vor.u32 %v965, 8388608
        %v967 = vsub.s32 0, %v966
        %v968 = vadd.s32 %v963, 1
        %vm969 = vcmp.gt.s32.totalorder %v968, 0
        %v970 = vsel %vm969, %v968, 0
        %v971 = vshrl.u32 %v970, 5
        %v972 = vand.u32 %v970, 31
        %v973 = vsub.s32 32, %v972
        %v974 = vshrl.u32 683565275, %v973
        %v975 = vshll.u32 683565275, %v972
        %v976 = vshrl.u32 2475754826, %v973
        %v977 = vor.u32 %v975, %v976
        %v978 = vshll.u32 2475754826, %v972
        %v979 = vshrl.u32 2131351028, %v973
        %v980 = vor.u32 %v978, %v979
        %v981 = vshll.u32 2131351028, %v972
        %v982 = vshrl.u32 2102212464, %v973
        %v983 = vor.u32 %v981, %v982
        %v984 = vshll.u32 2102212464, %v972
        %v985 = vshrl.u32 920167782, %v973
        %v986 = vor.u32 %v984, %v985
        %v987 = vshll.u32 920167782, %v972
        %v988 = vshrl.u32 1326507024, %v973
        %v989 = vor.u32 %v987, %v988
        %vm990 = vcmp.lt.s32.totalorder %v971, 1
        %vm991 = vcmp.lt.s32.totalorder %v971, 2
        %vm992 = vcmp.lt.s32.totalorder %v971, 3
        %vm993 = vcmp.lt.s32.totalorder %v971, 4
        %v994 = vsel %vm990, %v974, %v977
        %v995 = vsel %vm993, %v983, 2102212464
        %v996 = vsel %vm992, %v980, %v995
        %v997 = vsel %vm991, %v994, %v996
        %v998 = vsel %vm990, %v977, %v980
        %v999 = vsel %vm993, %v986, 920167782
        %v1000 = vsel %vm992, %v983, %v999
        %v1001 = vsel %vm991, %v998, %v1000
        %v1002 = vsel %vm990, %v980, %v983
        %v1003 = vsel %vm993, %v989, 1326507024
        %v1004 = vsel %vm992, %v986, %v1003
        %v1005 = vsel %vm991, %v1002, %v1004
        %v1006 = vshll.u32 %v966, 8
        %v1007 = vand.u32 %v1006, 65535
        %v1008 = vshrl.u32 %v1006, 16
        %v1009 = vand.u32 %v1005, 65535
        %v1010 = vshrl.u32 %v1005, 16
        %v1011 = vmul.u32 %v1007, %v1009
        %v1012 = vmul.u32 %v1007, %v1010
        %v1013 = vmul.u32 %v1008, %v1009
        %v1014 = vmul.u32 %v1008, %v1010
        %v1015 = vshll.u32 %v1012, 16
        %v1016 = vshrl.u32 %v1012, 16
        %v1017 = vshll.u32 %v1013, 16
        %v1018 = vshrl.u32 %v1013, 16
        %vm1019 = vc.u32 %v1011, %v1015
        %v1020 = vsel %vm1019, 1, 0
        %v1021 = vadd.s32 %v1011, %v1015
        %v1022 = vadd.s32 %v1014, %v1020
        %vm1023 = vc.u32 %v1021, %v1017
        %v1024 = vsel %vm1023, 1, 0
        %v1025 = vadd.s32 %v1021, %v1017
        %v1026 = vadd.s32 %v1022, %v1024
        %v1027 = vadd.s32 %v1026, %v1016
        %v1028 = vadd.s32 %v1027, %v1018
        %v1029 = vand.u32 %v1006, 65535
        %v1030 = vshrl.u32 %v1006, 16
        %v1031 = vand.u32 %v1001, 65535
        %v1032 = vshrl.u32 %v1001, 16
        %v1033 = vmul.u32 %v1029, %v1031
        %v1034 = vmul.u32 %v1029, %v1032
        %v1035 = vmul.u32 %v1030, %v1031
        %v1036 = vmul.u32 %v1030, %v1032
        %v1037 = vshll.u32 %v1034, 16
        %v1038 = vshrl.u32 %v1034, 16
        %v1039 = vshll.u32 %v1035, 16
        %v1040 = vshrl.u32 %v1035, 16
        %vm1041 = vc.u32 %v1033, %v1037
        %v1042 = vsel %vm1041, 1, 0
        %v1043 = vadd.s32 %v1033, %v1037
        %v1044 = vadd.s32 %v1036, %v1042
        %vm1045 = vc.u32 %v1043, %v1039
        %v1046 = vsel %vm1045, 1, 0
        %v1047 = vadd.s32 %v1043, %v1039
        %v1048 = vadd.s32 %v1044, %v1046
        %v1049 = vadd.s32 %v1048, %v1038
        %v1050 = vadd.s32 %v1049, %v1040
        %v1051 = vmul.u32 %v1006, %v997
        %v1052 = vadd.s32 %v1028, %v1047
        %vm1053 = vc.u32 %v1028, %v1047
        %v1054 = vadd.s32 %v1050, 1
        %v1055 = vsel %vm1053, %v1054, %v1050
        %v1056 = vadd.s32 %v1051, %v1055
        %v1057 = vadd.s32 %v1056, 536870912
        %v1058 = vshrl.u32 %v1057, 30
        %v1059 = vshll.u32 %v1058, 30
        %v1060 = vsub.s32 %v1056, %v1059
        %vm1061 = vcmp.lt.s32.totalorder %v1060, 0
        %v1062 = vsub.s32 0, %v1060
        %v1063 = vsel %vm1061, %v1062, %v1060
        %v1064 = vclz %v1063
        %v1065 = vsub.s32 %v1064, 2
        %vm1066 = vcmp.gt.s32.totalorder 0, %v1065
        %v1067 = vsel %vm1066, 0, %v1065
        %v1068 = vsub.s32 32, %v1067
        %v1069 = vshll.u32 %v1060, %v1067
        %v1070 = vshrl.u32 %v1052, %v1068
        %v1071 = vor.u32 %v1069, %v1070
        %v1072 = vsub.s32 4294967266, %v1067
        %v1073 = vadd.s32 %v1072, 127
        %v1074 = vshll.u32 %v1073, 23
        %v1075 = vor.u32 4788187, %v1074
        %v1076 = vand.u32 2147483647, %v1075
        %v1078 = vcvt.s32.f32 %v1071
        %v1079 = vmul.f32 %v1078, %v1076
        %v1080 = vxor.u32 %v1079, 2147483648
        %v1081 = vsel %vm960, %v1080, %v1079
        %v1082 = vsub.s32 4, %v1058
        %v1083 = vsel %vm960, %v1082, %v1058
        %v1084 = vsel %vm959, %v473, %v1081
        %v1085 = vsel %vm959, 0, %v1083
        %v1086 = vmul.f32 %v1084, %v1084
        %v1087 = vmul.f32 %v1086, -0.001358992
        %v1088 = vadd.f32 %v1087, 0.041655596
        %v1089 = vmul.f32 %v1086, %v1088
        %v1090 = vadd.f32 %v1089, -0.4999988
        %v1091 = vmul.f32 %v1086, %v1090
        %v1092 = vadd.f32 1.0, %v1091
        %v1093 = vmul.f32 %v1084, %v1084
        %v1094 = vmul.f32 %v1093, -0.00019511016
        %v1095 = vadd.f32 %v1094, 0.008332121
        %v1096 = vmul.f32 %v1093, %v1095
        %v1097 = vadd.f32 %v1096, -0.16666654
        %v1098 = vmul.f32 %v1093, %v1097
        %v1099 = vadd.f32 %v1098, 1.0
        %v1100 = vmul.f32 %v1099, %v1084
        %vm1101 = vweird.f32 %v473
        %v1102 = vadd.s32 %v1085, 3
        %v1103 = vand.u32 %v1102, 3
        %vm1104 = vcmp.lt.s32.totalorder %v1103, 2
        %vm1105 = vcmp.eq.s32.totalorder %v1103, 0
        %v1106 = vxor.u32 %v1100, 2147483648
        %v1107 = vsel %vm1105, %v1092, %v1106
        %vm1108 = vcmp.eq.s32.totalorder %v1103, 2
        %v1109 = vxor.u32 %v1092, 2147483648
        %v1110 = vsel %vm1108, %v1109, %v1100
        %v1111 = vsel %vm1104, %v1107, %v1110
        %v1112 = vsel %vm1101, nan, %v1111
        %v1113 = vand.u32 2147483647, %v435
        %vm1114 = vcmp.le.f32.partialorder %v1113, 0.7853982
        %vm1115 = vcmp.lt.s32.totalorder %v435, 0
        %v1116 = vand.u32 %v435, 2139095040
        %v1117 = vshrl.u32 %v1116, 23
        %v1118 = vsub.s32 %v1117, 127
        %v1119 = vand.u32 2147483647, %v435
        %v1120 = vand.u32 %v1119, 8388607
        %v1121 = vor.u32 %v1120, 8388608
        %v1122 = vsub.s32 0, %v1121
        %v1123 = vadd.s32 %v1118, 1
        %vm1124 = vcmp.gt.s32.totalorder %v1123, 0
        %v1125 = vsel %vm1124, %v1123, 0
        %v1126 = vshrl.u32 %v1125, 5
        %v1127 = vand.u32 %v1125, 31
        %v1128 = vsub.s32 32, %v1127
        %v1129 = vshrl.u32 683565275, %v1128
        %v1130 = vshll.u32 683565275, %v1127
        %v1131 = vshrl.u32 2475754826, %v1128
        %v1132 = vor.u32 %v1130, %v1131
        %v1133 = vshll.u32 2475754826, %v1127
        %v1134 = vshrl.u32 2131351028, %v1128
        %v1135 = vor.u32 %v1133, %v1134
        %v1136 = vshll.u32 2131351028, %v1127
        %v1137 = vshrl.u32 2102212464, %v1128
        %v1138 = vor.u32 %v1136, %v1137
        %v1139 = vshll.u32 2102212464, %v1127
        %v1140 = vshrl.u32 920167782, %v1128
        %v1141 = vor.u32 %v1139, %v1140
        %v1142 = vshll.u32 920167782, %v1127
        %v1143 = vshrl.u32 1326507024, %v1128
        %v1144 = vor.u32 %v1142, %v1143
        %vm1145 = vcmp.lt.s32.totalorder %v1126, 1
        %vm1146 = vcmp.lt.s32.totalorder %v1126, 2
        %vm1147 = vcmp.lt.s32.totalorder %v1126, 3
        %vm1148 = vcmp.lt.s32.totalorder %v1126, 4
        %v1149 = vsel %vm1145, %v1129, %v1132
        %v1150 = vsel %vm1148, %v1138, 2102212464
        %v1151 = vsel %vm1147, %v1135, %v1150
        %v1152 = vsel %vm1146, %v1149, %v1151
        %v1153 = vsel %vm1145, %v1132, %v1135
        %v1154 = vsel %vm1148, %v1141, 920167782
        %v1155 = vsel %vm1147, %v1138, %v1154
        %v1156 = vsel %vm1146, %v1153, %v1155
        %v1157 = vsel %vm1145, %v1135, %v1138
        %v1158 = vsel %vm1148, %v1144, 1326507024
        %v1159 = vsel %vm1147, %v1141, %v1158
        %v1160 = vsel %vm1146, %v1157, %v1159
        %v1161 = vshll.u32 %v1121, 8
        %v1162 = vand.u32 %v1161, 65535
        %v1163 = vshrl.u32 %v1161, 16
        %v1164 = vand.u32 %v1160, 65535
        %v1165 = vshrl.u32 %v1160, 16
        %v1166 = vmul.u32 %v1162, %v1164
        %v1167 = vmul.u32 %v1162, %v1165
        %v1168 = vmul.u32 %v1163, %v1164
        %v1169 = vmul.u32 %v1163, %v1165
        %v1170 = vshll.u32 %v1167, 16
        %v1171 = vshrl.u32 %v1167, 16
        %v1172 = vshll.u32 %v1168, 16
        %v1173 = vshrl.u32 %v1168, 16
        %vm1174 = vc.u32 %v1166, %v1170
        %v1175 = vsel %vm1174, 1, 0
        %v1176 = vadd.s32 %v1166, %v1170
        %v1177 = vadd.s32 %v1169, %v1175
        %vm1178 = vc.u32 %v1176, %v1172
        %v1179 = vsel %vm1178, 1, 0
        %v1180 = vadd.s32 %v1176, %v1172
        %v1181 = vadd.s32 %v1177, %v1179
        %v1182 = vadd.s32 %v1181, %v1171
        %v1183 = vadd.s32 %v1182, %v1173
        %v1184 = vand.u32 %v1161, 65535
        %v1185 = vshrl.u32 %v1161, 16
        %v1186 = vand.u32 %v1156, 65535
        %v1187 = vshrl.u32 %v1156, 16
        %v1188 = vmul.u32 %v1184, %v1186
        %v1189 = vmul.u32 %v1184, %v1187
        %v1190 = vmul.u32 %v1185, %v1186
        %v1191 = vmul.u32 %v1185, %v1187
        %v1192 = vshll.u32 %v1189, 16
        %v1193 = vshrl.u32 %v1189, 16
        %v1194 = vshll.u32 %v1190, 16
        %v1195 = vshrl.u32 %v1190, 16
        %vm1196 = vc.u32 %v1188, %v1192
        %v1197 = vsel %vm1196, 1, 0
        %v1198 = vadd.s32 %v1188, %v1192
        %v1199 = vadd.s32 %v1191, %v1197
        %vm1200 = vc.u32 %v1198, %v1194
        %v1201 = vsel %vm1200, 1, 0
        %v1202 = vadd.s32 %v1198, %v1194
        %v1203 = vadd.s32 %v1199, %v1201
        %v1204 = vadd.s32 %v1203, %v1193
        %v1205 = vadd.s32 %v1204, %v1195
        %v1206 = vmul.u32 %v1161, %v1152
        %v1207 = vadd.s32 %v1183, %v1202
        %vm1208 = vc.u32 %v1183, %v1202
        %v1209 = vadd.s32 %v1205, 1
        %v1210 = vsel %vm1208, %v1209, %v1205
        %v1211 = vadd.s32 %v1206, %v1210
        %v1212 = vadd.s32 %v1211, 536870912
        %v1213 = vshrl.u32 %v1212, 30
        %v1214 = vshll.u32 %v1213, 30
        %v1215 = vsub.s32 %v1211, %v1214
        %vm1216 = vcmp.lt.s32.totalorder %v1215, 0
        %v1217 = vsub.s32 0, %v1215
        %v1218 = vsel %vm1216, %v1217, %v1215
        %v1219 = vclz %v1218
        %v1220 = vsub.s32 %v1219, 2
        %vm1221 = vcmp.gt.s32.totalorder 0, %v1220
        %v1222 = vsel %vm1221, 0, %v1220
        %v1223 = vsub.s32 32, %v1222
        %v1224 = vshll.u32 %v1215, %v1222
        %v1225 = vshrl.u32 %v1207, %v1223
        %v1226 = vor.u32 %v1224, %v1225
        %v1227 = vsub.s32 4294967266, %v1222
        %v1228 = vadd.s32 %v1227, 127
        %v1229 = vshll.u32 %v1228, 23
        %v1230 = vor.u32 4788187, %v1229
        %v1231 = vand.u32 2147483647, %v1230
        %v1233 = vcvt.s32.f32 %v1226
        %v1234 = vmul.f32 %v1233, %v1231
        %v1235 = vxor.u32 %v1234, 2147483648
        %v1236 = vsel %vm1115, %v1235, %v1234
        %v1237 = vsub.s32 4, %v1213
        %v1238 = vsel %vm1115, %v1237, %v1213
        %v1239 = vsel %vm1114, %v435, %v1236
        %v1240 = vsel %vm1114, 0, %v1238
        %v1241 = vmul.f32 %v1239, %v1239
        %v1242 = vmul.f32 %v1241, -0.001358992
        %v1243 = vadd.f32 %v1242, 0.041655596
        %v1244 = vmul.f32 %v1241, %v1243
        %v1245 = vadd.f32 %v1244, -0.4999988
        %v1246 = vmul.f32 %v1241, %v1245
        %v1247 = vadd.f32 1.0, %v1246
        %v1248 = vmul.f32 %v1239, %v1239
        %v1249 = vmul.f32 %v1248, -0.00019511016
        %v1250 = vadd.f32 %v1249, 0.008332121
        %v1251 = vmul.f32 %v1248, %v1250
        %v1252 = vadd.f32 %v1251, -0.16666654
        %v1253 = vmul.f32 %v1248, %v1252
        %v1254 = vadd.f32 %v1253, 1.0
        %v1255 = vmul.f32 %v1254, %v1239
        %vm1256 = vweird.f32 %v435
        %v1257 = vadd.s32 %v1240, 3
        %v1258 = vand.u32 %v1257, 3
        %vm1259 = vcmp.lt.s32.totalorder %v1258, 2
        %vm1260 = vcmp.eq.s32.totalorder %v1258, 0
        %v1261 = vxor.u32 %v1255, 2147483648
        %v1262 = vsel %vm1260, %v1247, %v1261
        %vm1263 = vcmp.eq.s32.totalorder %v1258, 2
        %v1264 = vxor.u32 %v1247, 2147483648
        %v1265 = vsel %vm1263, %v1264, %v1255
        %v1266 = vsel %vm1259, %v1262, %v1265
        %v1267 = vsel %vm1256, nan, %v1266
        %v1268 = vand.u32 2147483647, %v476
        %vm1269 = vcmp.le.f32.partialorder %v1268, 0.7853982
        %vm1270 = vcmp.lt.s32.totalorder %v476, 0
        %v1271 = vand.u32 %v476, 2139095040
        %v1272 = vshrl.u32 %v1271, 23
        %v1273 = vsub.s32 %v1272, 127
        %v1274 = vand.u32 2147483647, %v476
        %v1275 = vand.u32 %v1274, 8388607
        %v1276 = vor.u32 %v1275, 8388608
        %v1277 = vsub.s32 0, %v1276
        %v1278 = vadd.s32 %v1273, 1
        %vm1279 = vcmp.gt.s32.totalorder %v1278, 0
        %v1280 = vsel %vm1279, %v1278, 0
        %v1281 = vshrl.u32 %v1280, 5
        %v1282 = vand.u32 %v1280, 31
        %v1283 = vsub.s32 32, %v1282
        %v1284 = vshrl.u32 683565275, %v1283
        %v1285 = vshll.u32 683565275, %v1282
        %v1286 = vshrl.u32 2475754826, %v1283
        %v1287 = vor.u32 %v1285, %v1286
        %v1288 = vshll.u32 2475754826, %v1282
        %v1289 = vshrl.u32 2131351028, %v1283
        %v1290 = vor.u32 %v1288, %v1289
        %v1291 = vshll.u32 2131351028, %v1282
        %v1292 = vshrl.u32 2102212464, %v1283
        %v1293 = vor.u32 %v1291, %v1292
        %v1294 = vshll.u32 2102212464, %v1282
        %v1295 = vshrl.u32 920167782, %v1283
        %v1296 = vor.u32 %v1294, %v1295
        %v1297 = vshll.u32 920167782, %v1282
        %v1298 = vshrl.u32 1326507024, %v1283
        %v1299 = vor.u32 %v1297, %v1298
        %vm1300 = vcmp.lt.s32.totalorder %v1281, 1
        %vm1301 = vcmp.lt.s32.totalorder %v1281, 2
        %vm1302 = vcmp.lt.s32.totalorder %v1281, 3
        %vm1303 = vcmp.lt.s32.totalorder %v1281, 4
        %v1304 = vsel %vm1300, %v1284, %v1287
        %v1305 = vsel %vm1303, %v1293, 2102212464
        %v1306 = vsel %vm1302, %v1290, %v1305
        %v1307 = vsel %vm1301, %v1304, %v1306
        %v1308 = vsel %vm1300, %v1287, %v1290
        %v1309 = vsel %vm1303, %v1296, 920167782
        %v1310 = vsel %vm1302, %v1293, %v1309
        %v1311 = vsel %vm1301, %v1308, %v1310
        %v1312 = vsel %vm1300, %v1290, %v1293
        %v1313 = vsel %vm1303, %v1299, 1326507024
        %v1314 = vsel %vm1302, %v1296, %v1313
        %v1315 = vsel %vm1301, %v1312, %v1314
        %v1316 = vshll.u32 %v1276, 8
        %v1317 = vand.u32 %v1316, 65535
        %v1318 = vshrl.u32 %v1316, 16
        %v1319 = vand.u32 %v1315, 65535
        %v1320 = vshrl.u32 %v1315, 16
        %v1321 = vmul.u32 %v1317, %v1319
        %v1322 = vmul.u32 %v1317, %v1320
        %v1323 = vmul.u32 %v1318, %v1319
        %v1324 = vmul.u32 %v1318, %v1320
        %v1325 = vshll.u32 %v1322, 16
        %v1326 = vshrl.u32 %v1322, 16
        %v1327 = vshll.u32 %v1323, 16
        %v1328 = vshrl.u32 %v1323, 16
        %vm1329 = vc.u32 %v1321, %v1325
        %v1330 = vsel %vm1329, 1, 0
        %v1331 = vadd.s32 %v1321, %v1325
        %v1332 = vadd.s32 %v1324, %v1330
        %vm1333 = vc.u32 %v1331, %v1327
        %v1334 = vsel %vm1333, 1, 0
        %v1335 = vadd.s32 %v1331, %v1327
        %v1336 = vadd.s32 %v1332, %v1334
        %v1337 = vadd.s32 %v1336, %v1326
        %v1338 = vadd.s32 %v1337, %v1328
        %v1339 = vand.u32 %v1316, 65535
        %v1340 = vshrl.u32 %v1316, 16
        %v1341 = vand.u32 %v1311, 65535
        %v1342 = vshrl.u32 %v1311, 16
        %v1343 = vmul.u32 %v1339, %v1341
        %v1344 = vmul.u32 %v1339, %v1342
        %v1345 = vmul.u32 %v1340, %v1341
        %v1346 = vmul.u32 %v1340, %v1342
        %v1347 = vshll.u32 %v1344, 16
        %v1348 = vshrl.u32 %v1344, 16
        %v1349 = vshll.u32 %v1345, 16
        %v1350 = vshrl.u32 %v1345, 16
        %vm1351 = vc.u32 %v1343, %v1347
        %v1352 = vsel %vm1351, 1, 0
        %v1353 = vadd.s32 %v1343, %v1347
        %v1354 = vadd.s32 %v1346, %v1352
        %vm1355 = vc.u32 %v1353, %v1349
        %v1356 = vsel %vm1355, 1, 0
        %v1357 = vadd.s32 %v1353, %v1349
        %v1358 = vadd.s32 %v1354, %v1356
        %v1359 = vadd.s32 %v1358, %v1348
        %v1360 = vadd.s32 %v1359, %v1350
        %v1361 = vmul.u32 %v1316, %v1307
        %v1362 = vadd.s32 %v1338, %v1357
        %vm1363 = vc.u32 %v1338, %v1357
        %v1364 = vadd.s32 %v1360, 1
        %v1365 = vsel %vm1363, %v1364, %v1360
        %v1366 = vadd.s32 %v1361, %v1365
        %v1367 = vadd.s32 %v1366, 536870912
        %v1368 = vshrl.u32 %v1367, 30
        %v1369 = vshll.u32 %v1368, 30
        %v1370 = vsub.s32 %v1366, %v1369
        %vm1371 = vcmp.lt.s32.totalorder %v1370, 0
        %v1372 = vsub.s32 0, %v1370
        %v1373 = vsel %vm1371, %v1372, %v1370
        %v1374 = vclz %v1373
        %v1375 = vsub.s32 %v1374, 2
        %vm1376 = vcmp.gt.s32.totalorder 0, %v1375
        %v1377 = vsel %vm1376, 0, %v1375
        %v1378 = vsub.s32 32, %v1377
        %v1379 = vshll.u32 %v1370, %v1377
        %v1380 = vshrl.u32 %v1362, %v1378
        %v1381 = vor.u32 %v1379, %v1380
        %v1382 = vsub.s32 4294967266, %v1377
        %v1383 = vadd.s32 %v1382, 127
        %v1384 = vshll.u32 %v1383, 23
        %v1385 = vor.u32 4788187, %v1384
        %v1386 = vand.u32 2147483647, %v1385
        %v1388 = vcvt.s32.f32 %v1381
        %v1389 = vmul.f32 %v1388, %v1386
        %v1390 = vxor.u32 %v1389, 2147483648
        %v1391 = vsel %vm1270, %v1390, %v1389
        %v1392 = vsub.s32 4, %v1368
        %v1393 = vsel %vm1270, %v1392, %v1368
        %v1394 = vsel %vm1269, %v476, %v1391
        %v1395 = vsel %vm1269, 0, %v1393
        %v1396 = vmul.f32 %v1394, %v1394
        %v1397 = vmul.f32 %v1396, -0.001358992
        %v1398 = vadd.f32 %v1397, 0.041655596
        %v1399 = vmul.f32 %v1396, %v1398
        %v1400 = vadd.f32 %v1399, -0.4999988
        %v1401 = vmul.f32 %v1396, %v1400
        %v1402 = vadd.f32 1.0, %v1401
        %v1403 = vmul.f32 %v1394, %v1394
        %v1404 = vmul.f32 %v1403, -0.00019511016
        %v1405 = vadd.f32 %v1404, 0.008332121
        %v1406 = vmul.f32 %v1403, %v1405
        %v1407 = vadd.f32 %v1406, -0.16666654
        %v1408 = vmul.f32 %v1403, %v1407
        %v1409 = vadd.f32 %v1408, 1.0
        %v1410 = vmul.f32 %v1409, %v1394
        %vm1411 = vweird.f32 %v476
        %v1412 = vadd.s32 %v1395, 3
        %v1413 = vand.u32 %v1412, 3
        %vm1414 = vcmp.lt.s32.totalorder %v1413, 2
        %vm1415 = vcmp.eq.s32.totalorder %v1413, 0
        %v1416 = vxor.u32 %v1410, 2147483648
        %v1417 = vsel %vm1415, %v1402, %v1416
        %vm1418 = vcmp.eq.s32.totalorder %v1413, 2
        %v1419 = vxor.u32 %v1402, 2147483648
        %v1420 = vsel %vm1418, %v1419, %v1410
        %v1421 = vsel %vm1414, %v1417, %v1420
        %v1422 = vsel %vm1411, nan, %v1421
        %v1423 = vand.u32 2147483647, %v438
        %vm1424 = vcmp.le.f32.partialorder %v1423, 0.7853982
        %vm1425 = vcmp.lt.s32.totalorder %v438, 0
        %v1426 = vand.u32 %v438, 2139095040
        %v1427 = vshrl.u32 %v1426, 23
        %v1428 = vsub.s32 %v1427, 127
        %v1429 = vand.u32 2147483647, %v438
        %v1430 = vand.u32 %v1429, 8388607
        %v1431 = vor.u32 %v1430, 8388608
        %v1432 = vsub.s32 0, %v1431
        %v1433 = vadd.s32 %v1428, 1
        %vm1434 = vcmp.gt.s32.totalorder %v1433, 0
        %v1435 = vsel %vm1434, %v1433, 0
        %v1436 = vshrl.u32 %v1435, 5
        %v1437 = vand.u32 %v1435, 31
        %v1438 = vsub.s32 32, %v1437
        %v1439 = vshrl.u32 683565275, %v1438
        %v1440 = vshll.u32 683565275, %v1437
        %v1441 = vshrl.u32 2475754826, %v1438
        %v1442 = vor.u32 %v1440, %v1441
        %v1443 = vshll.u32 2475754826, %v1437
        %v1444 = vshrl.u32 2131351028, %v1438
        %v1445 = vor.u32 %v1443, %v1444
        %v1446 = vshll.u32 2131351028, %v1437
        %v1447 = vshrl.u32 2102212464, %v1438
        %v1448 = vor.u32 %v1446, %v1447
        %v1449 = vshll.u32 2102212464, %v1437
        %v1450 = vshrl.u32 920167782, %v1438
        %v1451 = vor.u32 %v1449, %v1450
        %v1452 = vshll.u32 920167782, %v1437
        %v1453 = vshrl.u32 1326507024, %v1438
        %v1454 = vor.u32 %v1452, %v1453
        %vm1455 = vcmp.lt.s32.totalorder %v1436, 1
        %vm1456 = vcmp.lt.s32.totalorder %v1436, 2
        %vm1457 = vcmp.lt.s32.totalorder %v1436, 3
        %vm1458 = vcmp.lt.s32.totalorder %v1436, 4
        %v1459 = vsel %vm1455, %v1439, %v1442
        %v1460 = vsel %vm1458, %v1448, 2102212464
        %v1461 = vsel %vm1457, %v1445, %v1460
        %v1462 = vsel %vm1456, %v1459, %v1461
        %v1463 = vsel %vm1455, %v1442, %v1445
        %v1464 = vsel %vm1458, %v1451, 920167782
        %v1465 = vsel %vm1457, %v1448, %v1464
        %v1466 = vsel %vm1456, %v1463, %v1465
        %v1467 = vsel %vm1455, %v1445, %v1448
        %v1468 = vsel %vm1458, %v1454, 1326507024
        %v1469 = vsel %vm1457, %v1451, %v1468
        %v1470 = vsel %vm1456, %v1467, %v1469
        %v1471 = vshll.u32 %v1431, 8
        %v1472 = vand.u32 %v1471, 65535
        %v1473 = vshrl.u32 %v1471, 16
        %v1474 = vand.u32 %v1470, 65535
        %v1475 = vshrl.u32 %v1470, 16
        %v1476 = vmul.u32 %v1472, %v1474
        %v1477 = vmul.u32 %v1472, %v1475
        %v1478 = vmul.u32 %v1473, %v1474
        %v1479 = vmul.u32 %v1473, %v1475
        %v1480 = vshll.u32 %v1477, 16
        %v1481 = vshrl.u32 %v1477, 16
        %v1482 = vshll.u32 %v1478, 16
        %v1483 = vshrl.u32 %v1478, 16
        %vm1484 = vc.u32 %v1476, %v1480
        %v1485 = vsel %vm1484, 1, 0
        %v1486 = vadd.s32 %v1476, %v1480
        %v1487 = vadd.s32 %v1479, %v1485
        %vm1488 = vc.u32 %v1486, %v1482
        %v1489 = vsel %vm1488, 1, 0
        %v1490 = vadd.s32 %v1486, %v1482
        %v1491 = vadd.s32 %v1487, %v1489
        %v1492 = vadd.s32 %v1491, %v1481
        %v1493 = vadd.s32 %v1492, %v1483
        %v1494 = vand.u32 %v1471, 65535
        %v1495 = vshrl.u32 %v1471, 16
        %v1496 = vand.u32 %v1466, 65535
        %v1497 = vshrl.u32 %v1466, 16
        %v1498 = vmul.u32 %v1494, %v1496
        %v1499 = vmul.u32 %v1494, %v1497
        %v1500 = vmul.u32 %v1495, %v1496
        %v1501 = vmul.u32 %v1495, %v1497
        %v1502 = vshll.u32 %v1499, 16
        %v1503 = vshrl.u32 %v1499, 16
        %v1504 = vshll.u32 %v1500, 16
        %v1505 = vshrl.u32 %v1500, 16
        %vm1506 = vc.u32 %v1498, %v1502
        %v1507 = vsel %vm1506, 1, 0
        %v1508 = vadd.s32 %v1498, %v1502
        %v1509 = vadd.s32 %v1501, %v1507
        %vm1510 = vc.u32 %v1508, %v1504
        %v1511 = vsel %vm1510, 1, 0
        %v1512 = vadd.s32 %v1508, %v1504
        %v1513 = vadd.s32 %v1509, %v1511
        %v1514 = vadd.s32 %v1513, %v1503
        %v1515 = vadd.s32 %v1514, %v1505
        %v1516 = vmul.u32 %v1471, %v1462
        %v1517 = vadd.s32 %v1493, %v1512
        %vm1518 = vc.u32 %v1493, %v1512
        %v1519 = vadd.s32 %v1515, 1
        %v1520 = vsel %vm1518, %v1519, %v1515
        %v1521 = vadd.s32 %v1516, %v1520
        %v1522 = vadd.s32 %v1521, 536870912
        %v1523 = vshrl.u32 %v1522, 30
        %v1524 = vshll.u32 %v1523, 30
        %v1525 = vsub.s32 %v1521, %v1524
        %vm1526 = vcmp.lt.s32.totalorder %v1525, 0
        %v1527 = vsub.s32 0, %v1525
        %v1528 = vsel %vm1526, %v1527, %v1525
        %v1529 = vclz %v1528
        %v1530 = vsub.s32 %v1529, 2
        %vm1531 = vcmp.gt.s32.totalorder 0, %v1530
        %v1532 = vsel %vm1531, 0, %v1530
        %v1533 = vsub.s32 32, %v1532
        %v1534 = vshll.u32 %v1525, %v1532
        %v1535 = vshrl.u32 %v1517, %v1533
        %v1536 = vor.u32 %v1534, %v1535
        %v1537 = vsub.s32 4294967266, %v1532
        %v1538 = vadd.s32 %v1537, 127
        %v1539 = vshll.u32 %v1538, 23
        %v1540 = vor.u32 4788187, %v1539
        %v1541 = vand.u32 2147483647, %v1540
        %v1543 = vcvt.s32.f32 %v1536
        %v1544 = vmul.f32 %v1543, %v1541
        %v1545 = vxor.u32 %v1544, 2147483648
        %v1546 = vsel %vm1425, %v1545, %v1544
        %v1547 = vsub.s32 4, %v1523
        %v1548 = vsel %vm1425, %v1547, %v1523
        %v1549 = vsel %vm1424, %v438, %v1546
        %v1550 = vsel %vm1424, 0, %v1548
        %v1551 = vmul.f32 %v1549, %v1549
        %v1552 = vmul.f32 %v1551, -0.001358992
        %v1553 = vadd.f32 %v1552, 0.041655596
        %v1554 = vmul.f32 %v1551, %v1553
        %v1555 = vadd.f32 %v1554, -0.4999988
        %v1556 = vmul.f32 %v1551, %v1555
        %v1557 = vadd.f32 1.0, %v1556
        %v1558 = vmul.f32 %v1549, %v1549
        %v1559 = vmul.f32 %v1558, -0.00019511016
        %v1560 = vadd.f32 %v1559, 0.008332121
        %v1561 = vmul.f32 %v1558, %v1560
        %v1562 = vadd.f32 %v1561, -0.16666654
        %v1563 = vmul.f32 %v1558, %v1562
        %v1564 = vadd.f32 %v1563, 1.0
        %v1565 = vmul.f32 %v1564, %v1549
        %vm1566 = vweird.f32 %v438
        %v1567 = vadd.s32 %v1550, 3
        %v1568 = vand.u32 %v1567, 3
        %vm1569 = vcmp.lt.s32.totalorder %v1568, 2
        %vm1570 = vcmp.eq.s32.totalorder %v1568, 0
        %v1571 = vxor.u32 %v1565, 2147483648
        %v1572 = vsel %vm1570, %v1557, %v1571
        %vm1573 = vcmp.eq.s32.totalorder %v1568, 2
        %v1574 = vxor.u32 %v1557, 2147483648
        %v1575 = vsel %vm1573, %v1574, %v1565
        %v1576 = vsel %vm1569, %v1572, %v1575
        %v1577 = vsel %vm1566, nan, %v1576
        %v1578 = vand.u32 2147483647, %v479
        %vm1579 = vcmp.le.f32.partialorder %v1578, 0.7853982
        %vm1580 = vcmp.lt.s32.totalorder %v479, 0
        %v1581 = vand.u32 %v479, 2139095040
        %v1582 = vshrl.u32 %v1581, 23
        %v1583 = vsub.s32 %v1582, 127
        %v1584 = vand.u32 2147483647, %v479
        %v1585 = vand.u32 %v1584, 8388607
        %v1586 = vor.u32 %v1585, 8388608
        %v1587 = vsub.s32 0, %v1586
        %v1588 = vadd.s32 %v1583, 1
        %vm1589 = vcmp.gt.s32.totalorder %v1588, 0
        %v1590 = vsel %vm1589, %v1588, 0
        %v1591 = vshrl.u32 %v1590, 5
        %v1592 = vand.u32 %v1590, 31
        %v1593 = vsub.s32 32, %v1592
        %v1594 = vshrl.u32 683565275, %v1593
        %v1595 = vshll.u32 683565275, %v1592
        %v1596 = vshrl.u32 2475754826, %v1593
        %v1597 = vor.u32 %v1595, %v1596
        %v1598 = vshll.u32 2475754826, %v1592
        %v1599 = vshrl.u32 2131351028, %v1593
        %v1600 = vor.u32 %v1598, %v1599
        %v1601 = vshll.u32 2131351028, %v1592
        %v1602 = vshrl.u32 2102212464, %v1593
        %v1603 = vor.u32 %v1601, %v1602
        %v1604 = vshll.u32 2102212464, %v1592
        %v1605 = vshrl.u32 920167782, %v1593
        %v1606 = vor.u32 %v1604, %v1605
        %v1607 = vshll.u32 920167782, %v1592
        %v1608 = vshrl.u32 1326507024, %v1593
        %v1609 = vor.u32 %v1607, %v1608
        %vm1610 = vcmp.lt.s32.totalorder %v1591, 1
        %vm1611 = vcmp.lt.s32.totalorder %v1591, 2
        %vm1612 = vcmp.lt.s32.totalorder %v1591, 3
        %vm1613 = vcmp.lt.s32.totalorder %v1591, 4
        %v1614 = vsel %vm1610, %v1594, %v1597
        %v1615 = vsel %vm1613, %v1603, 2102212464
        %v1616 = vsel %vm1612, %v1600, %v1615
        %v1617 = vsel %vm1611, %v1614, %v1616
        %v1618 = vsel %vm1610, %v1597, %v1600
        %v1619 = vsel %vm1613, %v1606, 920167782
        %v1620 = vsel %vm1612, %v1603, %v1619
        %v1621 = vsel %vm1611, %v1618, %v1620
        %v1622 = vsel %vm1610, %v1600, %v1603
        %v1623 = vsel %vm1613, %v1609, 1326507024
        %v1624 = vsel %vm1612, %v1606, %v1623
        %v1625 = vsel %vm1611, %v1622, %v1624
        %v1626 = vshll.u32 %v1586, 8
        %v1627 = vand.u32 %v1626, 65535
        %v1628 = vshrl.u32 %v1626, 16
        %v1629 = vand.u32 %v1625, 65535
        %v1630 = vshrl.u32 %v1625, 16
        %v1631 = vmul.u32 %v1627, %v1629
        %v1632 = vmul.u32 %v1627, %v1630
        %v1633 = vmul.u32 %v1628, %v1629
        %v1634 = vmul.u32 %v1628, %v1630
        %v1635 = vshll.u32 %v1632, 16
        %v1636 = vshrl.u32 %v1632, 16
        %v1637 = vshll.u32 %v1633, 16
        %v1638 = vshrl.u32 %v1633, 16
        %vm1639 = vc.u32 %v1631, %v1635
        %v1640 = vsel %vm1639, 1, 0
        %v1641 = vadd.s32 %v1631, %v1635
        %v1642 = vadd.s32 %v1634, %v1640
        %vm1643 = vc.u32 %v1641, %v1637
        %v1644 = vsel %vm1643, 1, 0
        %v1645 = vadd.s32 %v1641, %v1637
        %v1646 = vadd.s32 %v1642, %v1644
        %v1647 = vadd.s32 %v1646, %v1636
        %v1648 = vadd.s32 %v1647, %v1638
        %v1649 = vand.u32 %v1626, 65535
        %v1650 = vshrl.u32 %v1626, 16
        %v1651 = vand.u32 %v1621, 65535
        %v1652 = vshrl.u32 %v1621, 16
        %v1653 = vmul.u32 %v1649, %v1651
        %v1654 = vmul.u32 %v1649, %v1652
        %v1655 = vmul.u32 %v1650, %v1651
        %v1656 = vmul.u32 %v1650, %v1652
        %v1657 = vshll.u32 %v1654, 16
        %v1658 = vshrl.u32 %v1654, 16
        %v1659 = vshll.u32 %v1655, 16
        %v1660 = vshrl.u32 %v1655, 16
        %vm1661 = vc.u32 %v1653, %v1657
        %v1662 = vsel %vm1661, 1, 0
        %v1663 = vadd.s32 %v1653, %v1657
        %v1664 = vadd.s32 %v1656, %v1662
        %vm1665 = vc.u32 %v1663, %v1659
        %v1666 = vsel %vm1665, 1, 0
        %v1667 = vadd.s32 %v1663, %v1659
        %v1668 = vadd.s32 %v1664, %v1666
        %v1669 = vadd.s32 %v1668, %v1658
        %v1670 = vadd.s32 %v1669, %v1660
        %v1671 = vmul.u32 %v1626, %v1617
        %v1672 = vadd.s32 %v1648, %v1667
        %vm1673 = vc.u32 %v1648, %v1667
        %v1674 = vadd.s32 %v1670, 1
        %v1675 = vsel %vm1673, %v1674, %v1670
        %v1676 = vadd.s32 %v1671, %v1675
        %v1677 = vadd.s32 %v1676, 536870912
        %v1678 = vshrl.u32 %v1677, 30
        %v1679 = vshll.u32 %v1678, 30
        %v1680 = vsub.s32 %v1676, %v1679
        %vm1681 = vcmp.lt.s32.totalorder %v1680, 0
        %v1682 = vsub.s32 0, %v1680
        %v1683 = vsel %vm1681, %v1682, %v1680
        %v1684 = vclz %v1683
        %v1685 = vsub.s32 %v1684, 2
        %vm1686 = vcmp.gt.s32.totalorder 0, %v1685
        %v1687 = vsel %vm1686, 0, %v1685
        %v1688 = vsub.s32 32, %v1687
        %v1689 = vshll.u32 %v1680, %v1687
        %v1690 = vshrl.u32 %v1672, %v1688
        %v1691 = vor.u32 %v1689, %v1690
        %v1692 = vsub.s32 4294967266, %v1687
        %v1693 = vadd.s32 %v1692, 127
        %v1694 = vshll.u32 %v1693, 23
        %v1695 = vor.u32 4788187, %v1694
        %v1696 = vand.u32 2147483647, %v1695
        %v1698 = vcvt.s32.f32 %v1691
        %v1699 = vmul.f32 %v1698, %v1696
        %v1700 = vxor.u32 %v1699, 2147483648
        %v1701 = vsel %vm1580, %v1700, %v1699
        %v1702 = vsub.s32 4, %v1678
        %v1703 = vsel %vm1580, %v1702, %v1678
        %v1704 = vsel %vm1579, %v479, %v1701
        %v1705 = vsel %vm1579, 0, %v1703
        %v1706 = vmul.f32 %v1704, %v1704
        %v1707 = vmul.f32 %v1706, -0.001358992
        %v1708 = vadd.f32 %v1707, 0.041655596
        %v1709 = vmul.f32 %v1706, %v1708
        %v1710 = vadd.f32 %v1709, -0.4999988
        %v1711 = vmul.f32 %v1706, %v1710
        %v1712 = vadd.f32 1.0, %v1711
        %v1713 = vmul.f32 %v1704, %v1704
        %v1714 = vmul.f32 %v1713, -0.00019511016
        %v1715 = vadd.f32 %v1714, 0.008332121
        %v1716 = vmul.f32 %v1713, %v1715
        %v1717 = vadd.f32 %v1716, -0.16666654
        %v1718 = vmul.f32 %v1713, %v1717
        %v1719 = vadd.f32 %v1718, 1.0
        %v1720 = vmul.f32 %v1719, %v1704
        %vm1721 = vweird.f32 %v479
        %v1722 = vadd.s32 %v1705, 3
        %v1723 = vand.u32 %v1722, 3
        %vm1724 = vcmp.lt.s32.totalorder %v1723, 2
        %vm1725 = vcmp.eq.s32.totalorder %v1723, 0
        %v1726 = vxor.u32 %v1720, 2147483648
        %v1727 = vsel %vm1725, %v1712, %v1726
        %vm1728 = vcmp.eq.s32.totalorder %v1723, 2
        %v1729 = vxor.u32 %v1712, 2147483648
        %v1730 = vsel %vm1728, %v1729, %v1720
        %v1731 = vsel %vm1724, %v1727, %v1730
        %v1732 = vsel %vm1721, nan, %v1731
        %v1733 = vand.u32 2147483647, %v441
        %vm1734 = vcmp.le.f32.partialorder %v1733, 0.7853982
        %vm1735 = vcmp.lt.s32.totalorder %v441, 0
        %v1736 = vand.u32 %v441, 2139095040
        %v1737 = vshrl.u32 %v1736, 23
        %v1738 = vsub.s32 %v1737, 127
        %v1739 = vand.u32 2147483647, %v441
        %v1740 = vand.u32 %v1739, 8388607
        %v1741 = vor.u32 %v1740, 8388608
        %v1742 = vsub.s32 0, %v1741
        %v1743 = vadd.s32 %v1738, 1
        %vm1744 = vcmp.gt.s32.totalorder %v1743, 0
        %v1745 = vsel %vm1744, %v1743, 0
        %v1746 = vshrl.u32 %v1745, 5
        %v1747 = vand.u32 %v1745, 31
        %v1748 = vsub.s32 32, %v1747
        %v1749 = vshrl.u32 683565275, %v1748
        %v1750 = vshll.u32 683565275, %v1747
        %v1751 = vshrl.u32 2475754826, %v1748
        %v1752 = vor.u32 %v1750, %v1751
        %v1753 = vshll.u32 2475754826, %v1747
        %v1754 = vshrl.u32 2131351028, %v1748
        %v1755 = vor.u32 %v1753, %v1754
        %v1756 = vshll.u32 2131351028, %v1747
        %v1757 = vshrl.u32 2102212464, %v1748
        %v1758 = vor.u32 %v1756, %v1757
        %v1759 = vshll.u32 2102212464, %v1747
        %v1760 = vshrl.u32 920167782, %v1748
        %v1761 = vor.u32 %v1759, %v1760
        %v1762 = vshll.u32 920167782, %v1747
        %v1763 = vshrl.u32 1326507024, %v1748
        %v1764 = vor.u32 %v1762, %v1763
        %vm1765 = vcmp.lt.s32.totalorder %v1746, 1
        %vm1766 = vcmp.lt.s32.totalorder %v1746, 2
        %vm1767 = vcmp.lt.s32.totalorder %v1746, 3
        %vm1768 = vcmp.lt.s32.totalorder %v1746, 4
        %v1769 = vsel %vm1765, %v1749, %v1752
        %v1770 = vsel %vm1768, %v1758, 2102212464
        %v1771 = vsel %vm1767, %v1755, %v1770
        %v1772 = vsel %vm1766, %v1769, %v1771
        %v1773 = vsel %vm1765, %v1752, %v1755
        %v1774 = vsel %vm1768, %v1761, 920167782
        %v1775 = vsel %vm1767, %v1758, %v1774
        %v1776 = vsel %vm1766, %v1773, %v1775
        %v1777 = vsel %vm1765, %v1755, %v1758
        %v1778 = vsel %vm1768, %v1764, 1326507024
        %v1779 = vsel %vm1767, %v1761, %v1778
        %v1780 = vsel %vm1766, %v1777, %v1779
        %v1781 = vshll.u32 %v1741, 8
        %v1782 = vand.u32 %v1781, 65535
        %v1783 = vshrl.u32 %v1781, 16
        %v1784 = vand.u32 %v1780, 65535
        %v1785 = vshrl.u32 %v1780, 16
        %v1786 = vmul.u32 %v1782, %v1784
        %v1787 = vmul.u32 %v1782, %v1785
        %v1788 = vmul.u32 %v1783, %v1784
        %v1789 = vmul.u32 %v1783, %v1785
        %v1790 = vshll.u32 %v1787, 16
        %v1791 = vshrl.u32 %v1787, 16
        %v1792 = vshll.u32 %v1788, 16
        %v1793 = vshrl.u32 %v1788, 16
        %vm1794 = vc.u32 %v1786, %v1790
        %v1795 = vsel %vm1794, 1, 0
        %v1796 = vadd.s32 %v1786, %v1790
        %v1797 = vadd.s32 %v1789, %v1795
        %vm1798 = vc.u32 %v1796, %v1792
        %v1799 = vsel %vm1798, 1, 0
        %v1800 = vadd.s32 %v1796, %v1792
        %v1801 = vadd.s32 %v1797, %v1799
        %v1802 = vadd.s32 %v1801, %v1791
        %v1803 = vadd.s32 %v1802, %v1793
        %v1804 = vand.u32 %v1781, 65535
        %v1805 = vshrl.u32 %v1781, 16
        %v1806 = vand.u32 %v1776, 65535
        %v1807 = vshrl.u32 %v1776, 16
        %v1808 = vmul.u32 %v1804, %v1806
        %v1809 = vmul.u32 %v1804, %v1807
        %v1810 = vmul.u32 %v1805, %v1806
        %v1811 = vmul.u32 %v1805, %v1807
        %v1812 = vshll.u32 %v1809, 16
        %v1813 = vshrl.u32 %v1809, 16
        %v1814 = vshll.u32 %v1810, 16
        %v1815 = vshrl.u32 %v1810, 16
        %vm1816 = vc.u32 %v1808, %v1812
        %v1817 = vsel %vm1816, 1, 0
        %v1818 = vadd.s32 %v1808, %v1812
        %v1819 = vadd.s32 %v1811, %v1817
        %vm1820 = vc.u32 %v1818, %v1814
        %v1821 = vsel %vm1820, 1, 0
        %v1822 = vadd.s32 %v1818, %v1814
        %v1823 = vadd.s32 %v1819, %v1821
        %v1824 = vadd.s32 %v1823, %v1813
        %v1825 = vadd.s32 %v1824, %v1815
        %v1826 = vmul.u32 %v1781, %v1772
        %v1827 = vadd.s32 %v1803, %v1822
        %vm1828 = vc.u32 %v1803, %v1822
        %v1829 = vadd.s32 %v1825, 1
        %v1830 = vsel %vm1828, %v1829, %v1825
        %v1831 = vadd.s32 %v1826, %v1830
        %v1832 = vadd.s32 %v1831, 536870912
        %v1833 = vshrl.u32 %v1832, 30
        %v1834 = vshll.u32 %v1833, 30
        %v1835 = vsub.s32 %v1831, %v1834
        %vm1836 = vcmp.lt.s32.totalorder %v1835, 0
        %v1837 = vsub.s32 0, %v1835
        %v1838 = vsel %vm1836, %v1837, %v1835
        %v1839 = vclz %v1838
        %v1840 = vsub.s32 %v1839, 2
        %vm1841 = vcmp.gt.s32.totalorder 0, %v1840
        %v1842 = vsel %vm1841, 0, %v1840
        %v1843 = vsub.s32 32, %v1842
        %v1844 = vshll.u32 %v1835, %v1842
        %v1845 = vshrl.u32 %v1827, %v1843
        %v1846 = vor.u32 %v1844, %v1845
        %v1847 = vsub.s32 4294967266, %v1842
        %v1848 = vadd.s32 %v1847, 127
        %v1849 = vshll.u32 %v1848, 23
        %v1850 = vor.u32 4788187, %v1849
        %v1851 = vand.u32 2147483647, %v1850
        %v1853 = vcvt.s32.f32 %v1846
        %v1854 = vmul.f32 %v1853, %v1851
        %v1855 = vxor.u32 %v1854, 2147483648
        %v1856 = vsel %vm1735, %v1855, %v1854
        %v1857 = vsub.s32 4, %v1833
        %v1858 = vsel %vm1735, %v1857, %v1833
        %v1859 = vsel %vm1734, %v441, %v1856
        %v1860 = vsel %vm1734, 0, %v1858
        %v1861 = vmul.f32 %v1859, %v1859
        %v1862 = vmul.f32 %v1861, -0.001358992
        %v1863 = vadd.f32 %v1862, 0.041655596
        %v1864 = vmul.f32 %v1861, %v1863
        %v1865 = vadd.f32 %v1864, -0.4999988
        %v1866 = vmul.f32 %v1861, %v1865
        %v1867 = vadd.f32 1.0, %v1866
        %v1868 = vmul.f32 %v1859, %v1859
        %v1869 = vmul.f32 %v1868, -0.00019511016
        %v1870 = vadd.f32 %v1869, 0.008332121
        %v1871 = vmul.f32 %v1868, %v1870
        %v1872 = vadd.f32 %v1871, -0.16666654
        %v1873 = vmul.f32 %v1868, %v1872
        %v1874 = vadd.f32 %v1873, 1.0
        %v1875 = vmul.f32 %v1874, %v1859
        %vm1876 = vweird.f32 %v441
        %v1877 = vadd.s32 %v1860, 3
        %v1878 = vand.u32 %v1877, 3
        %vm1879 = vcmp.lt.s32.totalorder %v1878, 2
        %vm1880 = vcmp.eq.s32.totalorder %v1878, 0
        %v1881 = vxor.u32 %v1875, 2147483648
        %v1882 = vsel %vm1880, %v1867, %v1881
        %vm1883 = vcmp.eq.s32.totalorder %v1878, 2
        %v1884 = vxor.u32 %v1867, 2147483648
        %v1885 = vsel %vm1883, %v1884, %v1875
        %v1886 = vsel %vm1879, %v1882, %v1885
        %v1887 = vsel %vm1876, nan, %v1886
        %v1888 = vand.u32 2147483647, %v482
        %vm1889 = vcmp.le.f32.partialorder %v1888, 0.7853982
        %vm1890 = vcmp.lt.s32.totalorder %v482, 0
        %v1891 = vand.u32 %v482, 2139095040
        %v1892 = vshrl.u32 %v1891, 23
        %v1893 = vsub.s32 %v1892, 127
        %v1894 = vand.u32 2147483647, %v482
        %v1895 = vand.u32 %v1894, 8388607
        %v1896 = vor.u32 %v1895, 8388608
        %v1897 = vsub.s32 0, %v1896
        %v1898 = vadd.s32 %v1893, 1
        %vm1899 = vcmp.gt.s32.totalorder %v1898, 0
        %v1900 = vsel %vm1899, %v1898, 0
        %v1901 = vshrl.u32 %v1900, 5
        %v1902 = vand.u32 %v1900, 31
        %v1903 = vsub.s32 32, %v1902
        %v1904 = vshrl.u32 683565275, %v1903
        %v1905 = vshll.u32 683565275, %v1902
        %v1906 = vshrl.u32 2475754826, %v1903
        %v1907 = vor.u32 %v1905, %v1906
        %v1908 = vshll.u32 2475754826, %v1902
        %v1909 = vshrl.u32 2131351028, %v1903
        %v1910 = vor.u32 %v1908, %v1909
        %v1911 = vshll.u32 2131351028, %v1902
        %v1912 = vshrl.u32 2102212464, %v1903
        %v1913 = vor.u32 %v1911, %v1912
        %v1914 = vshll.u32 2102212464, %v1902
        %v1915 = vshrl.u32 920167782, %v1903
        %v1916 = vor.u32 %v1914, %v1915
        %v1917 = vshll.u32 920167782, %v1902
        %v1918 = vshrl.u32 1326507024, %v1903
        %v1919 = vor.u32 %v1917, %v1918
        %vm1920 = vcmp.lt.s32.totalorder %v1901, 1
        %vm1921 = vcmp.lt.s32.totalorder %v1901, 2
        %vm1922 = vcmp.lt.s32.totalorder %v1901, 3
        %vm1923 = vcmp.lt.s32.totalorder %v1901, 4
        %v1924 = vsel %vm1920, %v1904, %v1907
        %v1925 = vsel %vm1923, %v1913, 2102212464
        %v1926 = vsel %vm1922, %v1910, %v1925
        %v1927 = vsel %vm1921, %v1924, %v1926
        %v1928 = vsel %vm1920, %v1907, %v1910
        %v1929 = vsel %vm1923, %v1916, 920167782
        %v1930 = vsel %vm1922, %v1913, %v1929
        %v1931 = vsel %vm1921, %v1928, %v1930
        %v1932 = vsel %vm1920, %v1910, %v1913
        %v1933 = vsel %vm1923, %v1919, 1326507024
        %v1934 = vsel %vm1922, %v1916, %v1933
        %v1935 = vsel %vm1921, %v1932, %v1934
        %v1936 = vshll.u32 %v1896, 8
        %v1937 = vand.u32 %v1936, 65535
        %v1938 = vshrl.u32 %v1936, 16
        %v1939 = vand.u32 %v1935, 65535
        %v1940 = vshrl.u32 %v1935, 16
        %v1941 = vmul.u32 %v1937, %v1939
        %v1942 = vmul.u32 %v1937, %v1940
        %v1943 = vmul.u32 %v1938, %v1939
        %v1944 = vmul.u32 %v1938, %v1940
        %v1945 = vshll.u32 %v1942, 16
        %v1946 = vshrl.u32 %v1942, 16
        %v1947 = vshll.u32 %v1943, 16
        %v1948 = vshrl.u32 %v1943, 16
        %vm1949 = vc.u32 %v1941, %v1945
        %v1950 = vsel %vm1949, 1, 0
        %v1951 = vadd.s32 %v1941, %v1945
        %v1952 = vadd.s32 %v1944, %v1950
        %vm1953 = vc.u32 %v1951, %v1947
        %v1954 = vsel %vm1953, 1, 0
        %v1955 = vadd.s32 %v1951, %v1947
        %v1956 = vadd.s32 %v1952, %v1954
        %v1957 = vadd.s32 %v1956, %v1946
        %v1958 = vadd.s32 %v1957, %v1948
        %v1959 = vand.u32 %v1936, 65535
        %v1960 = vshrl.u32 %v1936, 16
        %v1961 = vand.u32 %v1931, 65535
        %v1962 = vshrl.u32 %v1931, 16
        %v1963 = vmul.u32 %v1959, %v1961
        %v1964 = vmul.u32 %v1959, %v1962
        %v1965 = vmul.u32 %v1960, %v1961
        %v1966 = vmul.u32 %v1960, %v1962
        %v1967 = vshll.u32 %v1964, 16
        %v1968 = vshrl.u32 %v1964, 16
        %v1969 = vshll.u32 %v1965, 16
        %v1970 = vshrl.u32 %v1965, 16
        %vm1971 = vc.u32 %v1963, %v1967
        %v1972 = vsel %vm1971, 1, 0
        %v1973 = vadd.s32 %v1963, %v1967
        %v1974 = vadd.s32 %v1966, %v1972
        %vm1975 = vc.u32 %v1973, %v1969
        %v1976 = vsel %vm1975, 1, 0
        %v1977 = vadd.s32 %v1973, %v1969
        %v1978 = vadd.s32 %v1974, %v1976
        %v1979 = vadd.s32 %v1978, %v1968
        %v1980 = vadd.s32 %v1979, %v1970
        %v1981 = vmul.u32 %v1936, %v1927
        %v1982 = vadd.s32 %v1958, %v1977
        %vm1983 = vc.u32 %v1958, %v1977
        %v1984 = vadd.s32 %v1980, 1
        %v1985 = vsel %vm1983, %v1984, %v1980
        %v1986 = vadd.s32 %v1981, %v1985
        %v1987 = vadd.s32 %v1986, 536870912
        %v1988 = vshrl.u32 %v1987, 30
        %v1989 = vshll.u32 %v1988, 30
        %v1990 = vsub.s32 %v1986, %v1989
        %vm1991 = vcmp.lt.s32.totalorder %v1990, 0
        %v1992 = vsub.s32 0, %v1990
        %v1993 = vsel %vm1991, %v1992, %v1990
        %v1994 = vclz %v1993
        %v1995 = vsub.s32 %v1994, 2
        %vm1996 = vcmp.gt.s32.totalorder 0, %v1995
        %v1997 = vsel %vm1996, 0, %v1995
        %v1998 = vsub.s32 32, %v1997
        %v1999 = vshll.u32 %v1990, %v1997
        %v2000 = vshrl.u32 %v1982, %v1998
        %v2001 = vor.u32 %v1999, %v2000
        %v2002 = vsub.s32 4294967266, %v1997
        %v2003 = vadd.s32 %v2002, 127
        %v2004 = vshll.u32 %v2003, 23
        %v2005 = vor.u32 4788187, %v2004
        %v2006 = vand.u32 2147483647, %v2005
        %v2008 = vcvt.s32.f32 %v2001
        %v2009 = vmul.f32 %v2008, %v2006
        %v2010 = vxor.u32 %v2009, 2147483648
        %v2011 = vsel %vm1890, %v2010, %v2009
        %v2012 = vsub.s32 4, %v1988
        %v2013 = vsel %vm1890, %v2012, %v1988
        %v2014 = vsel %vm1889, %v482, %v2011
        %v2015 = vsel %vm1889, 0, %v2013
        %v2016 = vmul.f32 %v2014, %v2014
        %v2017 = vmul.f32 %v2016, -0.001358992
        %v2018 = vadd.f32 %v2017, 0.041655596
        %v2019 = vmul.f32 %v2016, %v2018
        %v2020 = vadd.f32 %v2019, -0.4999988
        %v2021 = vmul.f32 %v2016, %v2020
        %v2022 = vadd.f32 1.0, %v2021
        %v2023 = vmul.f32 %v2014, %v2014
        %v2024 = vmul.f32 %v2023, -0.00019511016
        %v2025 = vadd.f32 %v2024, 0.008332121
        %v2026 = vmul.f32 %v2023, %v2025
        %v2027 = vadd.f32 %v2026, -0.16666654
        %v2028 = vmul.f32 %v2023, %v2027
        %v2029 = vadd.f32 %v2028, 1.0
        %v2030 = vmul.f32 %v2029, %v2014
        %vm2031 = vweird.f32 %v482
        %v2032 = vadd.s32 %v2015, 3
        %v2033 = vand.u32 %v2032, 3
        %vm2034 = vcmp.lt.s32.totalorder %v2033, 2
        %vm2035 = vcmp.eq.s32.totalorder %v2033, 0
        %v2036 = vxor.u32 %v2030, 2147483648
        %v2037 = vsel %vm2035, %v2022, %v2036
        %vm2038 = vcmp.eq.s32.totalorder %v2033, 2
        %v2039 = vxor.u32 %v2022, 2147483648
        %v2040 = vsel %vm2038, %v2039, %v2030
        %v2041 = vsel %vm2034, %v2037, %v2040
        %v2042 = vsel %vm2031, nan, %v2041
        %v2043 = vand.u32 2147483647, %v444
        %vm2044 = vcmp.le.f32.partialorder %v2043, 0.7853982
        %vm2045 = vcmp.lt.s32.totalorder %v444, 0
        %v2046 = vand.u32 %v444, 2139095040
        %v2047 = vshrl.u32 %v2046, 23
        %v2048 = vsub.s32 %v2047, 127
        %v2049 = vand.u32 2147483647, %v444
        %v2050 = vand.u32 %v2049, 8388607
        %v2051 = vor.u32 %v2050, 8388608
        %v2052 = vsub.s32 0, %v2051
        %v2053 = vadd.s32 %v2048, 1
        %vm2054 = vcmp.gt.s32.totalorder %v2053, 0
        %v2055 = vsel %vm2054, %v2053, 0
        %v2056 = vshrl.u32 %v2055, 5
        %v2057 = vand.u32 %v2055, 31
        %v2058 = vsub.s32 32, %v2057
        %v2059 = vshrl.u32 683565275, %v2058
        %v2060 = vshll.u32 683565275, %v2057
        %v2061 = vshrl.u32 2475754826, %v2058
        %v2062 = vor.u32 %v2060, %v2061
        %v2063 = vshll.u32 2475754826, %v2057
        %v2064 = vshrl.u32 2131351028, %v2058
        %v2065 = vor.u32 %v2063, %v2064
        %v2066 = vshll.u32 2131351028, %v2057
        %v2067 = vshrl.u32 2102212464, %v2058
        %v2068 = vor.u32 %v2066, %v2067
        %v2069 = vshll.u32 2102212464, %v2057
        %v2070 = vshrl.u32 920167782, %v2058
        %v2071 = vor.u32 %v2069, %v2070
        %v2072 = vshll.u32 920167782, %v2057
        %v2073 = vshrl.u32 1326507024, %v2058
        %v2074 = vor.u32 %v2072, %v2073
        %vm2075 = vcmp.lt.s32.totalorder %v2056, 1
        %vm2076 = vcmp.lt.s32.totalorder %v2056, 2
        %vm2077 = vcmp.lt.s32.totalorder %v2056, 3
        %vm2078 = vcmp.lt.s32.totalorder %v2056, 4
        %v2079 = vsel %vm2075, %v2059, %v2062
        %v2080 = vsel %vm2078, %v2068, 2102212464
        %v2081 = vsel %vm2077, %v2065, %v2080
        %v2082 = vsel %vm2076, %v2079, %v2081
        %v2083 = vsel %vm2075, %v2062, %v2065
        %v2084 = vsel %vm2078, %v2071, 920167782
        %v2085 = vsel %vm2077, %v2068, %v2084
        %v2086 = vsel %vm2076, %v2083, %v2085
        %v2087 = vsel %vm2075, %v2065, %v2068
        %v2088 = vsel %vm2078, %v2074, 1326507024
        %v2089 = vsel %vm2077, %v2071, %v2088
        %v2090 = vsel %vm2076, %v2087, %v2089
        %v2091 = vshll.u32 %v2051, 8
        %v2092 = vand.u32 %v2091, 65535
        %v2093 = vshrl.u32 %v2091, 16
        %v2094 = vand.u32 %v2090, 65535
        %v2095 = vshrl.u32 %v2090, 16
        %v2096 = vmul.u32 %v2092, %v2094
        %v2097 = vmul.u32 %v2092, %v2095
        %v2098 = vmul.u32 %v2093, %v2094
        %v2099 = vmul.u32 %v2093, %v2095
        %v2100 = vshll.u32 %v2097, 16
        %v2101 = vshrl.u32 %v2097, 16
        %v2102 = vshll.u32 %v2098, 16
        %v2103 = vshrl.u32 %v2098, 16
        %vm2104 = vc.u32 %v2096, %v2100
        %v2105 = vsel %vm2104, 1, 0
        %v2106 = vadd.s32 %v2096, %v2100
        %v2107 = vadd.s32 %v2099, %v2105
        %vm2108 = vc.u32 %v2106, %v2102
        %v2109 = vsel %vm2108, 1, 0
        %v2110 = vadd.s32 %v2106, %v2102
        %v2111 = vadd.s32 %v2107, %v2109
        %v2112 = vadd.s32 %v2111, %v2101
        %v2113 = vadd.s32 %v2112, %v2103
        %v2114 = vand.u32 %v2091, 65535
        %v2115 = vshrl.u32 %v2091, 16
        %v2116 = vand.u32 %v2086, 65535
        %v2117 = vshrl.u32 %v2086, 16
        %v2118 = vmul.u32 %v2114, %v2116
        %v2119 = vmul.u32 %v2114, %v2117
        %v2120 = vmul.u32 %v2115, %v2116
        %v2121 = vmul.u32 %v2115, %v2117
        %v2122 = vshll.u32 %v2119, 16
        %v2123 = vshrl.u32 %v2119, 16
        %v2124 = vshll.u32 %v2120, 16
        %v2125 = vshrl.u32 %v2120, 16
        %vm2126 = vc.u32 %v2118, %v2122
        %v2127 = vsel %vm2126, 1, 0
        %v2128 = vadd.s32 %v2118, %v2122
        %v2129 = vadd.s32 %v2121, %v2127
        %vm2130 = vc.u32 %v2128, %v2124
        %v2131 = vsel %vm2130, 1, 0
        %v2132 = vadd.s32 %v2128, %v2124
        %v2133 = vadd.s32 %v2129, %v2131
        %v2134 = vadd.s32 %v2133, %v2123
        %v2135 = vadd.s32 %v2134, %v2125
        %v2136 = vmul.u32 %v2091, %v2082
        %v2137 = vadd.s32 %v2113, %v2132
        %vm2138 = vc.u32 %v2113, %v2132
        %v2139 = vadd.s32 %v2135, 1
        %v2140 = vsel %vm2138, %v2139, %v2135
        %v2141 = vadd.s32 %v2136, %v2140
        %v2142 = vadd.s32 %v2141, 536870912
        %v2143 = vshrl.u32 %v2142, 30
        %v2144 = vshll.u32 %v2143, 30
        %v2145 = vsub.s32 %v2141, %v2144
        %vm2146 = vcmp.lt.s32.totalorder %v2145, 0
        %v2147 = vsub.s32 0, %v2145
        %v2148 = vsel %vm2146, %v2147, %v2145
        %v2149 = vclz %v2148
        %v2150 = vsub.s32 %v2149, 2
        %vm2151 = vcmp.gt.s32.totalorder 0, %v2150
        %v2152 = vsel %vm2151, 0, %v2150
        %v2153 = vsub.s32 32, %v2152
        %v2154 = vshll.u32 %v2145, %v2152
        %v2155 = vshrl.u32 %v2137, %v2153
        %v2156 = vor.u32 %v2154, %v2155
        %v2157 = vsub.s32 4294967266, %v2152
        %v2158 = vadd.s32 %v2157, 127
        %v2159 = vshll.u32 %v2158, 23
        %v2160 = vor.u32 4788187, %v2159
        %v2161 = vand.u32 2147483647, %v2160
        %v2163 = vcvt.s32.f32 %v2156
        %v2164 = vmul.f32 %v2163, %v2161
        %v2165 = vxor.u32 %v2164, 2147483648
        %v2166 = vsel %vm2045, %v2165, %v2164
        %v2167 = vsub.s32 4, %v2143
        %v2168 = vsel %vm2045, %v2167, %v2143
        %v2169 = vsel %vm2044, %v444, %v2166
        %v2170 = vsel %vm2044, 0, %v2168
        %v2171 = vmul.f32 %v2169, %v2169
        %v2172 = vmul.f32 %v2171, -0.001358992
        %v2173 = vadd.f32 %v2172, 0.041655596
        %v2174 = vmul.f32 %v2171, %v2173
        %v2175 = vadd.f32 %v2174, -0.4999988
        %v2176 = vmul.f32 %v2171, %v2175
        %v2177 = vadd.f32 1.0, %v2176
        %v2178 = vmul.f32 %v2169, %v2169
        %v2179 = vmul.f32 %v2178, -0.00019511016
        %v2180 = vadd.f32 %v2179, 0.008332121
        %v2181 = vmul.f32 %v2178, %v2180
        %v2182 = vadd.f32 %v2181, -0.16666654
        %v2183 = vmul.f32 %v2178, %v2182
        %v2184 = vadd.f32 %v2183, 1.0
        %v2185 = vmul.f32 %v2184, %v2169
        %vm2186 = vweird.f32 %v444
        %v2187 = vadd.s32 %v2170, 3
        %v2188 = vand.u32 %v2187, 3
        %vm2189 = vcmp.lt.s32.totalorder %v2188, 2
        %vm2190 = vcmp.eq.s32.totalorder %v2188, 0
        %v2191 = vxor.u32 %v2185, 2147483648
        %v2192 = vsel %vm2190, %v2177, %v2191
        %vm2193 = vcmp.eq.s32.totalorder %v2188, 2
        %v2194 = vxor.u32 %v2177, 2147483648
        %v2195 = vsel %vm2193, %v2194, %v2185
        %v2196 = vsel %vm2189, %v2192, %v2195
        %v2197 = vsel %vm2186, nan, %v2196
        %v2198 = vand.u32 2147483647, %v485
        %vm2199 = vcmp.le.f32.partialorder %v2198, 0.7853982
        %vm2200 = vcmp.lt.s32.totalorder %v485, 0
        %v2201 = vand.u32 %v485, 2139095040
        %v2202 = vshrl.u32 %v2201, 23
        %v2203 = vsub.s32 %v2202, 127
        %v2204 = vand.u32 2147483647, %v485
        %v2205 = vand.u32 %v2204, 8388607
        %v2206 = vor.u32 %v2205, 8388608
        %v2207 = vsub.s32 0, %v2206
        %v2208 = vadd.s32 %v2203, 1
        %vm2209 = vcmp.gt.s32.totalorder %v2208, 0
        %v2210 = vsel %vm2209, %v2208, 0
        %v2211 = vshrl.u32 %v2210, 5
        %v2212 = vand.u32 %v2210, 31
        %v2213 = vsub.s32 32, %v2212
        %v2214 = vshrl.u32 683565275, %v2213
        %v2215 = vshll.u32 683565275, %v2212
        %v2216 = vshrl.u32 2475754826, %v2213
        %v2217 = vor.u32 %v2215, %v2216
        %v2218 = vshll.u32 2475754826, %v2212
        %v2219 = vshrl.u32 2131351028, %v2213
        %v2220 = vor.u32 %v2218, %v2219
        %v2221 = vshll.u32 2131351028, %v2212
        %v2222 = vshrl.u32 2102212464, %v2213
        %v2223 = vor.u32 %v2221, %v2222
        %v2224 = vshll.u32 2102212464, %v2212
        %v2225 = vshrl.u32 920167782, %v2213
        %v2226 = vor.u32 %v2224, %v2225
        %v2227 = vshll.u32 920167782, %v2212
        %v2228 = vshrl.u32 1326507024, %v2213
        %v2229 = vor.u32 %v2227, %v2228
        %vm2230 = vcmp.lt.s32.totalorder %v2211, 1
        %vm2231 = vcmp.lt.s32.totalorder %v2211, 2
        %vm2232 = vcmp.lt.s32.totalorder %v2211, 3
        %vm2233 = vcmp.lt.s32.totalorder %v2211, 4
        %v2234 = vsel %vm2230, %v2214, %v2217
        %v2235 = vsel %vm2233, %v2223, 2102212464
        %v2236 = vsel %vm2232, %v2220, %v2235
        %v2237 = vsel %vm2231, %v2234, %v2236
        %v2238 = vsel %vm2230, %v2217, %v2220
        %v2239 = vsel %vm2233, %v2226, 920167782
        %v2240 = vsel %vm2232, %v2223, %v2239
        %v2241 = vsel %vm2231, %v2238, %v2240
        %v2242 = vsel %vm2230, %v2220, %v2223
        %v2243 = vsel %vm2233, %v2229, 1326507024
        %v2244 = vsel %vm2232, %v2226, %v2243
        %v2245 = vsel %vm2231, %v2242, %v2244
        %v2246 = vshll.u32 %v2206, 8
        %v2247 = vand.u32 %v2246, 65535
        %v2248 = vshrl.u32 %v2246, 16
        %v2249 = vand.u32 %v2245, 65535
        %v2250 = vshrl.u32 %v2245, 16
        %v2251 = vmul.u32 %v2247, %v2249
        %v2252 = vmul.u32 %v2247, %v2250
        %v2253 = vmul.u32 %v2248, %v2249
        %v2254 = vmul.u32 %v2248, %v2250
        %v2255 = vshll.u32 %v2252, 16
        %v2256 = vshrl.u32 %v2252, 16
        %v2257 = vshll.u32 %v2253, 16
        %v2258 = vshrl.u32 %v2253, 16
        %vm2259 = vc.u32 %v2251, %v2255
        %v2260 = vsel %vm2259, 1, 0
        %v2261 = vadd.s32 %v2251, %v2255
        %v2262 = vadd.s32 %v2254, %v2260
        %vm2263 = vc.u32 %v2261, %v2257
        %v2264 = vsel %vm2263, 1, 0
        %v2265 = vadd.s32 %v2261, %v2257
        %v2266 = vadd.s32 %v2262, %v2264
        %v2267 = vadd.s32 %v2266, %v2256
        %v2268 = vadd.s32 %v2267, %v2258
        %v2269 = vand.u32 %v2246, 65535
        %v2270 = vshrl.u32 %v2246, 16
        %v2271 = vand.u32 %v2241, 65535
        %v2272 = vshrl.u32 %v2241, 16
        %v2273 = vmul.u32 %v2269, %v2271
        %v2274 = vmul.u32 %v2269, %v2272
        %v2275 = vmul.u32 %v2270, %v2271
        %v2276 = vmul.u32 %v2270, %v2272
        %v2277 = vshll.u32 %v2274, 16
        %v2278 = vshrl.u32 %v2274, 16
        %v2279 = vshll.u32 %v2275, 16
        %v2280 = vshrl.u32 %v2275, 16
        %vm2281 = vc.u32 %v2273, %v2277
        %v2282 = vsel %vm2281, 1, 0
        %v2283 = vadd.s32 %v2273, %v2277
        %v2284 = vadd.s32 %v2276, %v2282
        %vm2285 = vc.u32 %v2283, %v2279
        %v2286 = vsel %vm2285, 1, 0
        %v2287 = vadd.s32 %v2283, %v2279
        %v2288 = vadd.s32 %v2284, %v2286
        %v2289 = vadd.s32 %v2288, %v2278
        %v2290 = vadd.s32 %v2289, %v2280
        %v2291 = vmul.u32 %v2246, %v2237
        %v2292 = vadd.s32 %v2268, %v2287
        %vm2293 = vc.u32 %v2268, %v2287
        %v2294 = vadd.s32 %v2290, 1
        %v2295 = vsel %vm2293, %v2294, %v2290
        %v2296 = vadd.s32 %v2291, %v2295
        %v2297 = vadd.s32 %v2296, 536870912
        %v2298 = vshrl.u32 %v2297, 30
        %v2299 = vshll.u32 %v2298, 30
        %v2300 = vsub.s32 %v2296, %v2299
        %vm2301 = vcmp.lt.s32.totalorder %v2300, 0
        %v2302 = vsub.s32 0, %v2300
        %v2303 = vsel %vm2301, %v2302, %v2300
        %v2304 = vclz %v2303
        %v2305 = vsub.s32 %v2304, 2
        %vm2306 = vcmp.gt.s32.totalorder 0, %v2305
        %v2307 = vsel %vm2306, 0, %v2305
        %v2308 = vsub.s32 32, %v2307
        %v2309 = vshll.u32 %v2300, %v2307
        %v2310 = vshrl.u32 %v2292, %v2308
        %v2311 = vor.u32 %v2309, %v2310
        %v2312 = vsub.s32 4294967266, %v2307
        %v2313 = vadd.s32 %v2312, 127
        %v2314 = vshll.u32 %v2313, 23
        %v2315 = vor.u32 4788187, %v2314
        %v2316 = vand.u32 2147483647, %v2315
        %v2318 = vcvt.s32.f32 %v2311
        %v2319 = vmul.f32 %v2318, %v2316
        %v2320 = vxor.u32 %v2319, 2147483648
        %v2321 = vsel %vm2200, %v2320, %v2319
        %v2322 = vsub.s32 4, %v2298
        %v2323 = vsel %vm2200, %v2322, %v2298
        %v2324 = vsel %vm2199, %v485, %v2321
        %v2325 = vsel %vm2199, 0, %v2323
        %v2326 = vmul.f32 %v2324, %v2324
        %v2327 = vmul.f32 %v2326, -0.001358992
        %v2328 = vadd.f32 %v2327, 0.041655596
        %v2329 = vmul.f32 %v2326, %v2328
        %v2330 = vadd.f32 %v2329, -0.4999988
        %v2331 = vmul.f32 %v2326, %v2330
        %v2332 = vadd.f32 1.0, %v2331
        %v2333 = vmul.f32 %v2324, %v2324
        %v2334 = vmul.f32 %v2333, -0.00019511016
        %v2335 = vadd.f32 %v2334, 0.008332121
        %v2336 = vmul.f32 %v2333, %v2335
        %v2337 = vadd.f32 %v2336, -0.16666654
        %v2338 = vmul.f32 %v2333, %v2337
        %v2339 = vadd.f32 %v2338, 1.0
        %v2340 = vmul.f32 %v2339, %v2324
        %vm2341 = vweird.f32 %v485
        %v2342 = vadd.s32 %v2325, 3
        %v2343 = vand.u32 %v2342, 3
        %vm2344 = vcmp.lt.s32.totalorder %v2343, 2
        %vm2345 = vcmp.eq.s32.totalorder %v2343, 0
        %v2346 = vxor.u32 %v2340, 2147483648
        %v2347 = vsel %vm2345, %v2332, %v2346
        %vm2348 = vcmp.eq.s32.totalorder %v2343, 2
        %v2349 = vxor.u32 %v2332, 2147483648
        %v2350 = vsel %vm2348, %v2349, %v2340
        %v2351 = vsel %vm2344, %v2347, %v2350
        %v2352 = vsel %vm2341, nan, %v2351
        %v2353 = vand.u32 2147483647, %v447
        %vm2354 = vcmp.le.f32.partialorder %v2353, 0.7853982
        %vm2355 = vcmp.lt.s32.totalorder %v447, 0
        %v2356 = vand.u32 %v447, 2139095040
        %v2357 = vshrl.u32 %v2356, 23
        %v2358 = vsub.s32 %v2357, 127
        %v2359 = vand.u32 2147483647, %v447
        %v2360 = vand.u32 %v2359, 8388607
        %v2361 = vor.u32 %v2360, 8388608
        %v2362 = vsub.s32 0, %v2361
        %v2363 = vadd.s32 %v2358, 1
        %vm2364 = vcmp.gt.s32.totalorder %v2363, 0
        %v2365 = vsel %vm2364, %v2363, 0
        %v2366 = vshrl.u32 %v2365, 5
        %v2367 = vand.u32 %v2365, 31
        %v2368 = vsub.s32 32, %v2367
        %v2369 = vshrl.u32 683565275, %v2368
        %v2370 = vshll.u32 683565275, %v2367
        %v2371 = vshrl.u32 2475754826, %v2368
        %v2372 = vor.u32 %v2370, %v2371
        %v2373 = vshll.u32 2475754826, %v2367
        %v2374 = vshrl.u32 2131351028, %v2368
        %v2375 = vor.u32 %v2373, %v2374
        %v2376 = vshll.u32 2131351028, %v2367
        %v2377 = vshrl.u32 2102212464, %v2368
        %v2378 = vor.u32 %v2376, %v2377
        %v2379 = vshll.u32 2102212464, %v2367
        %v2380 = vshrl.u32 920167782, %v2368
        %v2381 = vor.u32 %v2379, %v2380
        %v2382 = vshll.u32 920167782, %v2367
        %v2383 = vshrl.u32 1326507024, %v2368
        %v2384 = vor.u32 %v2382, %v2383
        %vm2385 = vcmp.lt.s32.totalorder %v2366, 1
        %vm2386 = vcmp.lt.s32.totalorder %v2366, 2
        %vm2387 = vcmp.lt.s32.totalorder %v2366, 3
        %vm2388 = vcmp.lt.s32.totalorder %v2366, 4
        %v2389 = vsel %vm2385, %v2369, %v2372
        %v2390 = vsel %vm2388, %v2378, 2102212464
        %v2391 = vsel %vm2387, %v2375, %v2390
        %v2392 = vsel %vm2386, %v2389, %v2391
        %v2393 = vsel %vm2385, %v2372, %v2375
        %v2394 = vsel %vm2388, %v2381, 920167782
        %v2395 = vsel %vm2387, %v2378, %v2394
        %v2396 = vsel %vm2386, %v2393, %v2395
        %v2397 = vsel %vm2385, %v2375, %v2378
        %v2398 = vsel %vm2388, %v2384, 1326507024
        %v2399 = vsel %vm2387, %v2381, %v2398
        %v2400 = vsel %vm2386, %v2397, %v2399
        %v2401 = vshll.u32 %v2361, 8
        %v2402 = vand.u32 %v2401, 65535
        %v2403 = vshrl.u32 %v2401, 16
        %v2404 = vand.u32 %v2400, 65535
        %v2405 = vshrl.u32 %v2400, 16
        %v2406 = vmul.u32 %v2402, %v2404
        %v2407 = vmul.u32 %v2402, %v2405
        %v2408 = vmul.u32 %v2403, %v2404
        %v2409 = vmul.u32 %v2403, %v2405
        %v2410 = vshll.u32 %v2407, 16
        %v2411 = vshrl.u32 %v2407, 16
        %v2412 = vshll.u32 %v2408, 16
        %v2413 = vshrl.u32 %v2408, 16
        %vm2414 = vc.u32 %v2406, %v2410
        %v2415 = vsel %vm2414, 1, 0
        %v2416 = vadd.s32 %v2406, %v2410
        %v2417 = vadd.s32 %v2409, %v2415
        %vm2418 = vc.u32 %v2416, %v2412
        %v2419 = vsel %vm2418, 1, 0
        %v2420 = vadd.s32 %v2416, %v2412
        %v2421 = vadd.s32 %v2417, %v2419
        %v2422 = vadd.s32 %v2421, %v2411
        %v2423 = vadd.s32 %v2422, %v2413
        %v2424 = vand.u32 %v2401, 65535
        %v2425 = vshrl.u32 %v2401, 16
        %v2426 = vand.u32 %v2396, 65535
        %v2427 = vshrl.u32 %v2396, 16
        %v2428 = vmul.u32 %v2424, %v2426
        %v2429 = vmul.u32 %v2424, %v2427
        %v2430 = vmul.u32 %v2425, %v2426
        %v2431 = vmul.u32 %v2425, %v2427
        %v2432 = vshll.u32 %v2429, 16
        %v2433 = vshrl.u32 %v2429, 16
        %v2434 = vshll.u32 %v2430, 16
        %v2435 = vshrl.u32 %v2430, 16
        %vm2436 = vc.u32 %v2428, %v2432
        %v2437 = vsel %vm2436, 1, 0
        %v2438 = vadd.s32 %v2428, %v2432
        %v2439 = vadd.s32 %v2431, %v2437
        %vm2440 = vc.u32 %v2438, %v2434
        %v2441 = vsel %vm2440, 1, 0
        %v2442 = vadd.s32 %v2438, %v2434
        %v2443 = vadd.s32 %v2439, %v2441
        %v2444 = vadd.s32 %v2443, %v2433
        %v2445 = vadd.s32 %v2444, %v2435
        %v2446 = vmul.u32 %v2401, %v2392
        %v2447 = vadd.s32 %v2423, %v2442
        %vm2448 = vc.u32 %v2423, %v2442
        %v2449 = vadd.s32 %v2445, 1
        %v2450 = vsel %vm2448, %v2449, %v2445
        %v2451 = vadd.s32 %v2446, %v2450
        %v2452 = vadd.s32 %v2451, 536870912
        %v2453 = vshrl.u32 %v2452, 30
        %v2454 = vshll.u32 %v2453, 30
        %v2455 = vsub.s32 %v2451, %v2454
        %vm2456 = vcmp.lt.s32.totalorder %v2455, 0
        %v2457 = vsub.s32 0, %v2455
        %v2458 = vsel %vm2456, %v2457, %v2455
        %v2459 = vclz %v2458
        %v2460 = vsub.s32 %v2459, 2
        %vm2461 = vcmp.gt.s32.totalorder 0, %v2460
        %v2462 = vsel %vm2461, 0, %v2460
        %v2463 = vsub.s32 32, %v2462
        %v2464 = vshll.u32 %v2455, %v2462
        %v2465 = vshrl.u32 %v2447, %v2463
        %v2466 = vor.u32 %v2464, %v2465
        %v2467 = vsub.s32 4294967266, %v2462
        %v2468 = vadd.s32 %v2467, 127
        %v2469 = vshll.u32 %v2468, 23
        %v2470 = vor.u32 4788187, %v2469
        %v2471 = vand.u32 2147483647, %v2470
        %v2473 = vcvt.s32.f32 %v2466
        %v2474 = vmul.f32 %v2473, %v2471
        %v2475 = vxor.u32 %v2474, 2147483648
        %v2476 = vsel %vm2355, %v2475, %v2474
        %v2477 = vsub.s32 4, %v2453
        %v2478 = vsel %vm2355, %v2477, %v2453
        %v2479 = vsel %vm2354, %v447, %v2476
        %v2480 = vsel %vm2354, 0, %v2478
        %v2481 = vmul.f32 %v2479, %v2479
        %v2482 = vmul.f32 %v2481, -0.001358992
        %v2483 = vadd.f32 %v2482, 0.041655596
        %v2484 = vmul.f32 %v2481, %v2483
        %v2485 = vadd.f32 %v2484, -0.4999988
        %v2486 = vmul.f32 %v2481, %v2485
        %v2487 = vadd.f32 1.0, %v2486
        %v2488 = vmul.f32 %v2479, %v2479
        %v2489 = vmul.f32 %v2488, -0.00019511016
        %v2490 = vadd.f32 %v2489, 0.008332121
        %v2491 = vmul.f32 %v2488, %v2490
        %v2492 = vadd.f32 %v2491, -0.16666654
        %v2493 = vmul.f32 %v2488, %v2492
        %v2494 = vadd.f32 %v2493, 1.0
        %v2495 = vmul.f32 %v2494, %v2479
        %vm2496 = vweird.f32 %v447
        %v2497 = vadd.s32 %v2480, 3
        %v2498 = vand.u32 %v2497, 3
        %vm2499 = vcmp.lt.s32.totalorder %v2498, 2
        %vm2500 = vcmp.eq.s32.totalorder %v2498, 0
        %v2501 = vxor.u32 %v2495, 2147483648
        %v2502 = vsel %vm2500, %v2487, %v2501
        %vm2503 = vcmp.eq.s32.totalorder %v2498, 2
        %v2504 = vxor.u32 %v2487, 2147483648
        %v2505 = vsel %vm2503, %v2504, %v2495
        %v2506 = vsel %vm2499, %v2502, %v2505
        %v2507 = vsel %vm2496, nan, %v2506
        %v2508 = vand.u32 2147483647, %v488
        %vm2509 = vcmp.le.f32.partialorder %v2508, 0.7853982
        %vm2510 = vcmp.lt.s32.totalorder %v488, 0
        %v2511 = vand.u32 %v488, 2139095040
        %v2512 = vshrl.u32 %v2511, 23
        %v2513 = vsub.s32 %v2512, 127
        %v2514 = vand.u32 2147483647, %v488
        %v2515 = vand.u32 %v2514, 8388607
        %v2516 = vor.u32 %v2515, 8388608
        %v2517 = vsub.s32 0, %v2516
        %v2518 = vadd.s32 %v2513, 1
        %vm2519 = vcmp.gt.s32.totalorder %v2518, 0
        %v2520 = vsel %vm2519, %v2518, 0
        %v2521 = vshrl.u32 %v2520, 5
        %v2522 = vand.u32 %v2520, 31
        %v2523 = vsub.s32 32, %v2522
        %v2524 = vshrl.u32 683565275, %v2523
        %v2525 = vshll.u32 683565275, %v2522
        %v2526 = vshrl.u32 2475754826, %v2523
        %v2527 = vor.u32 %v2525, %v2526
        %v2528 = vshll.u32 2475754826, %v2522
        %v2529 = vshrl.u32 2131351028, %v2523
        %v2530 = vor.u32 %v2528, %v2529
        %v2531 = vshll.u32 2131351028, %v2522
        %v2532 = vshrl.u32 2102212464, %v2523
        %v2533 = vor.u32 %v2531, %v2532
        %v2534 = vshll.u32 2102212464, %v2522
        %v2535 = vshrl.u32 920167782, %v2523
        %v2536 = vor.u32 %v2534, %v2535
        %v2537 = vshll.u32 920167782, %v2522
        %v2538 = vshrl.u32 1326507024, %v2523
        %v2539 = vor.u32 %v2537, %v2538
        %vm2540 = vcmp.lt.s32.totalorder %v2521, 1
        %vm2541 = vcmp.lt.s32.totalorder %v2521, 2
        %vm2542 = vcmp.lt.s32.totalorder %v2521, 3
        %vm2543 = vcmp.lt.s32.totalorder %v2521, 4
        %v2544 = vsel %vm2540, %v2524, %v2527
        %v2545 = vsel %vm2543, %v2533, 2102212464
        %v2546 = vsel %vm2542, %v2530, %v2545
        %v2547 = vsel %vm2541, %v2544, %v2546
        %v2548 = vsel %vm2540, %v2527, %v2530
        %v2549 = vsel %vm2543, %v2536, 920167782
        %v2550 = vsel %vm2542, %v2533, %v2549
        %v2551 = vsel %vm2541, %v2548, %v2550
        %v2552 = vsel %vm2540, %v2530, %v2533
        %v2553 = vsel %vm2543, %v2539, 1326507024
        %v2554 = vsel %vm2542, %v2536, %v2553
        %v2555 = vsel %vm2541, %v2552, %v2554
        %v2556 = vshll.u32 %v2516, 8
        %v2557 = vand.u32 %v2556, 65535
        %v2558 = vshrl.u32 %v2556, 16
        %v2559 = vand.u32 %v2555, 65535
        %v2560 = vshrl.u32 %v2555, 16
        %v2561 = vmul.u32 %v2557, %v2559
        %v2562 = vmul.u32 %v2557, %v2560
        %v2563 = vmul.u32 %v2558, %v2559
        %v2564 = vmul.u32 %v2558, %v2560
        %v2565 = vshll.u32 %v2562, 16
        %v2566 = vshrl.u32 %v2562, 16
        %v2567 = vshll.u32 %v2563, 16
        %v2568 = vshrl.u32 %v2563, 16
        %vm2569 = vc.u32 %v2561, %v2565
        %v2570 = vsel %vm2569, 1, 0
        %v2571 = vadd.s32 %v2561, %v2565
        %v2572 = vadd.s32 %v2564, %v2570
        %vm2573 = vc.u32 %v2571, %v2567
        %v2574 = vsel %vm2573, 1, 0
        %v2575 = vadd.s32 %v2571, %v2567
        %v2576 = vadd.s32 %v2572, %v2574
        %v2577 = vadd.s32 %v2576, %v2566
        %v2578 = vadd.s32 %v2577, %v2568
        %v2579 = vand.u32 %v2556, 65535
        %v2580 = vshrl.u32 %v2556, 16
        %v2581 = vand.u32 %v2551, 65535
        %v2582 = vshrl.u32 %v2551, 16
        %v2583 = vmul.u32 %v2579, %v2581
        %v2584 = vmul.u32 %v2579, %v2582
        %v2585 = vmul.u32 %v2580, %v2581
        %v2586 = vmul.u32 %v2580, %v2582
        %v2587 = vshll.u32 %v2584, 16
        %v2588 = vshrl.u32 %v2584, 16
        %v2589 = vshll.u32 %v2585, 16
        %v2590 = vshrl.u32 %v2585, 16
        %vm2591 = vc.u32 %v2583, %v2587
        %v2592 = vsel %vm2591, 1, 0
        %v2593 = vadd.s32 %v2583, %v2587
        %v2594 = vadd.s32 %v2586, %v2592
        %vm2595 = vc.u32 %v2593, %v2589
        %v2596 = vsel %vm2595, 1, 0
        %v2597 = vadd.s32 %v2593, %v2589
        %v2598 = vadd.s32 %v2594, %v2596
        %v2599 = vadd.s32 %v2598, %v2588
        %v2600 = vadd.s32 %v2599, %v2590
        %v2601 = vmul.u32 %v2556, %v2547
        %v2602 = vadd.s32 %v2578, %v2597
        %vm2603 = vc.u32 %v2578, %v2597
        %v2604 = vadd.s32 %v2600, 1
        %v2605 = vsel %vm2603, %v2604, %v2600
        %v2606 = vadd.s32 %v2601, %v2605
        %v2607 = vadd.s32 %v2606, 536870912
        %v2608 = vshrl.u32 %v2607, 30
        %v2609 = vshll.u32 %v2608, 30
        %v2610 = vsub.s32 %v2606, %v2609
        %vm2611 = vcmp.lt.s32.totalorder %v2610, 0
        %v2612 = vsub.s32 0, %v2610
        %v2613 = vsel %vm2611, %v2612, %v2610
        %v2614 = vclz %v2613
        %v2615 = vsub.s32 %v2614, 2
        %vm2616 = vcmp.gt.s32.totalorder 0, %v2615
        %v2617 = vsel %vm2616, 0, %v2615
        %v2618 = vsub.s32 32, %v2617
        %v2619 = vshll.u32 %v2610, %v2617
        %v2620 = vshrl.u32 %v2602, %v2618
        %v2621 = vor.u32 %v2619, %v2620
        %v2622 = vsub.s32 4294967266, %v2617
        %v2623 = vadd.s32 %v2622, 127
        %v2624 = vshll.u32 %v2623, 23
        %v2625 = vor.u32 4788187, %v2624
        %v2626 = vand.u32 2147483647, %v2625
        %v2628 = vcvt.s32.f32 %v2621
        %v2629 = vmul.f32 %v2628, %v2626
        %v2630 = vxor.u32 %v2629, 2147483648
        %v2631 = vsel %vm2510, %v2630, %v2629
        %v2632 = vsub.s32 4, %v2608
        %v2633 = vsel %vm2510, %v2632, %v2608
        %v2634 = vsel %vm2509, %v488, %v2631
        %v2635 = vsel %vm2509, 0, %v2633
        %v2636 = vmul.f32 %v2634, %v2634
        %v2637 = vmul.f32 %v2636, -0.001358992
        %v2638 = vadd.f32 %v2637, 0.041655596
        %v2639 = vmul.f32 %v2636, %v2638
        %v2640 = vadd.f32 %v2639, -0.4999988
        %v2641 = vmul.f32 %v2636, %v2640
        %v2642 = vadd.f32 1.0, %v2641
        %v2643 = vmul.f32 %v2634, %v2634
        %v2644 = vmul.f32 %v2643, -0.00019511016
        %v2645 = vadd.f32 %v2644, 0.008332121
        %v2646 = vmul.f32 %v2643, %v2645
        %v2647 = vadd.f32 %v2646, -0.16666654
        %v2648 = vmul.f32 %v2643, %v2647
        %v2649 = vadd.f32 %v2648, 1.0
        %v2650 = vmul.f32 %v2649, %v2634
        %vm2651 = vweird.f32 %v488
        %v2652 = vadd.s32 %v2635, 3
        %v2653 = vand.u32 %v2652, 3
        %vm2654 = vcmp.lt.s32.totalorder %v2653, 2
        %vm2655 = vcmp.eq.s32.totalorder %v2653, 0
        %v2656 = vxor.u32 %v2650, 2147483648
        %v2657 = vsel %vm2655, %v2642, %v2656
        %vm2658 = vcmp.eq.s32.totalorder %v2653, 2
        %v2659 = vxor.u32 %v2642, 2147483648
        %v2660 = vsel %vm2658, %v2659, %v2650
        %v2661 = vsel %vm2654, %v2657, %v2660
        %v2662 = vsel %vm2651, nan, %v2661
        %v2663 = vand.u32 2147483647, %v450
        %vm2664 = vcmp.le.f32.partialorder %v2663, 0.7853982
        %vm2665 = vcmp.lt.s32.totalorder %v450, 0
        %v2666 = vand.u32 %v450, 2139095040
        %v2667 = vshrl.u32 %v2666, 23
        %v2668 = vsub.s32 %v2667, 127
        %v2669 = vand.u32 2147483647, %v450
        %v2670 = vand.u32 %v2669, 8388607
        %v2671 = vor.u32 %v2670, 8388608
        %v2672 = vsub.s32 0, %v2671
        %v2673 = vadd.s32 %v2668, 1
        %vm2674 = vcmp.gt.s32.totalorder %v2673, 0
        %v2675 = vsel %vm2674, %v2673, 0
        %v2676 = vshrl.u32 %v2675, 5
        %v2677 = vand.u32 %v2675, 31
        %v2678 = vsub.s32 32, %v2677
        %v2679 = vshrl.u32 683565275, %v2678
        %v2680 = vshll.u32 683565275, %v2677
        %v2681 = vshrl.u32 2475754826, %v2678
        %v2682 = vor.u32 %v2680, %v2681
        %v2683 = vshll.u32 2475754826, %v2677
        %v2684 = vshrl.u32 2131351028, %v2678
        %v2685 = vor.u32 %v2683, %v2684
        %v2686 = vshll.u32 2131351028, %v2677
        %v2687 = vshrl.u32 2102212464, %v2678
        %v2688 = vor.u32 %v2686, %v2687
        %v2689 = vshll.u32 2102212464, %v2677
        %v2690 = vshrl.u32 920167782, %v2678
        %v2691 = vor.u32 %v2689, %v2690
        %v2692 = vshll.u32 920167782, %v2677
        %v2693 = vshrl.u32 1326507024, %v2678
        %v2694 = vor.u32 %v2692, %v2693
        %vm2695 = vcmp.lt.s32.totalorder %v2676, 1
        %vm2696 = vcmp.lt.s32.totalorder %v2676, 2
        %vm2697 = vcmp.lt.s32.totalorder %v2676, 3
        %vm2698 = vcmp.lt.s32.totalorder %v2676, 4
        %v2699 = vsel %vm2695, %v2679, %v2682
        %v2700 = vsel %vm2698, %v2688, 2102212464
        %v2701 = vsel %vm2697, %v2685, %v2700
        %v2702 = vsel %vm2696, %v2699, %v2701
        %v2703 = vsel %vm2695, %v2682, %v2685
        %v2704 = vsel %vm2698, %v2691, 920167782
        %v2705 = vsel %vm2697, %v2688, %v2704
        %v2706 = vsel %vm2696, %v2703, %v2705
        %v2707 = vsel %vm2695, %v2685, %v2688
        %v2708 = vsel %vm2698, %v2694, 1326507024
        %v2709 = vsel %vm2697, %v2691, %v2708
        %v2710 = vsel %vm2696, %v2707, %v2709
        %v2711 = vshll.u32 %v2671, 8
        %v2712 = vand.u32 %v2711, 65535
        %v2713 = vshrl.u32 %v2711, 16
        %v2714 = vand.u32 %v2710, 65535
        %v2715 = vshrl.u32 %v2710, 16
        %v2716 = vmul.u32 %v2712, %v2714
        %v2717 = vmul.u32 %v2712, %v2715
        %v2718 = vmul.u32 %v2713, %v2714
        %v2719 = vmul.u32 %v2713, %v2715
        %v2720 = vshll.u32 %v2717, 16
        %v2721 = vshrl.u32 %v2717, 16
        %v2722 = vshll.u32 %v2718, 16
        %v2723 = vshrl.u32 %v2718, 16
        %vm2724 = vc.u32 %v2716, %v2720
        %v2725 = vsel %vm2724, 1, 0
        %v2726 = vadd.s32 %v2716, %v2720
        %v2727 = vadd.s32 %v2719, %v2725
        %vm2728 = vc.u32 %v2726, %v2722
        %v2729 = vsel %vm2728, 1, 0
        %v2730 = vadd.s32 %v2726, %v2722
        %v2731 = vadd.s32 %v2727, %v2729
        %v2732 = vadd.s32 %v2731, %v2721
        %v2733 = vadd.s32 %v2732, %v2723
        %v2734 = vand.u32 %v2711, 65535
        %v2735 = vshrl.u32 %v2711, 16
        %v2736 = vand.u32 %v2706, 65535
        %v2737 = vshrl.u32 %v2706, 16
        %v2738 = vmul.u32 %v2734, %v2736
        %v2739 = vmul.u32 %v2734, %v2737
        %v2740 = vmul.u32 %v2735, %v2736
        %v2741 = vmul.u32 %v2735, %v2737
        %v2742 = vshll.u32 %v2739, 16
        %v2743 = vshrl.u32 %v2739, 16
        %v2744 = vshll.u32 %v2740, 16
        %v2745 = vshrl.u32 %v2740, 16
        %vm2746 = vc.u32 %v2738, %v2742
        %v2747 = vsel %vm2746, 1, 0
        %v2748 = vadd.s32 %v2738, %v2742
        %v2749 = vadd.s32 %v2741, %v2747
        %vm2750 = vc.u32 %v2748, %v2744
        %v2751 = vsel %vm2750, 1, 0
        %v2752 = vadd.s32 %v2748, %v2744
        %v2753 = vadd.s32 %v2749, %v2751
        %v2754 = vadd.s32 %v2753, %v2743
        %v2755 = vadd.s32 %v2754, %v2745
        %v2756 = vmul.u32 %v2711, %v2702
        %v2757 = vadd.s32 %v2733, %v2752
        %vm2758 = vc.u32 %v2733, %v2752
        %v2759 = vadd.s32 %v2755, 1
        %v2760 = vsel %vm2758, %v2759, %v2755
        %v2761 = vadd.s32 %v2756, %v2760
        %v2762 = vadd.s32 %v2761, 536870912
        %v2763 = vshrl.u32 %v2762, 30
        %v2764 = vshll.u32 %v2763, 30
        %v2765 = vsub.s32 %v2761, %v2764
        %vm2766 = vcmp.lt.s32.totalorder %v2765, 0
        %v2767 = vsub.s32 0, %v2765
        %v2768 = vsel %vm2766, %v2767, %v2765
        %v2769 = vclz %v2768
        %v2770 = vsub.s32 %v2769, 2
        %vm2771 = vcmp.gt.s32.totalorder 0, %v2770
        %v2772 = vsel %vm2771, 0, %v2770
        %v2773 = vsub.s32 32, %v2772
        %v2774 = vshll.u32 %v2765, %v2772
        %v2775 = vshrl.u32 %v2757, %v2773
        %v2776 = vor.u32 %v2774, %v2775
        %v2777 = vsub.s32 4294967266, %v2772
        %v2778 = vadd.s32 %v2777, 127
        %v2779 = vshll.u32 %v2778, 23
        %v2780 = vor.u32 4788187, %v2779
        %v2781 = vand.u32 2147483647, %v2780
        %v2783 = vcvt.s32.f32 %v2776
        %v2784 = vmul.f32 %v2783, %v2781
        %v2785 = vxor.u32 %v2784, 2147483648
        %v2786 = vsel %vm2665, %v2785, %v2784
        %v2787 = vsub.s32 4, %v2763
        %v2788 = vsel %vm2665, %v2787, %v2763
        %v2789 = vsel %vm2664, %v450, %v2786
        %v2790 = vsel %vm2664, 0, %v2788
        %v2791 = vmul.f32 %v2789, %v2789
        %v2792 = vmul.f32 %v2791, -0.001358992
        %v2793 = vadd.f32 %v2792, 0.041655596
        %v2794 = vmul.f32 %v2791, %v2793
        %v2795 = vadd.f32 %v2794, -0.4999988
        %v2796 = vmul.f32 %v2791, %v2795
        %v2797 = vadd.f32 1.0, %v2796
        %v2798 = vmul.f32 %v2789, %v2789
        %v2799 = vmul.f32 %v2798, -0.00019511016
        %v2800 = vadd.f32 %v2799, 0.008332121
        %v2801 = vmul.f32 %v2798, %v2800
        %v2802 = vadd.f32 %v2801, -0.16666654
        %v2803 = vmul.f32 %v2798, %v2802
        %v2804 = vadd.f32 %v2803, 1.0
        %v2805 = vmul.f32 %v2804, %v2789
        %vm2806 = vweird.f32 %v450
        %v2807 = vadd.s32 %v2790, 3
        %v2808 = vand.u32 %v2807, 3
        %vm2809 = vcmp.lt.s32.totalorder %v2808, 2
        %vm2810 = vcmp.eq.s32.totalorder %v2808, 0
        %v2811 = vxor.u32 %v2805, 2147483648
        %v2812 = vsel %vm2810, %v2797, %v2811
        %vm2813 = vcmp.eq.s32.totalorder %v2808, 2
        %v2814 = vxor.u32 %v2797, 2147483648
        %v2815 = vsel %vm2813, %v2814, %v2805
        %v2816 = vsel %vm2809, %v2812, %v2815
        %v2817 = vsel %vm2806, nan, %v2816
        %v2818 = vand.u32 2147483647, %v491
        %vm2819 = vcmp.le.f32.partialorder %v2818, 0.7853982
        %vm2820 = vcmp.lt.s32.totalorder %v491, 0
        %v2821 = vand.u32 %v491, 2139095040
        %v2822 = vshrl.u32 %v2821, 23
        %v2823 = vsub.s32 %v2822, 127
        %v2824 = vand.u32 2147483647, %v491
        %v2825 = vand.u32 %v2824, 8388607
        %v2826 = vor.u32 %v2825, 8388608
        %v2827 = vsub.s32 0, %v2826
        %v2828 = vadd.s32 %v2823, 1
        %vm2829 = vcmp.gt.s32.totalorder %v2828, 0
        %v2830 = vsel %vm2829, %v2828, 0
        %v2831 = vshrl.u32 %v2830, 5
        %v2832 = vand.u32 %v2830, 31
        %v2833 = vsub.s32 32, %v2832
        %v2834 = vshrl.u32 683565275, %v2833
        %v2835 = vshll.u32 683565275, %v2832
        %v2836 = vshrl.u32 2475754826, %v2833
        %v2837 = vor.u32 %v2835, %v2836
        %v2838 = vshll.u32 2475754826, %v2832
        %v2839 = vshrl.u32 2131351028, %v2833
        %v2840 = vor.u32 %v2838, %v2839
        %v2841 = vshll.u32 2131351028, %v2832
        %v2842 = vshrl.u32 2102212464, %v2833
        %v2843 = vor.u32 %v2841, %v2842
        %v2844 = vshll.u32 2102212464, %v2832
        %v2845 = vshrl.u32 920167782, %v2833
        %v2846 = vor.u32 %v2844, %v2845
        %v2847 = vshll.u32 920167782, %v2832
        %v2848 = vshrl.u32 1326507024, %v2833
        %v2849 = vor.u32 %v2847, %v2848
        %vm2850 = vcmp.lt.s32.totalorder %v2831, 1
        %vm2851 = vcmp.lt.s32.totalorder %v2831, 2
        %vm2852 = vcmp.lt.s32.totalorder %v2831, 3
        %vm2853 = vcmp.lt.s32.totalorder %v2831, 4
        %v2854 = vsel %vm2850, %v2834, %v2837
        %v2855 = vsel %vm2853, %v2843, 2102212464
        %v2856 = vsel %vm2852, %v2840, %v2855
        %v2857 = vsel %vm2851, %v2854, %v2856
        %v2858 = vsel %vm2850, %v2837, %v2840
        %v2859 = vsel %vm2853, %v2846, 920167782
        %v2860 = vsel %vm2852, %v2843, %v2859
        %v2861 = vsel %vm2851, %v2858, %v2860
        %v2862 = vsel %vm2850, %v2840, %v2843
        %v2863 = vsel %vm2853, %v2849, 1326507024
        %v2864 = vsel %vm2852, %v2846, %v2863
        %v2865 = vsel %vm2851, %v2862, %v2864
        %v2866 = vshll.u32 %v2826, 8
        %v2867 = vand.u32 %v2866, 65535
        %v2868 = vshrl.u32 %v2866, 16
        %v2869 = vand.u32 %v2865, 65535
        %v2870 = vshrl.u32 %v2865, 16
        %v2871 = vmul.u32 %v2867, %v2869
        %v2872 = vmul.u32 %v2867, %v2870
        %v2873 = vmul.u32 %v2868, %v2869
        %v2874 = vmul.u32 %v2868, %v2870
        %v2875 = vshll.u32 %v2872, 16
        %v2876 = vshrl.u32 %v2872, 16
        %v2877 = vshll.u32 %v2873, 16
        %v2878 = vshrl.u32 %v2873, 16
        %vm2879 = vc.u32 %v2871, %v2875
        %v2880 = vsel %vm2879, 1, 0
        %v2881 = vadd.s32 %v2871, %v2875
        %v2882 = vadd.s32 %v2874, %v2880
        %vm2883 = vc.u32 %v2881, %v2877
        %v2884 = vsel %vm2883, 1, 0
        %v2885 = vadd.s32 %v2881, %v2877
        %v2886 = vadd.s32 %v2882, %v2884
        %v2887 = vadd.s32 %v2886, %v2876
        %v2888 = vadd.s32 %v2887, %v2878
        %v2889 = vand.u32 %v2866, 65535
        %v2890 = vshrl.u32 %v2866, 16
        %v2891 = vand.u32 %v2861, 65535
        %v2892 = vshrl.u32 %v2861, 16
        %v2893 = vmul.u32 %v2889, %v2891
        %v2894 = vmul.u32 %v2889, %v2892
        %v2895 = vmul.u32 %v2890, %v2891
        %v2896 = vmul.u32 %v2890, %v2892
        %v2897 = vshll.u32 %v2894, 16
        %v2898 = vshrl.u32 %v2894, 16
        %v2899 = vshll.u32 %v2895, 16
        %v2900 = vshrl.u32 %v2895, 16
        %vm2901 = vc.u32 %v2893, %v2897
        %v2902 = vsel %vm2901, 1, 0
        %v2903 = vadd.s32 %v2893, %v2897
        %v2904 = vadd.s32 %v2896, %v2902
        %vm2905 = vc.u32 %v2903, %v2899
        %v2906 = vsel %vm2905, 1, 0
        %v2907 = vadd.s32 %v2903, %v2899
        %v2908 = vadd.s32 %v2904, %v2906
        %v2909 = vadd.s32 %v2908, %v2898
        %v2910 = vadd.s32 %v2909, %v2900
        %v2911 = vmul.u32 %v2866, %v2857
        %v2912 = vadd.s32 %v2888, %v2907
        %vm2913 = vc.u32 %v2888, %v2907
        %v2914 = vadd.s32 %v2910, 1
        %v2915 = vsel %vm2913, %v2914, %v2910
        %v2916 = vadd.s32 %v2911, %v2915
        %v2917 = vadd.s32 %v2916, 536870912
        %v2918 = vshrl.u32 %v2917, 30
        %v2919 = vshll.u32 %v2918, 30
        %v2920 = vsub.s32 %v2916, %v2919
        %vm2921 = vcmp.lt.s32.totalorder %v2920, 0
        %v2922 = vsub.s32 0, %v2920
        %v2923 = vsel %vm2921, %v2922, %v2920
        %v2924 = vclz %v2923
        %v2925 = vsub.s32 %v2924, 2
        %vm2926 = vcmp.gt.s32.totalorder 0, %v2925
        %v2927 = vsel %vm2926, 0, %v2925
        %v2928 = vsub.s32 32, %v2927
        %v2929 = vshll.u32 %v2920, %v2927
        %v2930 = vshrl.u32 %v2912, %v2928
        %v2931 = vor.u32 %v2929, %v2930
        %v2932 = vsub.s32 4294967266, %v2927
        %v2933 = vadd.s32 %v2932, 127
        %v2934 = vshll.u32 %v2933, 23
        %v2935 = vor.u32 4788187, %v2934
        %v2936 = vand.u32 2147483647, %v2935
        %v2938 = vcvt.s32.f32 %v2931
        %v2939 = vmul.f32 %v2938, %v2936
        %v2940 = vxor.u32 %v2939, 2147483648
        %v2941 = vsel %vm2820, %v2940, %v2939
        %v2942 = vsub.s32 4, %v2918
        %v2943 = vsel %vm2820, %v2942, %v2918
        %v2944 = vsel %vm2819, %v491, %v2941
        %v2945 = vsel %vm2819, 0, %v2943
        %v2946 = vmul.f32 %v2944, %v2944
        %v2947 = vmul.f32 %v2946, -0.001358992
        %v2948 = vadd.f32 %v2947, 0.041655596
        %v2949 = vmul.f32 %v2946, %v2948
        %v2950 = vadd.f32 %v2949, -0.4999988
        %v2951 = vmul.f32 %v2946, %v2950
        %v2952 = vadd.f32 1.0, %v2951
        %v2953 = vmul.f32 %v2944, %v2944
        %v2954 = vmul.f32 %v2953, -0.00019511016
        %v2955 = vadd.f32 %v2954, 0.008332121
        %v2956 = vmul.f32 %v2953, %v2955
        %v2957 = vadd.f32 %v2956, -0.16666654
        %v2958 = vmul.f32 %v2953, %v2957
        %v2959 = vadd.f32 %v2958, 1.0
        %v2960 = vmul.f32 %v2959, %v2944
        %vm2961 = vweird.f32 %v491
        %v2962 = vadd.s32 %v2945, 3
        %v2963 = vand.u32 %v2962, 3
        %vm2964 = vcmp.lt.s32.totalorder %v2963, 2
        %vm2965 = vcmp.eq.s32.totalorder %v2963, 0
        %v2966 = vxor.u32 %v2960, 2147483648
        %v2967 = vsel %vm2965, %v2952, %v2966
        %vm2968 = vcmp.eq.s32.totalorder %v2963, 2
        %v2969 = vxor.u32 %v2952, 2147483648
        %v2970 = vsel %vm2968, %v2969, %v2960
        %v2971 = vsel %vm2964, %v2967, %v2970
        %v2972 = vsel %vm2961, nan, %v2971
        %v2973 = vld [vmem:[%s3] sm:$0xf]
        %v2974 = vld [vmem:[%s3 + $0x4] sm:$0xf]
        %v2975 = vld [vmem:[%s3 + $0x8] sm:$0xf]
        %v2976 = vld [vmem:[%s3 + $0xc] sm:$0xf]
        %v2977 = vpack.c.bf16 %v957, %v647
        %v2978 = vpack.c.bf16 %v1112, %v802
        %v2979 = vpack.c.bf16 %v1577, %v1267
        %v2980 = vpack.c.bf16 %v1732, %v1422
        %v2981 = vld [vmem:[%s4] sm:$0xff]
        %v2982 = vld [vmem:[%s4 + $0x8] sm:$0xff]
        %v2983 = vld [vmem:[%s4 + $0x10] sm:$0xff]
        %v2984 = vld [vmem:[%s4 + $0x18] sm:$0xff]
        %2986 = vset.pattern.permute.xlu0 0
        %2987 = vperm.xlu0 %2986, %v2981
        %v2988 = vpop.permute.xlu0 %2987
        %2991 = vset.pattern.permute.xlu0 0
        %2992 = vperm.xlu0 %2991, %v2982
        %v2993 = vpop.permute.xlu0 %2992
        %2996 = vset.pattern.permute.xlu0 0
        %2997 = vperm.xlu0 %2996, %v2983
        %v2998 = vpop.permute.xlu0 %2997
        %3001 = vset.pattern.permute.xlu0 0
        %3002 = vperm.xlu0 %3001, %v2984
        %v3003 = vpop.permute.xlu0 %3002
        %v3009 = vunpack.c.l.b16 %v2973
        %v3010 = vunpack.c.l.b16 %v2974
        %v3011 = vunpack.c.l.b16 %v2975
        %v3012 = vunpack.c.l.b16 %v2976
        %v3013 = vpack.c.b16 %v3010, %v3009
        %v3014 = vpack.c.b16 %v3012, %v3011
        %vm3015 = vcmask 261120
        %v3017 = vsel %vm3015, %v3013, 0
        %v3020 = vsel %vm3015, %v3014, 0
        %3022 = vmatpush.bf16.msra.mxu0 0
        %3023 = vmatpush.bf16.msra.mxu0 0
        %3024 = vmatpush.bf16.msra.mxu0 0
        %3025 = vmatpush.bf16.msra.mxu0 0
        %3026 = vmatpush.bf16.msra.mxu0 0
        %3027 = vmatpush.bf16.msra.mxu0 0
        %3028 = vmatpush.bf16.msra.mxu0 %v2979
        %3029 = vmatpush.bf16.msra.mxu0 %v2977
        %3030 = vmatmul.bf16.gmra.mxu0 %v3017
        %v3031 = vpop.f32.mrf.mxu0
        %v3032 = vadd.f32 %v2988, %v3031
        %v3033 = vpop.f32.mrf.mxu0
        %v3034 = vadd.f32 %v2993, %v3033
        %3035 = vmatmul.bf16.gmra.mxu0 %v3020
        %v3036 = vpop.f32.mrf.mxu0
        %v3037 = vadd.f32 %v2998, %v3036
        %v3038 = vpop.f32.mrf.mxu0
        %v3039 = vadd.f32 %v3003, %v3038
        %3040 = vdwg.mxu0
        %3041 = vmatpush.bf16.msra.mxu0 0
        %3042 = vmatpush.bf16.msra.mxu0 0
        %3043 = vmatpush.bf16.msra.mxu0 0
        %3044 = vmatpush.bf16.msra.mxu0 0
        %3045 = vmatpush.bf16.msra.mxu0 0
        %3046 = vmatpush.bf16.msra.mxu0 0
        %3047 = vmatpush.bf16.msra.mxu0 %v2980
        %3048 = vmatpush.bf16.msra.mxu0 %v2978
        %3049 = vmatmul.bf16.gmra.mxu0 %v3017
        %v3050 = vpop.f32.mrf.mxu0
        %v3051 = vadd.f32 %v2988, %v3050
        %v3052 = vpop.f32.mrf.mxu0
        %v3053 = vadd.f32 %v2993, %v3052
        %3054 = vmatmul.bf16.gmra.mxu0 %v3020
        %v3055 = vpop.f32.mrf.mxu0
        %v3056 = vadd.f32 %v2998, %v3055
        %v3057 = vpop.f32.mrf.mxu0
        %v3058 = vadd.f32 %v3003, %v3057
        %3059 = vdwg.mxu0
        %v3060 = vmul.f32 %v3032, %v1887
        %v3061 = vmul.f32 %v3034, %v2197
        %v3062 = vmul.f32 %v3037, %v2507
        %v3063 = vmul.f32 %v3039, %v2817
        %v3064 = vmul.f32 %v3051, %v2042
        %v3065 = vmul.f32 %v3053, %v2352
        %v3066 = vmul.f32 %v3056, %v2662
        %v3067 = vmul.f32 %v3058, %v2972
        %v3068 = vpack.c.bf16 %v3061, %v3060
        %v3069 = vpack.c.bf16 %v3063, %v3062
        %3070 = vmatpush.bf16.msra.mxu0 0
        %3071 = vmatpush.bf16.msra.mxu0 0
        %3072 = vmatpush.bf16.msra.mxu0 0
        %3073 = vmatpush.bf16.msra.mxu0 0
        %3074 = vmatpush.bf16.msra.mxu0 0
        %3075 = vmatpush.bf16.msra.mxu0 0
        %3076 = vmatpush.bf16.msra.mxu0 %v3069
        %3077 = vmatpush.bf16.msra.mxu0 %v3068
        %3078 = vmatmul.bf16.gmra.mxu0 %v3017
        %v3079 = vpop.f32.mrf.mxu0
        %v3080 = vadd.f32 %v3032, %v3079
        %v3081 = vpop.f32.mrf.mxu0
        %v3082 = vadd.f32 %v3034, %v3081
        %3083 = vmatmul.bf16.gmra.mxu0 %v3020
        %v3084 = vpop.f32.mrf.mxu0
        %v3085 = vadd.f32 %v3037, %v3084
        %v3086 = vpop.f32.mrf.mxu0
        %v3087 = vadd.f32 %v3039, %v3086
        %3088 = vdwg.mxu0
        %v3089 = vmul.f32 %v3080, %v1887
        %v3090 = vmul.f32 %v3082, %v2197
        %v3091 = vmul.f32 %v3085, %v2507
        %v3092 = vmul.f32 %v3087, %v2817
        %v3093 = vpack.c.bf16 %v3065, %v3064
        %v3094 = vpack.c.bf16 %v3067, %v3066
        %3095 = vmatpush.bf16.msra.mxu0 0
        %3096 = vmatpush.bf16.msra.mxu0 0
        %3097 = vmatpush.bf16.msra.mxu0 0
        %3098 = vmatpush.bf16.msra.mxu0 0
        %3099 = vmatpush.bf16.msra.mxu0 0
        %3100 = vmatpush.bf16.msra.mxu0 0
        %3101 = vmatpush.bf16.msra.mxu0 %v3094
        %3102 = vmatpush.bf16.msra.mxu0 %v3093
        %3103 = vmatmul.bf16.gmra.mxu0 %v3017
        %v3104 = vpop.f32.mrf.mxu0
        %v3105 = vadd.f32 %v3051, %v3104
        %v3106 = vpop.f32.mrf.mxu0
        %v3107 = vadd.f32 %v3053, %v3106
        %3108 = vmatmul.bf16.gmra.mxu0 %v3020
        %v3109 = vpop.f32.mrf.mxu0
        %v3110 = vadd.f32 %v3056, %v3109
        %v3111 = vpop.f32.mrf.mxu0
        %v3112 = vadd.f32 %v3058, %v3111
        %3113 = vdwg.mxu0
        %v3114 = vmul.f32 %v3105, %v2042
        %v3115 = vmul.f32 %v3107, %v2352
        %v3116 = vmul.f32 %v3110, %v2662
        %v3117 = vmul.f32 %v3112, %v2972
        %v3118 = vpack.c.bf16 %v3090, %v3089
        %v3119 = vpack.c.bf16 %v3092, %v3091
        %3120 = vmatpush.bf16.msra.mxu0 0
        %3121 = vmatpush.bf16.msra.mxu0 0
        %3122 = vmatpush.bf16.msra.mxu0 0
        %3123 = vmatpush.bf16.msra.mxu0 0
        %3124 = vmatpush.bf16.msra.mxu0 0
        %3125 = vmatpush.bf16.msra.mxu0 0
        %3126 = vmatpush.bf16.msra.mxu0 %v3119
        %3127 = vmatpush.bf16.msra.mxu0 %v3118
        %3128 = vmatmul.bf16.gmra.mxu0 %v3017
        %v3129 = vpop.f32.mrf.mxu0
        %v3130 = vadd.f32 %v3032, %v3129
        %v3131 = vpop.f32.mrf.mxu0
        %v3132 = vadd.f32 %v3034, %v3131
        %3133 = vmatmul.bf16.gmra.mxu0 %v3020
        %v3134 = vpop.f32.mrf.mxu0
        %v3135 = vadd.f32 %v3037, %v3134
        %v3136 = vpop.f32.mrf.mxu0
        %v3137 = vadd.f32 %v3039, %v3136
        %3138 = vdwg.mxu0
        %v3139 = vmul.f32 %v3130, %v1887
        %v3140 = vmul.f32 %v3132, %v2197
        %v3141 = vmul.f32 %v3135, %v2507
        %v3142 = vmul.f32 %v3137, %v2817
        %v3143 = vpack.c.bf16 %v3115, %v3114
        %v3144 = vpack.c.bf16 %v3117, %v3116
        %3145 = vmatpush.bf16.msra.mxu0 0
        %3146 = vmatpush.bf16.msra.mxu0 0
        %3147 = vmatpush.bf16.msra.mxu0 0
        %3148 = vmatpush.bf16.msra.mxu0 0
        %3149 = vmatpush.bf16.msra.mxu0 0
        %3150 = vmatpush.bf16.msra.mxu0 0
        %3151 = vmatpush.bf16.msra.mxu0 %v3144
        %3152 = vmatpush.bf16.msra.mxu0 %v3143
        %3153 = vmatmul.bf16.gmra.mxu0 %v3017
        %v3154 = vpop.f32.mrf.mxu0
        %v3155 = vadd.f32 %v3051, %v3154
        %v3156 = vpop.f32.mrf.mxu0
        %v3157 = vadd.f32 %v3053, %v3156
        %3158 = vmatmul.bf16.gmra.mxu0 %v3020
        %v3159 = vpop.f32.mrf.mxu0
        %v3160 = vadd.f32 %v3056, %v3159
        %v3161 = vpop.f32.mrf.mxu0
        %v3162 = vadd.f32 %v3058, %v3161
        %3163 = vdwg.mxu0
        %v3164 = vmul.f32 %v3155, %v2042
        %v3165 = vmul.f32 %v3157, %v2352
        %v3166 = vmul.f32 %v3160, %v2662
        %v3167 = vmul.f32 %v3162, %v2972
        %v3168 = vpack.c.bf16 %v3140, %v3139
        %v3169 = vpack.c.bf16 %v3142, %v3141
        %3170 = vmatpush.bf16.msra.mxu0 0
        %3171 = vmatpush.bf16.msra.mxu0 0
        %3172 = vmatpush.bf16.msra.mxu0 0
        %3173 = vmatpush.bf16.msra.mxu0 0
        %3174 = vmatpush.bf16.msra.mxu0 0
        %3175 = vmatpush.bf16.msra.mxu0 0
        %3176 = vmatpush.bf16.msra.mxu0 %v3169
        %3177 = vmatpush.bf16.msra.mxu0 %v3168
        %3178 = vmatmul.bf16.gmra.mxu0 %v3017
        %v3179 = vpop.f32.mrf.mxu0
        %v3180 = vadd.f32 %v3032, %v3179
        %v3181 = vpop.f32.mrf.mxu0
        %v3182 = vadd.f32 %v3034, %v3181
        %3183 = vmatmul.bf16.gmra.mxu0 %v3020
        %v3184 = vpop.f32.mrf.mxu0
        %v3185 = vadd.f32 %v3037, %v3184
        %v3186 = vpop.f32.mrf.mxu0
        %v3187 = vadd.f32 %v3039, %v3186
        %3188 = vdwg.mxu0
        %v3189 = vmul.f32 %v3180, %v1887
        %v3190 = vmul.f32 %v3182, %v2197
        %v3191 = vmul.f32 %v3185, %v2507
        %v3192 = vmul.f32 %v3187, %v2817
        %v3193 = vpack.c.bf16 %v3165, %v3164
        %v3194 = vpack.c.bf16 %v3167, %v3166
        %3195 = vmatpush.bf16.msra.mxu0 0
        %3196 = vmatpush.bf16.msra.mxu0 0
        %3197 = vmatpush.bf16.msra.mxu0 0
        %3198 = vmatpush.bf16.msra.mxu0 0
        %3199 = vmatpush.bf16.msra.mxu0 0
        %3200 = vmatpush.bf16.msra.mxu0 0
        %3201 = vmatpush.bf16.msra.mxu0 %v3194
        %3202 = vmatpush.bf16.msra.mxu0 %v3193
        %3203 = vmatmul.bf16.gmra.mxu0 %v3017
        %v3204 = vpop.f32.mrf.mxu0
        %v3205 = vadd.f32 %v3051, %v3204
        %v3206 = vpop.f32.mrf.mxu0
        %v3207 = vadd.f32 %v3053, %v3206
        %3208 = vmatmul.bf16.gmra.mxu0 %v3020
        %v3209 = vpop.f32.mrf.mxu0
        %v3210 = vadd.f32 %v3056, %v3209
        %v3211 = vpop.f32.mrf.mxu0
        %v3212 = vadd.f32 %v3058, %v3211
        %3213 = vdwg.mxu0
        %v3214 = vmul.f32 %v3205, %v2042
        %v3215 = vmul.f32 %v3207, %v2352
        %v3216 = vmul.f32 %v3210, %v2662
        %v3217 = vmul.f32 %v3212, %v2972
        %v3218 = vpack.c.bf16 %v3190, %v3189
        %v3219 = vpack.c.bf16 %v3192, %v3191
        %3220 = vmatpush.bf16.msra.mxu0 0
        %3221 = vmatpush.bf16.msra.mxu0 0
        %3222 = vmatpush.bf16.msra.mxu0 0
        %3223 = vmatpush.bf16.msra.mxu0 0
        %3224 = vmatpush.bf16.msra.mxu0 0
        %3225 = vmatpush.bf16.msra.mxu0 0
        %3226 = vmatpush.bf16.msra.mxu0 %v3219
        %3227 = vmatpush.bf16.msra.mxu0 %v3218
        %3228 = vmatmul.bf16.gmra.mxu0 %v3017
        %v3229 = vpop.f32.mrf.mxu0
        %v3230 = vadd.f32 %v3032, %v3229
        %v3231 = vpop.f32.mrf.mxu0
        %v3232 = vadd.f32 %v3034, %v3231
        %3233 = vmatmul.bf16.gmra.mxu0 %v3020
        %v3234 = vpop.f32.mrf.mxu0
        %v3235 = vadd.f32 %v3037, %v3234
        %v3236 = vpop.f32.mrf.mxu0
        %v3237 = vadd.f32 %v3039, %v3236
        %3238 = vdwg.mxu0
        %v3239 = vmul.f32 %v3230, %v1887
        %v3240 = vmul.f32 %v3232, %v2197
        %v3241 = vmul.f32 %v3235, %v2507
        %v3242 = vmul.f32 %v3237, %v2817
        %v3243 = vpack.c.bf16 %v3215, %v3214
        %v3244 = vpack.c.bf16 %v3217, %v3216
        %3245 = vmatpush.bf16.msra.mxu0 0
        %3246 = vmatpush.bf16.msra.mxu0 0
        %3247 = vmatpush.bf16.msra.mxu0 0
        %3248 = vmatpush.bf16.msra.mxu0 0
        %3249 = vmatpush.bf16.msra.mxu0 0
        %3250 = vmatpush.bf16.msra.mxu0 0
        %3251 = vmatpush.bf16.msra.mxu0 %v3244
        %3252 = vmatpush.bf16.msra.mxu0 %v3243
        %3253 = vmatmul.bf16.gmra.mxu0 %v3017
        %v3254 = vpop.f32.mrf.mxu0
        %v3255 = vadd.f32 %v3051, %v3254
        %v3256 = vpop.f32.mrf.mxu0
        %v3257 = vadd.f32 %v3053, %v3256
        %3258 = vmatmul.bf16.gmra.mxu0 %v3020
        %v3259 = vpop.f32.mrf.mxu0
        %v3260 = vadd.f32 %v3056, %v3259
        %v3261 = vpop.f32.mrf.mxu0
        %v3262 = vadd.f32 %v3058, %v3261
        %3263 = vdwg.mxu0
        %v3264 = vmul.f32 %v3255, %v2042
        %v3265 = vmul.f32 %v3257, %v2352
        %v3266 = vmul.f32 %v3260, %v2662
        %v3267 = vmul.f32 %v3262, %v2972
        %v3268 = vpack.c.bf16 %v3240, %v3239
        %v3269 = vpack.c.bf16 %v3242, %v3241
        %3270 = vmatpush.bf16.msra.mxu0 0
        %3271 = vmatpush.bf16.msra.mxu0 0
        %3272 = vmatpush.bf16.msra.mxu0 0
        %3273 = vmatpush.bf16.msra.mxu0 0
        %3274 = vmatpush.bf16.msra.mxu0 0
        %3275 = vmatpush.bf16.msra.mxu0 0
        %3276 = vmatpush.bf16.msra.mxu0 %v3269
        %3277 = vmatpush.bf16.msra.mxu0 %v3268
        %3278 = vmatmul.bf16.gmra.mxu0 %v3017
        %v3279 = vpop.f32.mrf.mxu0
        %v3280 = vadd.f32 %v3032, %v3279
        %v3281 = vpop.f32.mrf.mxu0
        %v3282 = vadd.f32 %v3034, %v3281
        %3283 = vmatmul.bf16.gmra.mxu0 %v3020
        %v3284 = vpop.f32.mrf.mxu0
        %v3285 = vadd.f32 %v3037, %v3284
        %v3286 = vpop.f32.mrf.mxu0
        %v3287 = vadd.f32 %v3039, %v3286
        %3288 = vdwg.mxu0
        %v3289 = vmul.f32 %v3280, %v1887
        %v3290 = vmul.f32 %v3282, %v2197
        %v3291 = vmul.f32 %v3285, %v2507
        %v3292 = vmul.f32 %v3287, %v2817
        %v3293 = vpack.c.bf16 %v3265, %v3264
        %v3294 = vpack.c.bf16 %v3267, %v3266
        %3295 = vmatpush.bf16.msra.mxu0 0
        %3296 = vmatpush.bf16.msra.mxu0 0
        %3297 = vmatpush.bf16.msra.mxu0 0
        %3298 = vmatpush.bf16.msra.mxu0 0
        %3299 = vmatpush.bf16.msra.mxu0 0
        %3300 = vmatpush.bf16.msra.mxu0 0
        %3301 = vmatpush.bf16.msra.mxu0 %v3294
        %3302 = vmatpush.bf16.msra.mxu0 %v3293
        %3303 = vmatmul.bf16.gmra.mxu0 %v3017
        %v3304 = vpop.f32.mrf.mxu0
        %v3305 = vadd.f32 %v3051, %v3304
        %v3306 = vpop.f32.mrf.mxu0
        %v3307 = vadd.f32 %v3053, %v3306
        %3308 = vmatmul.bf16.gmra.mxu0 %v3020
        %v3309 = vpop.f32.mrf.mxu0
        %v3310 = vadd.f32 %v3056, %v3309
        %v3311 = vpop.f32.mrf.mxu0
        %v3312 = vadd.f32 %v3058, %v3311
        %3313 = vdwg.mxu0
        %v3314 = vmul.f32 %v3305, %v2042
        %v3315 = vmul.f32 %v3307, %v2352
        %v3316 = vmul.f32 %v3310, %v2662
        %v3317 = vmul.f32 %v3312, %v2972
        %v3318 = vpack.c.bf16 %v3290, %v3289
        %v3319 = vpack.c.bf16 %v3292, %v3291
        %3320 = vmatpush.bf16.msra.mxu0 0
        %3321 = vmatpush.bf16.msra.mxu0 0
        %3322 = vmatpush.bf16.msra.mxu0 0
        %3323 = vmatpush.bf16.msra.mxu0 0
        %3324 = vmatpush.bf16.msra.mxu0 0
        %3325 = vmatpush.bf16.msra.mxu0 0
        %3326 = vmatpush.bf16.msra.mxu0 %v3319
        %3327 = vmatpush.bf16.msra.mxu0 %v3318
        %3328 = vmatmul.bf16.gmra.mxu0 %v3017
        %v3329 = vpop.f32.mrf.mxu0
        %v3330 = vadd.f32 %v3032, %v3329
        %v3331 = vpop.f32.mrf.mxu0
        %v3332 = vadd.f32 %v3034, %v3331
        %3333 = vmatmul.bf16.gmra.mxu0 %v3020
        %v3334 = vpop.f32.mrf.mxu0
        %v3335 = vadd.f32 %v3037, %v3334
        %v3336 = vpop.f32.mrf.mxu0
        %v3337 = vadd.f32 %v3039, %v3336
        %3338 = vdwg.mxu0
        %v3339 = vmul.f32 %v3330, %v1887
        %v3340 = vmul.f32 %v3332, %v2197
        %v3341 = vmul.f32 %v3335, %v2507
        %v3342 = vmul.f32 %v3337, %v2817
        %v3343 = vpack.c.bf16 %v3315, %v3314
        %v3344 = vpack.c.bf16 %v3317, %v3316
        %3345 = vmatpush.bf16.msra.mxu0 0
        %3346 = vmatpush.bf16.msra.mxu0 0
        %3347 = vmatpush.bf16.msra.mxu0 0
        %3348 = vmatpush.bf16.msra.mxu0 0
        %3349 = vmatpush.bf16.msra.mxu0 0
        %3350 = vmatpush.bf16.msra.mxu0 0
        %3351 = vmatpush.bf16.msra.mxu0 %v3344
        %3352 = vmatpush.bf16.msra.mxu0 %v3343
        %3353 = vmatmul.bf16.gmra.mxu0 %v3017
        %v3354 = vpop.f32.mrf.mxu0
        %v3355 = vadd.f32 %v3051, %v3354
        %v3356 = vpop.f32.mrf.mxu0
        %v3357 = vadd.f32 %v3053, %v3356
        %3358 = vmatmul.bf16.gmra.mxu0 %v3020
        %v3359 = vpop.f32.mrf.mxu0
        %v3360 = vadd.f32 %v3056, %v3359
        %v3361 = vpop.f32.mrf.mxu0
        %v3362 = vadd.f32 %v3058, %v3361
        %3363 = vdwg.mxu0
        %v3364 = vmul.f32 %v3355, %v2042
        %v3365 = vmul.f32 %v3357, %v2352
        %v3366 = vmul.f32 %v3360, %v2662
        %v3367 = vmul.f32 %v3362, %v2972
        %v3368 = vpack.c.bf16 %v3340, %v3339
        %v3369 = vpack.c.bf16 %v3342, %v3341
        %3370 = vmatpush.bf16.msra.mxu0 0
        %3371 = vmatpush.bf16.msra.mxu0 0
        %3372 = vmatpush.bf16.msra.mxu0 0
        %3373 = vmatpush.bf16.msra.mxu0 0
        %3374 = vmatpush.bf16.msra.mxu0 0
        %3375 = vmatpush.bf16.msra.mxu0 0
        %3376 = vmatpush.bf16.msra.mxu0 %v3369
        %3377 = vmatpush.bf16.msra.mxu0 %v3368
        %3378 = vmatmul.bf16.gmra.mxu0 %v3017
        %v3379 = vpop.f32.mrf.mxu0
        %v3380 = vadd.f32 %v3032, %v3379
        %v3381 = vpop.f32.mrf.mxu0
        %v3382 = vadd.f32 %v3034, %v3381
        %3383 = vmatmul.bf16.gmra.mxu0 %v3020
        %v3384 = vpop.f32.mrf.mxu0
        %v3385 = vadd.f32 %v3037, %v3384
        %v3386 = vpop.f32.mrf.mxu0
        %v3387 = vadd.f32 %v3039, %v3386
        %3388 = vdwg.mxu0
        %v3389 = vmul.f32 %v3380, %v1887
        %v3390 = vmul.f32 %v3382, %v2197
        %v3391 = vmul.f32 %v3385, %v2507
        %v3392 = vmul.f32 %v3387, %v2817
        %v3393 = vpack.c.bf16 %v3365, %v3364
        %v3394 = vpack.c.bf16 %v3367, %v3366
        %3395 = vmatpush.bf16.msra.mxu0 0
        %3396 = vmatpush.bf16.msra.mxu0 0
        %3397 = vmatpush.bf16.msra.mxu0 0
        %3398 = vmatpush.bf16.msra.mxu0 0
        %3399 = vmatpush.bf16.msra.mxu0 0
        %3400 = vmatpush.bf16.msra.mxu0 0
        %3401 = vmatpush.bf16.msra.mxu0 %v3394
        %3402 = vmatpush.bf16.msra.mxu0 %v3393
        %3403 = vmatmul.bf16.gmra.mxu0 %v3017
        %v3404 = vpop.f32.mrf.mxu0
        %v3405 = vadd.f32 %v3051, %v3404
        %v3406 = vpop.f32.mrf.mxu0
        %v3407 = vadd.f32 %v3053, %v3406
        %3408 = vmatmul.bf16.gmra.mxu0 %v3020
        %v3409 = vpop.f32.mrf.mxu0
        %v3410 = vadd.f32 %v3056, %v3409
        %v3411 = vpop.f32.mrf.mxu0
        %v3412 = vadd.f32 %v3058, %v3411
        %3413 = vdwg.mxu0
        %v3414 = vmul.f32 %v3405, %v2042
        %v3415 = vmul.f32 %v3407, %v2352
        %v3416 = vmul.f32 %v3410, %v2662
        %v3417 = vmul.f32 %v3412, %v2972
        %v3418 = vpack.c.bf16 %v3390, %v3389
        %v3419 = vpack.c.bf16 %v3392, %v3391
        %3420 = vmatpush.bf16.msra.mxu0 0
        %3421 = vmatpush.bf16.msra.mxu0 0
        %3422 = vmatpush.bf16.msra.mxu0 0
        %3423 = vmatpush.bf16.msra.mxu0 0
        %3424 = vmatpush.bf16.msra.mxu0 0
        %3425 = vmatpush.bf16.msra.mxu0 0
        %3426 = vmatpush.bf16.msra.mxu0 %v3419
        %3427 = vmatpush.bf16.msra.mxu0 %v3418
        %3428 = vmatmul.bf16.gmra.mxu0 %v3017
        %v3429 = vpop.f32.mrf.mxu0
        %v3430 = vadd.f32 %v3032, %v3429
        %v3431 = vpop.f32.mrf.mxu0
        %v3432 = vadd.f32 %v3034, %v3431
        %3433 = vmatmul.bf16.gmra.mxu0 %v3020
        %v3434 = vpop.f32.mrf.mxu0
        %v3435 = vadd.f32 %v3037, %v3434
        %v3436 = vpop.f32.mrf.mxu0
        %v3437 = vadd.f32 %v3039, %v3436
        %3438 = vdwg.mxu0
        %v3439 = vmul.f32 %v3430, %v1887
        %v3440 = vmul.f32 %v3432, %v2197
        %v3441 = vmul.f32 %v3435, %v2507
        %v3442 = vmul.f32 %v3437, %v2817
        %v3443 = vpack.c.bf16 %v3415, %v3414
        %v3444 = vpack.c.bf16 %v3417, %v3416
        %3445 = vmatpush.bf16.msra.mxu0 0
        %3446 = vmatpush.bf16.msra.mxu0 0
        %3447 = vmatpush.bf16.msra.mxu0 0
        %3448 = vmatpush.bf16.msra.mxu0 0
        %3449 = vmatpush.bf16.msra.mxu0 0
        %3450 = vmatpush.bf16.msra.mxu0 0
        %3451 = vmatpush.bf16.msra.mxu0 %v3444
        %3452 = vmatpush.bf16.msra.mxu0 %v3443
        %3453 = vmatmul.bf16.gmra.mxu0 %v3017
        %v3454 = vpop.f32.mrf.mxu0
        %v3455 = vadd.f32 %v3051, %v3454
        %v3456 = vpop.f32.mrf.mxu0
        %v3457 = vadd.f32 %v3053, %v3456
        %3458 = vmatmul.bf16.gmra.mxu0 %v3020
        %v3459 = vpop.f32.mrf.mxu0
        %v3460 = vadd.f32 %v3056, %v3459
        %v3461 = vpop.f32.mrf.mxu0
        %v3462 = vadd.f32 %v3058, %v3461
        %3463 = vdwg.mxu0
        %v3464 = vmul.f32 %v3455, %v2042
        %v3465 = vmul.f32 %v3457, %v2352
        %v3466 = vmul.f32 %v3460, %v2662
        %v3467 = vmul.f32 %v3462, %v2972
        %v3468 = vpack.c.bf16 %v3440, %v3439
        %v3469 = vpack.c.bf16 %v3442, %v3441
        %3470 = vmatpush.bf16.msra.mxu0 0
        %3471 = vmatpush.bf16.msra.mxu0 0
        %3472 = vmatpush.bf16.msra.mxu0 0
        %3473 = vmatpush.bf16.msra.mxu0 0
        %3474 = vmatpush.bf16.msra.mxu0 0
        %3475 = vmatpush.bf16.msra.mxu0 0
        %3476 = vmatpush.bf16.msra.mxu0 %v3469
        %3477 = vmatpush.bf16.msra.mxu0 %v3468
        %3478 = vmatmul.bf16.gmra.mxu0 %v3017
        %v3479 = vpop.f32.mrf.mxu0
        %v3480 = vadd.f32 %v3032, %v3479
        %v3481 = vpop.f32.mrf.mxu0
        %v3482 = vadd.f32 %v3034, %v3481
        %3483 = vmatmul.bf16.gmra.mxu0 %v3020
        %v3484 = vpop.f32.mrf.mxu0
        %v3485 = vadd.f32 %v3037, %v3484
        %v3486 = vpop.f32.mrf.mxu0
        %v3487 = vadd.f32 %v3039, %v3486
        %3488 = vdwg.mxu0
        %v3489 = vmul.f32 %v3480, %v1887
        %v3490 = vmul.f32 %v3482, %v2197
        %v3491 = vmul.f32 %v3485, %v2507
        %v3492 = vmul.f32 %v3487, %v2817
        %v3493 = vpack.c.bf16 %v3465, %v3464
        %v3494 = vpack.c.bf16 %v3467, %v3466
        %3495 = vmatpush.bf16.msra.mxu0 0
        %3496 = vmatpush.bf16.msra.mxu0 0
        %3497 = vmatpush.bf16.msra.mxu0 0
        %3498 = vmatpush.bf16.msra.mxu0 0
        %3499 = vmatpush.bf16.msra.mxu0 0
        %3500 = vmatpush.bf16.msra.mxu0 0
        %3501 = vmatpush.bf16.msra.mxu0 %v3494
        %3502 = vmatpush.bf16.msra.mxu0 %v3493
        %3503 = vmatmul.bf16.gmra.mxu0 %v3017
        %v3504 = vpop.f32.mrf.mxu0
        %v3505 = vadd.f32 %v3051, %v3504
        %v3506 = vpop.f32.mrf.mxu0
        %v3507 = vadd.f32 %v3053, %v3506
        %3508 = vmatmul.bf16.gmra.mxu0 %v3020
        %v3509 = vpop.f32.mrf.mxu0
        %v3510 = vadd.f32 %v3056, %v3509
        %v3511 = vpop.f32.mrf.mxu0
        %v3512 = vadd.f32 %v3058, %v3511
        %3513 = vdwg.mxu0
        %v3514 = vmul.f32 %v3505, %v2042
        %v3515 = vmul.f32 %v3507, %v2352
        %v3516 = vmul.f32 %v3510, %v2662
        %v3517 = vmul.f32 %v3512, %v2972
        %v3518 = vpack.c.bf16 %v3490, %v3489
        %v3519 = vpack.c.bf16 %v3492, %v3491
        %3520 = vmatpush.bf16.msra.mxu0 0
        %3521 = vmatpush.bf16.msra.mxu0 0
        %3522 = vmatpush.bf16.msra.mxu0 0
        %3523 = vmatpush.bf16.msra.mxu0 0
        %3524 = vmatpush.bf16.msra.mxu0 0
        %3525 = vmatpush.bf16.msra.mxu0 0
        %3526 = vmatpush.bf16.msra.mxu0 %v3519
        %3527 = vmatpush.bf16.msra.mxu0 %v3518
        %3528 = vmatmul.bf16.gmra.mxu0 %v3017
        %v3529 = vpop.f32.mrf.mxu0
        %v3530 = vadd.f32 %v3032, %v3529
        %v3531 = vpop.f32.mrf.mxu0
        %v3532 = vadd.f32 %v3034, %v3531
        %3533 = vmatmul.bf16.gmra.mxu0 %v3020
        %v3534 = vpop.f32.mrf.mxu0
        %v3535 = vadd.f32 %v3037, %v3534
        %v3536 = vpop.f32.mrf.mxu0
        %v3537 = vadd.f32 %v3039, %v3536
        %3538 = vdwg.mxu0
        %v3539 = vmul.f32 %v3530, %v1887
        %v3540 = vmul.f32 %v3532, %v2197
        %v3541 = vmul.f32 %v3535, %v2507
        %v3542 = vmul.f32 %v3537, %v2817
        %v3543 = vpack.c.bf16 %v3515, %v3514
        %v3544 = vpack.c.bf16 %v3517, %v3516
        %3545 = vmatpush.bf16.msra.mxu0 0
        %3546 = vmatpush.bf16.msra.mxu0 0
        %3547 = vmatpush.bf16.msra.mxu0 0
        %3548 = vmatpush.bf16.msra.mxu0 0
        %3549 = vmatpush.bf16.msra.mxu0 0
        %3550 = vmatpush.bf16.msra.mxu0 0
        %3551 = vmatpush.bf16.msra.mxu0 %v3544
        %3552 = vmatpush.bf16.msra.mxu0 %v3543
        %3553 = vmatmul.bf16.gmra.mxu0 %v3017
        %v3554 = vpop.f32.mrf.mxu0
        %v3555 = vadd.f32 %v3051, %v3554
        %v3556 = vpop.f32.mrf.mxu0
        %v3557 = vadd.f32 %v3053, %v3556
        %3558 = vmatmul.bf16.gmra.mxu0 %v3020
        %v3559 = vpop.f32.mrf.mxu0
        %v3560 = vadd.f32 %v3056, %v3559
        %v3561 = vpop.f32.mrf.mxu0
        %v3562 = vadd.f32 %v3058, %v3561
        %3563 = vdwg.mxu0
        %v3564 = vmul.f32 %v3555, %v2042
        %v3565 = vmul.f32 %v3557, %v2352
        %v3566 = vmul.f32 %v3560, %v2662
        %v3567 = vmul.f32 %v3562, %v2972
        %v3568 = vpack.c.bf16 %v3540, %v3539
        %v3569 = vpack.c.bf16 %v3542, %v3541
        %3570 = vmatpush.bf16.msra.mxu0 0
        %3571 = vmatpush.bf16.msra.mxu0 0
        %3572 = vmatpush.bf16.msra.mxu0 0
        %3573 = vmatpush.bf16.msra.mxu0 0
        %3574 = vmatpush.bf16.msra.mxu0 0
        %3575 = vmatpush.bf16.msra.mxu0 0
        %3576 = vmatpush.bf16.msra.mxu0 %v3569
        %3577 = vmatpush.bf16.msra.mxu0 %v3568
        %3578 = vmatmul.bf16.gmra.mxu0 %v3017
        %v3579 = vpop.f32.mrf.mxu0
        %v3580 = vadd.f32 %v3032, %v3579
        %v3581 = vpop.f32.mrf.mxu0
        %v3582 = vadd.f32 %v3034, %v3581
        %3583 = vmatmul.bf16.gmra.mxu0 %v3020
        %v3584 = vpop.f32.mrf.mxu0
        %v3585 = vadd.f32 %v3037, %v3584
        %v3586 = vpop.f32.mrf.mxu0
        %v3587 = vadd.f32 %v3039, %v3586
        %3588 = vdwg.mxu0
        %v3589 = vmul.f32 %v3580, %v1887
        %v3590 = vmul.f32 %v3582, %v2197
        %v3591 = vmul.f32 %v3585, %v2507
        %v3592 = vmul.f32 %v3587, %v2817
        %v3593 = vpack.c.bf16 %v3565, %v3564
        %v3594 = vpack.c.bf16 %v3567, %v3566
        %3595 = vmatpush.bf16.msra.mxu0 0
        %3596 = vmatpush.bf16.msra.mxu0 0
        %3597 = vmatpush.bf16.msra.mxu0 0
        %3598 = vmatpush.bf16.msra.mxu0 0
        %3599 = vmatpush.bf16.msra.mxu0 0
        %3600 = vmatpush.bf16.msra.mxu0 0
        %3601 = vmatpush.bf16.msra.mxu0 %v3594
        %3602 = vmatpush.bf16.msra.mxu0 %v3593
        %3603 = vmatmul.bf16.gmra.mxu0 %v3017
        %v3604 = vpop.f32.mrf.mxu0
        %v3605 = vadd.f32 %v3051, %v3604
        %v3606 = vpop.f32.mrf.mxu0
        %v3607 = vadd.f32 %v3053, %v3606
        %3608 = vmatmul.bf16.gmra.mxu0 %v3020
        %v3609 = vpop.f32.mrf.mxu0
        %v3610 = vadd.f32 %v3056, %v3609
        %v3611 = vpop.f32.mrf.mxu0
        %v3612 = vadd.f32 %v3058, %v3611
        %3613 = vdwg.mxu0
        %v3614 = vmul.f32 %v3605, %v2042
        %v3615 = vmul.f32 %v3607, %v2352
        %v3616 = vmul.f32 %v3610, %v2662
        %v3617 = vmul.f32 %v3612, %v2972
        %v3618 = vld [vmem:[%s5] sm:$0x7]
        %v3619 = vld [vmem:[%s6] sm:$0x7]
        %3620 = vst [vmem:[%s310] sm:$0xff] %v3589
        %3621 = vst [vmem:[%s310 + $0x10] sm:$0xff] %v3590
        %3622 = vst [vmem:[%s310 + $0x20] sm:$0xff] %v3591
        %3623 = vst [vmem:[%s310 + $0x30] sm:$0xff] %v3592
        %3625 = vset.pattern.permute.xlu0 0
        %3626 = vperm.xlu0 %3625, %v3619
        %v3627 = vpop.permute.xlu0 %3626
        %v3630 = vsel %vm3015, %v3618, 0
        %3632 = vmatpush.msra.mxu0 0.0
        %3633 = vmatpush.msra.mxu0 0.0
        %3634 = vmatpush.msra.mxu0 0.0
        %3635 = vmatpush.msra.mxu0 0.0
        %3636 = vmatpush.msra.mxu0 0.0
        %3637 = vmatpush.msra.mxu0 0.0
        %3638 = vmatpush.msra.mxu0 0.0
        %3639 = vmatpush.msra.mxu0 0.0
        %3640 = vmatpush.msra.mxu0 0.0
        %3641 = vmatpush.msra.mxu0 0.0
        %3642 = vmatpush.msra.mxu0 0.0
        %3643 = vmatpush.msra.mxu0 0.0
        %3644 = vmatpush.msra.mxu0 %v3592
        %3645 = vmatpush.msra.mxu0 %v3591
        %3646 = vmatpush.msra.mxu0 %v3590
        %3647 = vmatpush.msra.mxu0 %v3589
        %3648 = vmatmul.f32.gmra.mxu0 %v3630
        %v3649 = vpop.f32.mrf.mxu0
        %v3650 = vadd.f32 %v3627, %v3649
        %3651 = vdwg.mxu0
        %3652 = vst [vmem:[%s303] sm:$0x7] %v3650
        %3653 = vst [vmem:[%s310 + $0x8] sm:$0xff] %v3614
        %3654 = vst [vmem:[%s310 + $0x18] sm:$0xff] %v3615
        %3655 = vst [vmem:[%s310 + $0x28] sm:$0xff] %v3616
        %3656 = vst [vmem:[%s310 + $0x38] sm:$0xff] %v3617
        %3657 = vmatpush.msra.mxu0 0.0
        %3658 = vmatpush.msra.mxu0 0.0
        %3659 = vmatpush.msra.mxu0 0.0
        %3660 = vmatpush.msra.mxu0 0.0
        %3661 = vmatpush.msra.mxu0 0.0
        %3662 = vmatpush.msra.mxu0 0.0
        %3663 = vmatpush.msra.mxu0 0.0
        %3664 = vmatpush.msra.mxu0 0.0
        %3665 = vmatpush.msra.mxu0 0.0
        %3666 = vmatpush.msra.mxu0 0.0
        %3667 = vmatpush.msra.mxu0 0.0
        %3668 = vmatpush.msra.mxu0 0.0
        %3669 = vmatpush.msra.mxu0 %v3617
        %3670 = vmatpush.msra.mxu0 %v3616
        %3671 = vmatpush.msra.mxu0 %v3615
        %3672 = vmatpush.msra.mxu0 %v3614
        %3673 = vmatmul.f32.gmra.mxu0 %v3630
        %v3674 = vpop.f32.mrf.mxu0
        %v3675 = vadd.f32 %v3627, %v3674
        %3676 = vdwg.mxu0
        %3677 = vst [vmem:[%s303 + $0x4] sm:$0x7] %v3675
        %s3678 = sand.u32 %s186, 1
        %s3679 = scalar_lea.sflag [#allocation3], %s3678
        %s3680 = sand.u32 %s186, 1
        %s3681 = smul.addr %s3680, 8
        %s3682 = scalar_lea.vmem [#allocation2], %s3681
        %s3683 = sand.u32 %s212, 1
        %s3684 = scalar_lea.sflag [#allocation5], %s3683
        %s3685 = sand.u32 %s212, 1
        %s3686 = smul.addr %s3685, 64
        %s3687 = scalar_lea.vmem [#allocation4], %s3686
        // Predicated region
        $region49: #{tpu_custom_call.1} parent=47 // pred_check
          %p3688 = pneg %p196
        $region50: #{tpu_custom_call.1} parent=47 // pred_check_branch
          %3690 = sbr.rel (%p3688) target = $region52
        $region51: #{tpu_custom_call.1} parent=47 // pred_region
          %s3691 = smul.u32 2, %s26
          %3693 = vsyncadd %s3679, 0
          %s3694 = smul.addr %s3691, 4
          %s3695 = scalar_lea.hbm %s7, %s3694
          %s3697 = sshll.u32 %s3682, 4
          %s3698 = int_to_ptr.vmem [resolvable:$true] %s3697
          %s3699 = sshll.u32 %s3695, 4
          %s3700 = int_to_ptr.hbm [resolvable:$true] %s3699
          %3702 = dma.vmem_to_hbm [thread:$0]  %s3698, 128, %s3700, %s3679
        $region52: #{tpu_custom_call.1} parent=47 // pred_fallthru
          _
        // Predicated region
        $region53: #{tpu_custom_call.1} parent=47 // pred_check
          %p3703 = pneg %p222
        $region54: #{tpu_custom_call.1} parent=47 // pred_check_branch
          %3705 = sbr.rel (%p3703) target = $region56
        $region55: #{tpu_custom_call.1} parent=47 // pred_region
          %s3706 = smul.u32 2, %s26
          %3708 = vsyncadd %s3684, 0
          %s3709 = smul.addr %s3706, 8
          %s3710 = scalar_lea.hbm %s8, %s3709
          %s3711 = sshll.u32 %s3687, 4
          %s3712 = int_to_ptr.vmem [resolvable:$true] %s3711
          %s3713 = sshll.u32 %s3710, 4
          %s3714 = int_to_ptr.hbm [resolvable:$true] %s3713
          %3719 = dma.vmem_to_hbm [thread:$0]  %s3712, 1024, %s3714, %s3684, 256, 512, 16
        $region56: #{tpu_custom_call.1} parent=47 // pred_fallthru
          _
      $region48: #{tpu_custom_call.1} parent=5 // pred_fallthru
        _
      %p3720 = scmp.le.s32.totalorder 2, %s21
      // Predicated region
      $region57: #{tpu_custom_call.1} parent=5 // pred_check
        %p3721 = pneg %p3720
      $region58: #{tpu_custom_call.1} parent=5 // pred_check_branch
        %3723 = sbr.rel (%p3721) target = $region60
      $region59: #{tpu_custom_call.1} parent=5 // pred_region
        %s3724 = ssub.s32 %s21, 2
        // Predicated region
        $region61: #{tpu_custom_call.1} parent=59 // pred_check
          %p3725 = pneg %p202
        $region62: #{tpu_custom_call.1} parent=59 // pred_check_branch
          %3727 = sbr.rel (%p3725) target = $region64
        $region63: #{tpu_custom_call.1} parent=59 // pred_region
          %s3728 = sand.u32 %s187, 1
          %s3729 = scalar_lea.sflag [#allocation3], %s3728
          %s3730 = sand.u32 %s187, 1
          %s3731 = smul.addr %s3730, 8
          %s3732 = scalar_lea.vmem [#allocation2], %s3731
          %3734 = dma.done %s3729, 128
        $region64: #{tpu_custom_call.1} parent=59 // pred_fallthru
          _
        // Predicated region
        $region65: #{tpu_custom_call.1} parent=59 // pred_check
          %p3735 = pneg %p228
        $region66: #{tpu_custom_call.1} parent=59 // pred_check_branch
          %3737 = sbr.rel (%p3735) target = $region68
        $region67: #{tpu_custom_call.1} parent=59 // pred_region
          %s3738 = sand.u32 %s213, 1
          %s3739 = scalar_lea.sflag [#allocation5], %s3738
          %s3740 = sand.u32 %s213, 1
          %s3741 = smul.addr %s3740, 64
          %s3742 = scalar_lea.vmem [#allocation4], %s3741
          %3744 = dma.done %s3739, 1024
        $region68: #{tpu_custom_call.1} parent=59 // pred_fallthru
          _
      $region60: #{tpu_custom_call.1} parent=5 // pred_fallthru
        _
    $region6: #{tpu_custom_call.1} parent=1 // loop_footer
      %s25 = sadd.s32 1, %s21
    $region7: #{tpu_custom_call.1} parent=1 // loop_footer_branch
      %20 = sbr.rel target = $region3
    $region8: #{tpu_custom_call.1} parent=1 // loop_exit
      _
    %3745 = vsyncpa [#allocation3], 1
    %s3746 = scalar_lea.sflag [#allocation3], 1
    %3747 = vsyncpa %s3746, 1
    %3748 = vsyncpa [#allocation5], 1
    %s3749 = scalar_lea.sflag [#allocation5], 1
    %3750 = vsyncpa %s3749, 1

</llo_original>
